<compile_context>
chip_gen: v6e
topology: v6e:2x2x1
jax: 0.10.0
libtpu: 0.0.40
codegen_flags: <defaults>
</compile_context>

<pallas_src>
import jax
import jax.numpy as jnp
from jax.experimental import pallas as pl
from jax.experimental.pallas import tpu as pltpu

D_MODEL = 32
N_HEADS = 4
D_K = D_MODEL // N_HEADS
D_FF = 4 * D_MODEL            # spec default: d_ff or 4 * d_model
EPS_LN = 1e-5
EPS_BN = 1e-5
LANES = 128


# ----------------------------------------------------------------------------
# packed-parameter slab layout (rows within a 128-lane-padded slab)
# ----------------------------------------------------------------------------
def _build_w_slots():
    slots, off = {}, 0
    for name, (r, c) in [
        ('wqkv0', (D_MODEL, 3 * D_MODEL)), ('wo0', (D_MODEL, D_MODEL)),
        ('w10', (D_MODEL, D_FF)), ('w20', (D_FF, D_MODEL)),
        ('wc', (3 * D_MODEL, D_MODEL)),
        ('wqkv1', (D_MODEL, 3 * D_MODEL)), ('wo1', (D_MODEL, D_MODEL)),
        ('w11', (D_MODEL, D_FF)), ('w21', (D_FF, D_MODEL)),
    ]:
        slots[name] = (off, r, c)
        off += r
    return slots, off


def _build_v_slots():
    names_widths = [
        ('bqkv0', 3 * D_MODEL), ('bo0', D_MODEL), ('b10', D_FF), ('b20', D_MODEL),
        ('g10', D_MODEL), ('be10', D_MODEL), ('g20', D_MODEL), ('be20', D_MODEL),
        ('bc', D_MODEL), ('bns', D_MODEL), ('bnt', D_MODEL),
        ('bqkv1', 3 * D_MODEL), ('bo1', D_MODEL), ('b11', D_FF), ('b21', D_MODEL),
        ('g11', D_MODEL), ('be11', D_MODEL), ('g21', D_MODEL), ('be21', D_MODEL),
        ('gf', D_MODEL), ('bf', D_MODEL),
    ]
    slots = {n: (i, w) for i, (n, w) in enumerate(names_widths)}
    rows = -(-len(names_widths) // 8) * 8          # pad row count to a sublane multiple
    return slots, rows


W_SLOTS, W_ROWS = _build_w_slots()                 # 544 rows (all offsets % 8 == 0)
V_SLOTS, V_ROWS = _build_v_slots()                 # 24 rows


# ----------------------------------------------------------------------------
# helpers traced inside the kernel (operate on (L, D) values in VMEM/vregs)
# ----------------------------------------------------------------------------
def _layer_norm(x, gamma, beta):
    mu = jnp.mean(x, axis=-1, keepdims=True)
    var = jnp.mean((x - mu) ** 2, axis=-1, keepdims=True)
    return (x - mu) * jax.lax.rsqrt(var + EPS_LN) * gamma + beta


def _encoder_layer_block(x, wqkv, bqkv, wo, bo, w1, b1, w2, b2,
                         g1, be1, g2, be2, return_attn):
    """FullAttention + residual + LN + conv1x1 FFN (ReLU) + residual + LN.

    The 1/sqrt(d_k) scale is pre-folded into the Q columns of wqkv/bqkv.
    Returns (out, attn) where attn is lane-concatenated over heads: (L, H*L) or None.
    """
    # Fused QKV projection: one (L,32)@(32,96) matmul.
    qkv = jnp.dot(x, wqkv, preferred_element_type=jnp.float32) + bqkv       # (L, 3D)
    q = qkv[:, 0:D_MODEL]
    k = qkv[:, D_MODEL:2 * D_MODEL]
    v = qkv[:, 2 * D_MODEL:3 * D_MODEL]

    head_outs, head_attn = [], []
    # Static 4-way unroll over heads (tiny shapes; compiler schedules them back-to-back).
    for h in range(N_HEADS):
        sl = slice(h * D_K, (h + 1) * D_K)
        qh, kh, vh = q[:, sl], k[:, sl], v[:, sl]                           # (L, dk)
        # contract on d_k -> K-transpose folded into the matmul lowering (no relayout)
        s = jax.lax.dot_general(qh, kh,
                                dimension_numbers=(((1,), (1,)), ((), ())),
                                preferred_element_type=jnp.float32)         # (L, L)
        s = s - jnp.max(s, axis=-1, keepdims=True)
        e = jnp.exp(s)
        a = e / jnp.sum(e, axis=-1, keepdims=True)      # exact divide (parity w/ torch)
        if return_attn:
            head_attn.append(a)
        head_outs.append(jnp.dot(a, vh, preferred_element_type=jnp.float32))

    # lane-dense attention maps: (L, H*L); reshaped to (B,H,L,L) in the wrapper
    attn = jnp.concatenate(head_attn, axis=-1) if return_attn else None
    attn_out = jnp.concatenate(head_outs, axis=-1)      # (L, D), head-major features
    new_x = jnp.dot(attn_out, wo, preferred_element_type=jnp.float32) + bo

    y = _layer_norm(x + new_x, g1, be1)                 # residual + norm1
    ff = jnp.maximum(jnp.dot(y, w1, preferred_element_type=jnp.float32) + b1, 0.0)
    ff = jnp.dot(ff, w2, preferred_element_type=jnp.float32) + b2
    return _layer_norm(y + ff, g2, be2), attn           # residual + norm2


def _conv_pool_block(x, wc, bc, bn_s, bn_t):
    """Conv1d(k=3, circular pad=1) + BatchNorm1d(eval) + ELU + MaxPool1d(k=3, s=2, p=1)."""
    L, D = x.shape
    L2 = L // 2
    x_m1 = jnp.roll(x, 1, axis=0)      # x[l-1] (circular)
    x_p1 = jnp.roll(x, -1, axis=0)     # x[l+1] (circular)
    xin = jnp.concatenate([x_m1, x, x_p1], axis=-1)     # (L, 3D)
    # Single K=96 matmul covering all three conv taps.
    c = jnp.dot(xin, wc, preferred_element_type=jnp.float32) + bc
    # BatchNorm1d eval mode, pre-folded to scale/shift at pack time.
    # TODO(synk): training-mode batch statistics not implemented (eval semantics only).
    c = c * bn_s + bn_t
    # ELU (alpha=1).
    # TODO(synk): torch ELU uses expm1; exp(x)-1 kept (no guaranteed Mosaic expm1 lowering).
    c = jnp.where(c > 0, c, jnp.exp(c) - 1.0)
    # MaxPool1d(kernel=3, stride=2, padding=1). ELU output > -1, so the -1e30 pad is
    # never selected over real data.
    pad = jnp.full((1, D), -1e30, dtype=c.dtype)
    cp = jnp.concatenate([pad, c, pad], axis=0)         # (L+2, D)
    m = jnp.maximum(jnp.maximum(cp[:L, :], cp[1:L + 1, :]), cp[2:L + 2, :])
    # Stride-2 row selection as one constant 0/1 matmul (MXU, exact): out[i] = m[2*i].
    cols = jax.lax.broadcasted_iota(jnp.int32, (L2, L), 1)
    rows = jax.lax.broadcasted_iota(jnp.int32, (L2, L), 0)
    sel = (cols == 2 * rows).astype(m.dtype)
    return jnp.dot(sel, m, preferred_element_type=jnp.float32)              # (L2, D)


# ----------------------------------------------------------------------------
# Fused encoder kernel: attn layer 0 -> conv/pool -> attn layer 1 -> final LN,
# everything resident in VMEM/vregs (no HBM round-trips between stages).
# ----------------------------------------------------------------------------
def _make_kernel(output_attention):
    def kernel(x_ref, wts_ref, vecs_ref, *out_refs):
        if output_attention:
            y_ref, attn0_ref, attn1_ref = out_refs
        else:
            (y_ref,) = out_refs

        def w(name):                                   # static slice of the matrix slab
            o, r, c = W_SLOTS[name]
            return wts_ref[o:o + r, :c]

        def v(name):                                   # static slice of the vector slab
            r, c = V_SLOTS[name]
            return vecs_ref[r:r + 1, :c]

        x = x_ref[0]                                   # (L, D) f32

        x, a0 = _encoder_layer_block(
            x, w('wqkv0'), v('bqkv0'), w('wo0'), v('bo0'),
            w('w10'), v('b10'), w('w20'), v('b20'),
            v('g10'), v('be10'), v('g20'), v('be20'),
            return_attn=output_attention)
        if output_attention:
            attn0_ref[0] = a0                          # one lane-dense (L, H*L) store

        x = _conv_pool_block(x, w('wc'), v('bc'), v('bns'), v('bnt'))

        x, a1 = _encoder_layer_block(
            x, w('wqkv1'), v('bqkv1'), w('wo1'), v('bo1'),
            w('w11'), v('b11'), w('w21'), v('b21'),
            v('g11'), v('be11'), v('g21'), v('be21'),
            return_attn=output_attention)
        if output_attention:
            attn1_ref[0] = a1

        y_ref[0] = _layer_norm(x, v('gf'), v('bf'))
    return kernel


def encoder_forward(x, wts, vecs, output_attention=True):
    B, L, D = x.shape
    assert D == D_MODEL and L % 2 == 0
    L2 = L // 2

    # NOTE(perf): on single-TC v5e/v6e a grid of 1 with batch folded into matmul rows
    # would save one ~0.35us grid step; grid=(B,) + "parallel" is kept because it is the
    # only real parallelism on v7x's two TensorCores (weight duplication is ~300 KiB).
    in_specs = [
        pl.BlockSpec((1, L, D), lambda b: (b, 0, 0)),
        pl.BlockSpec((W_ROWS, LANES), lambda b: (0, 0)),
        pl.BlockSpec((V_ROWS, LANES), lambda b: (0, 0)),
    ]
    out_specs = [pl.BlockSpec((1, L2, D), lambda b: (b, 0, 0))]
    out_shape = [jax.ShapeDtypeStruct((B, L2, D), jnp.float32)]
    if output_attention:
        out_specs += [
            pl.BlockSpec((1, L, N_HEADS * L), lambda b: (b, 0, 0)),
            pl.BlockSpec((1, L2, N_HEADS * L2), lambda b: (b, 0, 0)),
        ]
        out_shape += [
            jax.ShapeDtypeStruct((B, L, N_HEADS * L), jnp.float32),
            jax.ShapeDtypeStruct((B, L2, N_HEADS * L2), jnp.float32),
        ]

    outs = pl.pallas_call(
        _make_kernel(output_attention),
        grid=(B,),
        in_specs=in_specs,
        out_specs=tuple(out_specs),
        out_shape=tuple(out_shape),
        compiler_params=pltpu.CompilerParams(dimension_semantics=("parallel",)),
    )(x, wts, vecs)

    if not output_attention:
        y = outs[0] if isinstance(outs, (tuple, list)) else outs
        return y, [None, None]
    y, a0d, a1d = outs
    # lane-dense kernel outputs -> (B, H, L, L) in the wrapper (free layout plumbing)
    attn0 = a0d.reshape(B, L, N_HEADS, L).transpose(0, 2, 1, 3)
    attn1 = a1d.reshape(B, L2, N_HEADS, L2).transpose(0, 2, 1, 3)
    return y, [attn0, attn1]


# ----------------------------------------------------------------------------
# parameter packing (done once, outside the kernel)
# ----------------------------------------------------------------------------
def pack_params(attn_params, conv_params, norm_params):
    wts = jnp.zeros((W_ROWS, LANES), jnp.float32)
    vecs = jnp.zeros((V_ROWS, LANES), jnp.float32)

    def put_w(slab, name, mat):
        o, r, c = W_SLOTS[name]
        assert mat.shape == (r, c)
        return slab.at[o:o + r, :c].set(mat)

    def put_v(slab, name, vec):
        r, c = V_SLOTS[name]
        vec = vec.reshape(1, -1)
        assert vec.shape == (1, c)
        return slab.at[r:r + 1, :c].set(vec)

    scale = 1.0 / (D_K ** 0.5)
    for li, p in enumerate(attn_params):
        # fold 1/sqrt(d_k) into the Q projection (weights + bias) -> no in-kernel scale
        wqkv = jnp.concatenate([p['wq'] * scale, p['wk'], p['wv']], axis=1)   # (D, 3D)
        bqkv = jnp.concatenate([p['bq'] * scale, p['bk'], p['bv']], axis=1)   # (1, 3D)
        wts = put_w(wts, f'wqkv{li}', wqkv)
        wts = put_w(wts, f'wo{li}', p['wo'])
        wts = put_w(wts, f'w1{li}', p['w1'])
        wts = put_w(wts, f'w2{li}', p['w2'])
        vecs = put_v(vecs, f'bqkv{li}', bqkv)
        vecs = put_v(vecs, f'bo{li}', p['bo'])
        vecs = put_v(vecs, f'b1{li}', p['b1'])
        vecs = put_v(vecs, f'b2{li}', p['b2'])
        vecs = put_v(vecs, f'g1{li}', p['g1'])
        vecs = put_v(vecs, f'be1{li}', p['be1'])
        vecs = put_v(vecs, f'g2{li}', p['g2'])
        vecs = put_v(vecs, f'be2{li}', p['be2'])

    cpar = conv_params[0]
    wc = jnp.concatenate([cpar['w0'], cpar['w1'], cpar['w2']], axis=0)        # (3D, D)
    s = cpar['bn_g'] * jax.lax.rsqrt(cpar['bn_v'] + EPS_BN)                   # BN eval fold
    t = cpar['bn_b'] - cpar['bn_m'] * s
    wts = put_w(wts, 'wc', wc)
    vecs = put_v(vecs, 'bc', cpar['b'])
    vecs = put_v(vecs, 'bns', s)
    vecs = put_v(vecs, 'bnt', t)

    vecs = put_v(vecs, 'gf', norm_params['g'])
    vecs = put_v(vecs, 'bf', norm_params['b'])
    return wts, vecs


# ----------------------------------------------------------------------------
# deterministic parameter init
# ----------------------------------------------------------------------------
def init_all_params(key):
    keys = iter(jax.random.split(key, 64))

    def nrm(shape, scale=0.1):
        return scale * jax.random.normal(next(keys), shape, jnp.float32)

    def attn_layer_params():
        return dict(
            wq=nrm((D_MODEL, D_MODEL)), bq=nrm((1, D_MODEL), 0.01),
            wk=nrm((D_MODEL, D_MODEL)), bk=nrm((1, D_MODEL), 0.01),
            wv=nrm((D_MODEL, D_MODEL)), bv=nrm((1, D_MODEL), 0.01),
            wo=nrm((D_MODEL, D_MODEL)), bo=nrm((1, D_MODEL), 0.01),
            w1=nrm((D_MODEL, D_FF)), b1=nrm((1, D_FF), 0.01),
            w2=nrm((D_FF, D_MODEL)), b2=nrm((1, D_MODEL), 0.01),
            g1=jnp.ones((1, D_MODEL), jnp.float32),
            be1=jnp.zeros((1, D_MODEL), jnp.float32),
            g2=jnp.ones((1, D_MODEL), jnp.float32),
            be2=jnp.zeros((1, D_MODEL), jnp.float32),
        )

    def conv_layer_params():
        return dict(
            # Conv1d weight (C_out, C_in, 3) stored as 3 pre-transposed (C_in, C_out)
            w0=nrm((D_MODEL, D_MODEL)), w1=nrm((D_MODEL, D_MODEL)),
            w2=nrm((D_MODEL, D_MODEL)), b=nrm((1, D_MODEL), 0.01),
            bn_g=jnp.ones((1, D_MODEL), jnp.float32),
            bn_b=jnp.zeros((1, D_MODEL), jnp.float32),
            bn_m=jnp.zeros((1, D_MODEL), jnp.float32),
            bn_v=jnp.ones((1, D_MODEL), jnp.float32),
        )

    attn_params = [attn_layer_params(), attn_layer_params()]
    conv_params = [conv_layer_params()]
    norm_params = dict(g=jnp.ones((1, D_MODEL), jnp.float32),
                       b=jnp.zeros((1, D_MODEL), jnp.float32))
    return attn_params, conv_params, norm_params


# ----------------------------------------------------------------------------
# pure-JAX reference (sanity parity check for the kernel)
# ----------------------------------------------------------------------------
def encoder_reference(x, attn_params, conv_params, norm_params):
    def layer_norm(v, g, b):
        mu = v.mean(-1, keepdims=True)
        var = ((v - mu) ** 2).mean(-1, keepdims=True)
        return (v - mu) / jnp.sqrt(var + EPS_LN) * g + b

    def enc_layer(x, p):                                  # x: (B, L, D)
        B, L, D = x.shape
        q = x @ p['wq'] + p['bq']
        k = x @ p['wk'] + p['bk']
        v = x @ p['wv'] + p['bv']
        qh = q.reshape(B, L, N_HEADS, D_K).transpose(0, 2, 1, 3)
        kh = k.reshape(B, L, N_HEADS, D_K).transpose(0, 2, 1, 3)
        vh = v.reshape(B, L, N_HEADS, D_K).transpose(0, 2, 1, 3)
        s = jnp.einsum('bhqd,bhkd->bhqk', qh, kh) / (D_K ** 0.5)
        a = jax.nn.softmax(s, axis=-1)
        o = jnp.einsum('bhqk,bhkd->bhqd', a, vh).transpose(0, 2, 1, 3).reshape(B, L, D)
        new_x = o @ p['wo'] + p['bo']
        y = layer_norm(x + new_x, p['g1'], p['be1'])
        ff = jnp.maximum(y @ p['w1'] + p['b1'], 0.0) @ p['w2'] + p['b2']
        return layer_norm(y + ff, p['g2'], p['be2']), a

    def conv_layer(x, p):
        xm1 = jnp.roll(x, 1, axis=1)
        xp1 = jnp.roll(x, -1, axis=1)
        c = xm1 @ p['w0'] + x @ p['w1'] + xp1 @ p['w2'] + p['b']
        c = (c - p['bn_m']) * (p['bn_g'] / jnp.sqrt(p['bn_v'] + EPS_BN)) + p['bn_b']
        c = jnp.where(c > 0, c, jnp.exp(c) - 1.0)
        B, L, D = c.shape
        pad = jnp.full((B, 1, D), -1e30, c.dtype)
        cp = jnp.concatenate([pad, c, pad], axis=1)
        m = jnp.maximum(jnp.maximum(cp[:, :L], cp[:, 1:L + 1]), cp[:, 2:L + 2])
        return m[:, ::2]

    x, a0 = enc_layer(x, attn_params[0])
    x = conv_layer(x, conv_params[0])
    x, a1 = enc_layer(x, attn_params[1])
    y = layer_norm(x, norm_params['g'], norm_params['b'])
    return y, [a0, a1]


if __name__ == "__main__":
    key = jax.random.PRNGKey(0)
    k_params, k_x = jax.random.split(key)
    attn_params, conv_params, norm_params = init_all_params(k_params)
    wts, vecs = pack_params(attn_params, conv_params, norm_params)

    B, L = 2, 16
    x = jax.random.normal(k_x, (B, L, D_MODEL), jnp.float32)

    out, attns = encoder_forward(x, wts, vecs, output_attention=True)
    out = jax.block_until_ready(out)
    attns = [jax.block_until_ready(a) for a in attns]

    assert out.shape == (B, L // 2, D_MODEL)
    assert attns[0].shape == (B, N_HEADS, L, L)
    assert attns[1].shape == (B, N_HEADS, L // 2, L // 2)
    assert bool(jnp.all(jnp.isfinite(out)))
    assert bool(jnp.all(jnp.isfinite(attns[0]))) and bool(jnp.all(jnp.isfinite(attns[1])))

    # parity vs. pure-JAX reference (reference at full f32 matmul precision)
    with jax.default_matmul_precision("float32"):
        ref_y, ref_attns = encoder_reference(x, attn_params, conv_params, norm_params)
    assert bool(jnp.allclose(out, ref_y, rtol=2e-2, atol=2e-2))
    assert bool(jnp.allclose(attns[0], ref_attns[0], atol=5e-3))
    assert bool(jnp.allclose(attns[1], ref_attns[1], atol=5e-3))

    print("KERNEL_OK")
</pallas_src>

<mosaic_0001>
module attributes {stable_mosaic.version = 11 : i64} {
  func.func @kernel(%arg0: i32, %arg1: memref<1x16x32xf32, #tpu.memory_space<vmem>>, %arg2: memref<544x128xf32, #tpu.memory_space<vmem>>, %arg3: memref<24x128xf32, #tpu.memory_space<vmem>>, %arg4: memref<1x8x32xf32, #tpu.memory_space<vmem>>, %arg5: memref<1x16x64xf32, #tpu.memory_space<vmem>>, %arg6: memref<1x8x32xf32, #tpu.memory_space<vmem>>) attributes {dimension_semantics = [#tpu.dimension_semantics<parallel>], iteration_bounds = array<i64: 2>, scalar_prefetch = 0 : i64, scratch_operands = 0 : i64, tpu.core_type = #tpu.core_type<tc>, window_params = [{transform_indices = @transform_0, window_bounds = array<i64: 1, 16, 32>}, {pipeline_mode = #tpu.pipeline_mode<synchronous>, transform_indices = @transform_1, window_bounds = array<i64: 544, 128>}, {pipeline_mode = #tpu.pipeline_mode<synchronous>, transform_indices = @transform_2, window_bounds = array<i64: 24, 128>}, {transform_indices = @transform_3, window_bounds = array<i64: 1, 8, 32>}, {transform_indices = @transform_4, window_bounds = array<i64: 1, 16, 64>}, {transform_indices = @transform_5, window_bounds = array<i64: 1, 8, 32>}]} {
    %c0 = arith.constant 0 : index
    %c0_0 = arith.constant 0 : index
    %c0_1 = arith.constant 0 : index
    %0 = vector.load %arg1[%c0, %c0_0, %c0_1] : memref<1x16x32xf32, #tpu.memory_space<vmem>>, vector<1x16x32xf32>
    %1 = vector.shape_cast %0 : vector<1x16x32xf32> to vector<16x32xf32>
    %c0_2 = arith.constant 0 : index
    %c0_3 = arith.constant 0 : index
    %2 = vector.load %arg2[%c0_2, %c0_3] : memref<544x128xf32, #tpu.memory_space<vmem>>, vector<32x96xf32>
    %c0_4 = arith.constant 0 : index
    %c0_5 = arith.constant 0 : index
    %3 = vector.load %arg3[%c0_4, %c0_5] : memref<24x128xf32, #tpu.memory_space<vmem>>, vector<1x96xf32>
    %c32 = arith.constant 32 : index
    %c0_6 = arith.constant 0 : index
    %4 = vector.load %arg2[%c32, %c0_6] : memref<544x128xf32, #tpu.memory_space<vmem>>, vector<32x32xf32>
    %c1 = arith.constant 1 : index
    %c0_7 = arith.constant 0 : index
    %5 = vector.load %arg3[%c1, %c0_7] : memref<24x128xf32, #tpu.memory_space<vmem>>, vector<1x32xf32>
    %c64 = arith.constant 64 : index
    %c0_8 = arith.constant 0 : index
    %6 = vector.load %arg2[%c64, %c0_8] : memref<544x128xf32, #tpu.memory_space<vmem>>, vector<32x128xf32>
    %c2 = arith.constant 2 : index
    %c0_9 = arith.constant 0 : index
    %7 = vector.load %arg3[%c2, %c0_9] : memref<24x128xf32, #tpu.memory_space<vmem>>, vector<1x128xf32>
    %c96 = arith.constant 96 : index
    %c0_10 = arith.constant 0 : index
    %8 = vector.load %arg2[%c96, %c0_10] : memref<544x128xf32, #tpu.memory_space<vmem>>, vector<128x32xf32>
    %c3 = arith.constant 3 : index
    %c0_11 = arith.constant 0 : index
    %9 = vector.load %arg3[%c3, %c0_11] : memref<24x128xf32, #tpu.memory_space<vmem>>, vector<1x32xf32>
    %c4 = arith.constant 4 : index
    %c0_12 = arith.constant 0 : index
    %10 = vector.load %arg3[%c4, %c0_12] : memref<24x128xf32, #tpu.memory_space<vmem>>, vector<1x32xf32>
    %c5 = arith.constant 5 : index
    %c0_13 = arith.constant 0 : index
    %11 = vector.load %arg3[%c5, %c0_13] : memref<24x128xf32, #tpu.memory_space<vmem>>, vector<1x32xf32>
    %c6 = arith.constant 6 : index
    %c0_14 = arith.constant 0 : index
    %12 = vector.load %arg3[%c6, %c0_14] : memref<24x128xf32, #tpu.memory_space<vmem>>, vector<1x32xf32>
    %c7 = arith.constant 7 : index
    %c0_15 = arith.constant 0 : index
    %13 = vector.load %arg3[%c7, %c0_15] : memref<24x128xf32, #tpu.memory_space<vmem>>, vector<1x32xf32>
    %cst = arith.constant dense<0.000000e+00> : vector<16x96xf32>
    %14 = tpu.matmul %1, %2, %cst {dimension_numbers = #tpu.dot_dimension_numbers<[1], [0], [0], [1], [0, 0, 1, 1], [], []>} : vector<16x32xf32>, vector<32x96xf32>, vector<16x96xf32> -> vector<16x96xf32>
    %15 = vector.broadcast %3 : vector<1x96xf32> to vector<16x96xf32>
    %16 = arith.addf %14, %15 : vector<16x96xf32>
    %17 = vector.extract_strided_slice %16 {offsets = [0, 0], sizes = [16, 32], strides = [1, 1]} : vector<16x96xf32> to vector<16x32xf32>
    %18 = vector.extract_strided_slice %16 {offsets = [0, 32], sizes = [16, 32], strides = [1, 1]} : vector<16x96xf32> to vector<16x32xf32>
    %19 = vector.extract_strided_slice %16 {offsets = [0, 64], sizes = [16, 32], strides = [1, 1]} : vector<16x96xf32> to vector<16x32xf32>
    %20 = vector.extract_strided_slice %17 {offsets = [0, 0], sizes = [16, 8], strides = [1, 1]} : vector<16x32xf32> to vector<16x8xf32>
    %21 = vector.extract_strided_slice %18 {offsets = [0, 0], sizes = [16, 8], strides = [1, 1]} : vector<16x32xf32> to vector<16x8xf32>
    %22 = vector.extract_strided_slice %19 {offsets = [0, 0], sizes = [16, 8], strides = [1, 1]} : vector<16x32xf32> to vector<16x8xf32>
    %cst_16 = arith.constant dense<0.000000e+00> : vector<16x16xf32>
    %23 = tpu.matmul %20, %21, %cst_16 {dimension_numbers = #tpu.dot_dimension_numbers<[1], [1], [0], [0], [0, 0, 1, 0], [], []>} : vector<16x8xf32>, vector<16x8xf32>, vector<16x16xf32> -> vector<16x16xf32>
    %cst_17 = arith.constant dense<0xFF800000> : vector<16xf32>
    %24 = vector.multi_reduction <maximumf>, %23, %cst_17 [1] : vector<16x16xf32> to vector<16xf32>
    %25 = vector.shape_cast %24 : vector<16xf32> to vector<16x1xf32>
    %26 = vector.broadcast %25 : vector<16x1xf32> to vector<16x16xf32>
    %27 = arith.subf %23, %26 : vector<16x16xf32>
    %28 = math.exp %27 : vector<16x16xf32>
    %cst_18 = arith.constant dense<0.000000e+00> : vector<16xf32>
    %29 = vector.multi_reduction <add>, %28, %cst_18 [1] : vector<16x16xf32> to vector<16xf32>
    %30 = vector.shape_cast %29 : vector<16xf32> to vector<16x1xf32>
    %31 = vector.broadcast %30 : vector<16x1xf32> to vector<16x16xf32>
    %32 = arith.divf %28, %31 : vector<16x16xf32>
    %cst_19 = arith.constant dense<0.000000e+00> : vector<16x8xf32>
    %33 = tpu.matmul %32, %22, %cst_19 {dimension_numbers = #tpu.dot_dimension_numbers<[1], [0], [0], [1], [0, 0, 1, 1], [], []>} : vector<16x16xf32>, vector<16x8xf32>, vector<16x8xf32> -> vector<16x8xf32>
    %34 = vector.extract_strided_slice %17 {offsets = [0, 8], sizes = [16, 8], strides = [1, 1]} : vector<16x32xf32> to vector<16x8xf32>
    %35 = vector.extract_strided_slice %18 {offsets = [0, 8], sizes = [16, 8], strides = [1, 1]} : vector<16x32xf32> to vector<16x8xf32>
    %36 = vector.extract_strided_slice %19 {offsets = [0, 8], sizes = [16, 8], strides = [1, 1]} : vector<16x32xf32> to vector<16x8xf32>
    %cst_20 = arith.constant dense<0.000000e+00> : vector<16x16xf32>
    %37 = tpu.matmul %34, %35, %cst_20 {dimension_numbers = #tpu.dot_dimension_numbers<[1], [1], [0], [0], [0, 0, 1, 0], [], []>} : vector<16x8xf32>, vector<16x8xf32>, vector<16x16xf32> -> vector<16x16xf32>
    %cst_21 = arith.constant dense<0xFF800000> : vector<16xf32>
    %38 = vector.multi_reduction <maximumf>, %37, %cst_21 [1] : vector<16x16xf32> to vector<16xf32>
    %39 = vector.shape_cast %38 : vector<16xf32> to vector<16x1xf32>
    %40 = vector.broadcast %39 : vector<16x1xf32> to vector<16x16xf32>
    %41 = arith.subf %37, %40 : vector<16x16xf32>
    %42 = math.exp %41 : vector<16x16xf32>
    %cst_22 = arith.constant dense<0.000000e+00> : vector<16xf32>
    %43 = vector.multi_reduction <add>, %42, %cst_22 [1] : vector<16x16xf32> to vector<16xf32>
    %44 = vector.shape_cast %43 : vector<16xf32> to vector<16x1xf32>
    %45 = vector.broadcast %44 : vector<16x1xf32> to vector<16x16xf32>
    %46 = arith.divf %42, %45 : vector<16x16xf32>
    %cst_23 = arith.constant dense<0.000000e+00> : vector<16x8xf32>
    %47 = tpu.matmul %46, %36, %cst_23 {dimension_numbers = #tpu.dot_dimension_numbers<[1], [0], [0], [1], [0, 0, 1, 1], [], []>} : vector<16x16xf32>, vector<16x8xf32>, vector<16x8xf32> -> vector<16x8xf32>
    %48 = vector.extract_strided_slice %17 {offsets = [0, 16], sizes = [16, 8], strides = [1, 1]} : vector<16x32xf32> to vector<16x8xf32>
    %49 = vector.extract_strided_slice %18 {offsets = [0, 16], sizes = [16, 8], strides = [1, 1]} : vector<16x32xf32> to vector<16x8xf32>
    %50 = vector.extract_strided_slice %19 {offsets = [0, 16], sizes = [16, 8], strides = [1, 1]} : vector<16x32xf32> to vector<16x8xf32>
    %cst_24 = arith.constant dense<0.000000e+00> : vector<16x16xf32>
    %51 = tpu.matmul %48, %49, %cst_24 {dimension_numbers = #tpu.dot_dimension_numbers<[1], [1], [0], [0], [0, 0, 1, 0], [], []>} : vector<16x8xf32>, vector<16x8xf32>, vector<16x16xf32> -> vector<16x16xf32>
    %cst_25 = arith.constant dense<0xFF800000> : vector<16xf32>
    %52 = vector.multi_reduction <maximumf>, %51, %cst_25 [1] : vector<16x16xf32> to vector<16xf32>
    %53 = vector.shape_cast %52 : vector<16xf32> to vector<16x1xf32>
    %54 = vector.broadcast %53 : vector<16x1xf32> to vector<16x16xf32>
    %55 = arith.subf %51, %54 : vector<16x16xf32>
    %56 = math.exp %55 : vector<16x16xf32>
    %cst_26 = arith.constant dense<0.000000e+00> : vector<16xf32>
    %57 = vector.multi_reduction <add>, %56, %cst_26 [1] : vector<16x16xf32> to vector<16xf32>
    %58 = vector.shape_cast %57 : vector<16xf32> to vector<16x1xf32>
    %59 = vector.broadcast %58 : vector<16x1xf32> to vector<16x16xf32>
    %60 = arith.divf %56, %59 : vector<16x16xf32>
    %cst_27 = arith.constant dense<0.000000e+00> : vector<16x8xf32>
    %61 = tpu.matmul %60, %50, %cst_27 {dimension_numbers = #tpu.dot_dimension_numbers<[1], [0], [0], [1], [0, 0, 1, 1], [], []>} : vector<16x16xf32>, vector<16x8xf32>, vector<16x8xf32> -> vector<16x8xf32>
    %62 = vector.extract_strided_slice %17 {offsets = [0, 24], sizes = [16, 8], strides = [1, 1]} : vector<16x32xf32> to vector<16x8xf32>
    %63 = vector.extract_strided_slice %18 {offsets = [0, 24], sizes = [16, 8], strides = [1, 1]} : vector<16x32xf32> to vector<16x8xf32>
    %64 = vector.extract_strided_slice %19 {offsets = [0, 24], sizes = [16, 8], strides = [1, 1]} : vector<16x32xf32> to vector<16x8xf32>
    %cst_28 = arith.constant dense<0.000000e+00> : vector<16x16xf32>
    %65 = tpu.matmul %62, %63, %cst_28 {dimension_numbers = #tpu.dot_dimension_numbers<[1], [1], [0], [0], [0, 0, 1, 0], [], []>} : vector<16x8xf32>, vector<16x8xf32>, vector<16x16xf32> -> vector<16x16xf32>
    %cst_29 = arith.constant dense<0xFF800000> : vector<16xf32>
    %66 = vector.multi_reduction <maximumf>, %65, %cst_29 [1] : vector<16x16xf32> to vector<16xf32>
    %67 = vector.shape_cast %66 : vector<16xf32> to vector<16x1xf32>
    %68 = vector.broadcast %67 : vector<16x1xf32> to vector<16x16xf32>
    %69 = arith.subf %65, %68 : vector<16x16xf32>
    %70 = math.exp %69 : vector<16x16xf32>
    %cst_30 = arith.constant dense<0.000000e+00> : vector<16xf32>
    %71 = vector.multi_reduction <add>, %70, %cst_30 [1] : vector<16x16xf32> to vector<16xf32>
    %72 = vector.shape_cast %71 : vector<16xf32> to vector<16x1xf32>
    %73 = vector.broadcast %72 : vector<16x1xf32> to vector<16x16xf32>
    %74 = arith.divf %70, %73 : vector<16x16xf32>
    %cst_31 = arith.constant dense<0.000000e+00> : vector<16x8xf32>
    %75 = tpu.matmul %74, %64, %cst_31 {dimension_numbers = #tpu.dot_dimension_numbers<[1], [0], [0], [1], [0, 0, 1, 1], [], []>} : vector<16x16xf32>, vector<16x8xf32>, vector<16x8xf32> -> vector<16x8xf32>
    %76 = tpu.concatenate %32, %46, %60, %74 in 1 : vector<16x16xf32>, vector<16x16xf32>, vector<16x16xf32>, vector<16x16xf32> -> vector<16x64xf32>
    %77 = tpu.concatenate %33, %47, %61, %75 in 1 : vector<16x8xf32>, vector<16x8xf32>, vector<16x8xf32>, vector<16x8xf32> -> vector<16x32xf32>
    %cst_32 = arith.constant dense<0.000000e+00> : vector<16x32xf32>
    %78 = tpu.matmul %77, %4, %cst_32 {dimension_numbers = #tpu.dot_dimension_numbers<[1], [0], [0], [1], [0, 0, 1, 1], [], []>} : vector<16x32xf32>, vector<32x32xf32>, vector<16x32xf32> -> vector<16x32xf32>
    %79 = vector.broadcast %5 : vector<1x32xf32> to vector<16x32xf32>
    %80 = arith.addf %78, %79 : vector<16x32xf32>
    %81 = arith.addf %1, %80 : vector<16x32xf32>
    %cst_33 = arith.constant dense<0.000000e+00> : vector<16xf32>
    %82 = vector.multi_reduction <add>, %81, %cst_33 [1] : vector<16x32xf32> to vector<16xf32>
    %83 = vector.shape_cast %82 : vector<16xf32> to vector<16x1xf32>
    %cst_34 = arith.constant 3.200000e+01 : f32
    %84 = vector.broadcast %cst_34 : f32 to vector<16x1xf32>
    %85 = arith.divf %83, %84 : vector<16x1xf32>
    %86 = vector.broadcast %85 : vector<16x1xf32> to vector<16x32xf32>
    %87 = arith.subf %81, %86 : vector<16x32xf32>
    %88 = arith.mulf %87, %87 : vector<16x32xf32>
    %cst_35 = arith.constant dense<0.000000e+00> : vector<16xf32>
    %89 = vector.multi_reduction <add>, %88, %cst_35 [1] : vector<16x32xf32> to vector<16xf32>
    %90 = vector.shape_cast %89 : vector<16xf32> to vector<16x1xf32>
    %cst_36 = arith.constant 3.200000e+01 : f32
    %91 = vector.broadcast %cst_36 : f32 to vector<16x1xf32>
    %92 = arith.divf %90, %91 : vector<16x1xf32>
    %93 = vector.broadcast %85 : vector<16x1xf32> to vector<16x32xf32>
    %94 = arith.subf %81, %93 : vector<16x32xf32>
    %cst_37 = arith.constant 9.99999974E-6 : f32
    %95 = vector.broadcast %cst_37 : f32 to vector<16x1xf32>
    %96 = arith.addf %92, %95 : vector<16x1xf32>
    %97 = math.rsqrt %96 : vector<16x1xf32>
    %98 = vector.broadcast %97 : vector<16x1xf32> to vector<16x32xf32>
    %99 = arith.mulf %94, %98 : vector<16x32xf32>
    %100 = vector.broadcast %10 : vector<1x32xf32> to vector<16x32xf32>
    %101 = arith.mulf %99, %100 : vector<16x32xf32>
    %102 = vector.broadcast %11 : vector<1x32xf32> to vector<16x32xf32>
    %103 = arith.addf %101, %102 : vector<16x32xf32>
    %cst_38 = arith.constant dense<0.000000e+00> : vector<16x128xf32>
    %104 = tpu.matmul %103, %6, %cst_38 {dimension_numbers = #tpu.dot_dimension_numbers<[1], [0], [0], [1], [0, 0, 1, 1], [], []>} : vector<16x32xf32>, vector<32x128xf32>, vector<16x128xf32> -> vector<16x128xf32>
    %105 = vector.broadcast %7 : vector<1x128xf32> to vector<16x128xf32>
    %106 = arith.addf %104, %105 : vector<16x128xf32>
    %cst_39 = arith.constant 0.000000e+00 : f32
    %107 = vector.broadcast %cst_39 : f32 to vector<16x128xf32>
    %108 = arith.maximumf %106, %107 : vector<16x128xf32>
    %cst_40 = arith.constant dense<0.000000e+00> : vector<16x32xf32>
    %109 = tpu.matmul %108, %8, %cst_40 {dimension_numbers = #tpu.dot_dimension_numbers<[1], [0], [0], [1], [0, 0, 1, 1], [], []>} : vector<16x128xf32>, vector<128x32xf32>, vector<16x32xf32> -> vector<16x32xf32>
    %110 = vector.broadcast %9 : vector<1x32xf32> to vector<16x32xf32>
    %111 = arith.addf %109, %110 : vector<16x32xf32>
    %112 = arith.addf %103, %111 : vector<16x32xf32>
    %cst_41 = arith.constant dense<0.000000e+00> : vector<16xf32>
    %113 = vector.multi_reduction <add>, %112, %cst_41 [1] : vector<16x32xf32> to vector<16xf32>
    %114 = vector.shape_cast %113 : vector<16xf32> to vector<16x1xf32>
    %cst_42 = arith.constant 3.200000e+01 : f32
    %115 = vector.broadcast %cst_42 : f32 to vector<16x1xf32>
    %116 = arith.divf %114, %115 : vector<16x1xf32>
    %117 = vector.broadcast %116 : vector<16x1xf32> to vector<16x32xf32>
    %118 = arith.subf %112, %117 : vector<16x32xf32>
    %119 = arith.mulf %118, %118 : vector<16x32xf32>
    %cst_43 = arith.constant dense<0.000000e+00> : vector<16xf32>
    %120 = vector.multi_reduction <add>, %119, %cst_43 [1] : vector<16x32xf32> to vector<16xf32>
    %121 = vector.shape_cast %120 : vector<16xf32> to vector<16x1xf32>
    %cst_44 = arith.constant 3.200000e+01 : f32
    %122 = vector.broadcast %cst_44 : f32 to vector<16x1xf32>
    %123 = arith.divf %121, %122 : vector<16x1xf32>
    %124 = vector.broadcast %116 : vector<16x1xf32> to vector<16x32xf32>
    %125 = arith.subf %112, %124 : vector<16x32xf32>
    %cst_45 = arith.constant 9.99999974E-6 : f32
    %126 = vector.broadcast %cst_45 : f32 to vector<16x1xf32>
    %127 = arith.addf %123, %126 : vector<16x1xf32>
    %128 = math.rsqrt %127 : vector<16x1xf32>
    %129 = vector.broadcast %128 : vector<16x1xf32> to vector<16x32xf32>
    %130 = arith.mulf %125, %129 : vector<16x32xf32>
    %131 = vector.broadcast %12 : vector<1x32xf32> to vector<16x32xf32>
    %132 = arith.mulf %130, %131 : vector<16x32xf32>
    %133 = vector.broadcast %13 : vector<1x32xf32> to vector<16x32xf32>
    %134 = arith.addf %132, %133 : vector<16x32xf32>
    %c0_46 = arith.constant 0 : index
    %c0_47 = arith.constant 0 : index
    %c0_48 = arith.constant 0 : index
    %135 = vector.load %arg5[%c0_46, %c0_47, %c0_48] : memref<1x16x64xf32, #tpu.memory_space<vmem>>, vector<1x16x64xf32>
    %136 = vector.shape_cast %135 : vector<1x16x64xf32> to vector<16x64xf32>
    %137 = vector.shape_cast %76 : vector<16x64xf32> to vector<1x16x64xf32>
    tpu.vector_store %arg5[%c0_46, %c0_47, %c0_48], %137 {strides = array<i32>} : memref<1x16x64xf32, #tpu.memory_space<vmem>>, vector<1x16x64xf32>,
    %c224 = arith.constant 224 : index
    %c0_49 = arith.constant 0 : index
    %138 = vector.load %arg2[%c224, %c0_49] : memref<544x128xf32, #tpu.memory_space<vmem>>, vector<96x32xf32>
    %c8 = arith.constant 8 : index
    %c0_50 = arith.constant 0 : index
    %139 = vector.load %arg3[%c8, %c0_50] : memref<24x128xf32, #tpu.memory_space<vmem>>, vector<1x32xf32>
    %c9 = arith.constant 9 : index
    %c0_51 = arith.constant 0 : index
    %140 = vector.load %arg3[%c9, %c0_51] : memref<24x128xf32, #tpu.memory_space<vmem>>, vector<1x32xf32>
    %c10 = arith.constant 10 : index
    %c0_52 = arith.constant 0 : index
    %141 = vector.load %arg3[%c10, %c0_52] : memref<24x128xf32, #tpu.memory_space<vmem>>, vector<1x32xf32>
    %142 = vector.extract_strided_slice %134 {offsets = [15, 0], sizes = [1, 32], strides = [1, 1]} : vector<16x32xf32> to vector<1x32xf32>
    %143 = vector.extract_strided_slice %134 {offsets = [0, 0], sizes = [15, 32], strides = [1, 1]} : vector<16x32xf32> to vector<15x32xf32>
    %144 = tpu.concatenate %142, %143 in 0 : vector<1x32xf32>, vector<15x32xf32> -> vector<16x32xf32>
    %145 = vector.extract_strided_slice %134 {offsets = [1, 0], sizes = [15, 32], strides = [1, 1]} : vector<16x32xf32> to vector<15x32xf32>
    %146 = vector.extract_strided_slice %134 {offsets = [0, 0], sizes = [1, 32], strides = [1, 1]} : vector<16x32xf32> to vector<1x32xf32>
    %147 = tpu.concatenate %145, %146 in 0 : vector<15x32xf32>, vector<1x32xf32> -> vector<16x32xf32>
    %148 = tpu.concatenate %144, %134, %147 in 1 : vector<16x32xf32>, vector<16x32xf32>, vector<16x32xf32> -> vector<16x96xf32>
    %cst_53 = arith.constant dense<0.000000e+00> : vector<16x32xf32>
    %149 = tpu.matmul %148, %138, %cst_53 {dimension_numbers = #tpu.dot_dimension_numbers<[1], [0], [0], [1], [0, 0, 1, 1], [], []>} : vector<16x96xf32>, vector<96x32xf32>, vector<16x32xf32> -> vector<16x32xf32>
    %150 = vector.broadcast %139 : vector<1x32xf32> to vector<16x32xf32>
    %151 = arith.addf %149, %150 : vector<16x32xf32>
    %152 = vector.broadcast %140 : vector<1x32xf32> to vector<16x32xf32>
    %153 = arith.mulf %151, %152 : vector<16x32xf32>
    %154 = vector.broadcast %141 : vector<1x32xf32> to vector<16x32xf32>
    %155 = arith.addf %153, %154 : vector<16x32xf32>
    %cst_54 = arith.constant 0.000000e+00 : f32
    %156 = vector.broadcast %cst_54 : f32 to vector<16x32xf32>
    %157 = arith.cmpf ogt, %155, %156 : vector<16x32xf32>
    %158 = math.exp %155 : vector<16x32xf32>
    %cst_55 = arith.constant 1.000000e+00 : f32
    %159 = vector.broadcast %cst_55 : f32 to vector<16x32xf32>
    %160 = arith.subf %158, %159 : vector<16x32xf32>
    %161 = arith.select %157, %155, %160 : vector<16x32xi1>, vector<16x32xf32>
    %cst_56 = arith.constant -1.000000e+30 : f32
    %162 = vector.broadcast %cst_56 : f32 to vector<1x32xf32>
    %163 = tpu.concatenate %162, %161, %162 in 0 : vector<1x32xf32>, vector<16x32xf32>, vector<1x32xf32> -> vector<18x32xf32>
    %164 = vector.extract_strided_slice %163 {offsets = [0, 0], sizes = [16, 32], strides = [1, 1]} : vector<18x32xf32> to vector<16x32xf32>
    %165 = vector.extract_strided_slice %163 {offsets = [1, 0], sizes = [16, 32], strides = [1, 1]} : vector<18x32xf32> to vector<16x32xf32>
    %166 = arith.maximumf %164, %165 : vector<16x32xf32>
    %167 = vector.extract_strided_slice %163 {offsets = [2, 0], sizes = [16, 32], strides = [1, 1]} : vector<18x32xf32> to vector<16x32xf32>
    %168 = arith.maximumf %166, %167 : vector<16x32xf32>
    %169 = tpu.iota {dimensions = array<i32: 1>} : vector<8x16xi32>
    %170 = tpu.iota {dimensions = array<i32: 0>} : vector<8x16xi32>
    %c2_i32 = arith.constant 2 : i32
    %171 = vector.broadcast %c2_i32 : i32 to vector<8x16xi32>
    %172 = arith.muli %171, %170 : vector<8x16xi32>
    %173 = arith.cmpi eq, %169, %172 : vector<8x16xi32>
    %174 = arith.extui %173 : vector<8x16xi1> to vector<8x16xi32>
    %175 = arith.sitofp %174 : vector<8x16xi32> to vector<8x16xf32>
    %cst_57 = arith.constant dense<0.000000e+00> : vector<8x32xf32>
    %176 = tpu.matmul %175, %168, %cst_57 {dimension_numbers = #tpu.dot_dimension_numbers<[1], [0], [0], [1], [0, 0, 1, 1], [], []>} : vector<8x16xf32>, vector<16x32xf32>, vector<8x32xf32> -> vector<8x32xf32>
    %c320 = arith.constant 320 : index
    %c0_58 = arith.constant 0 : index
    %177 = vector.load %arg2[%c320, %c0_58] : memref<544x128xf32, #tpu.memory_space<vmem>>, vector<32x96xf32>
    %c11 = arith.constant 11 : index
    %c0_59 = arith.constant 0 : index
    %178 = vector.load %arg3[%c11, %c0_59] : memref<24x128xf32, #tpu.memory_space<vmem>>, vector<1x96xf32>
    %c352 = arith.constant 352 : index
    %c0_60 = arith.constant 0 : index
    %179 = vector.load %arg2[%c352, %c0_60] : memref<544x128xf32, #tpu.memory_space<vmem>>, vector<32x32xf32>
    %c12 = arith.constant 12 : index
    %c0_61 = arith.constant 0 : index
    %180 = vector.load %arg3[%c12, %c0_61] : memref<24x128xf32, #tpu.memory_space<vmem>>, vector<1x32xf32>
    %c384 = arith.constant 384 : index
    %c0_62 = arith.constant 0 : index
    %181 = vector.load %arg2[%c384, %c0_62] : memref<544x128xf32, #tpu.memory_space<vmem>>, vector<32x128xf32>
    %c13 = arith.constant 13 : index
    %c0_63 = arith.constant 0 : index
    %182 = vector.load %arg3[%c13, %c0_63] : memref<24x128xf32, #tpu.memory_space<vmem>>, vector<1x128xf32>
    %c416 = arith.constant 416 : index
    %c0_64 = arith.constant 0 : index
    %183 = vector.load %arg2[%c416, %c0_64] : memref<544x128xf32, #tpu.memory_space<vmem>>, vector<128x32xf32>
    %c14 = arith.constant 14 : index
    %c0_65 = arith.constant 0 : index
    %184 = vector.load %arg3[%c14, %c0_65] : memref<24x128xf32, #tpu.memory_space<vmem>>, vector<1x32xf32>
    %c15 = arith.constant 15 : index
    %c0_66 = arith.constant 0 : index
    %185 = vector.load %arg3[%c15, %c0_66] : memref<24x128xf32, #tpu.memory_space<vmem>>, vector<1x32xf32>
    %c16 = arith.constant 16 : index
    %c0_67 = arith.constant 0 : index
    %186 = vector.load %arg3[%c16, %c0_67] : memref<24x128xf32, #tpu.memory_space<vmem>>, vector<1x32xf32>
    %c17 = arith.constant 17 : index
    %c0_68 = arith.constant 0 : index
    %187 = vector.load %arg3[%c17, %c0_68] : memref<24x128xf32, #tpu.memory_space<vmem>>, vector<1x32xf32>
    %c18 = arith.constant 18 : index
    %c0_69 = arith.constant 0 : index
    %188 = vector.load %arg3[%c18, %c0_69] : memref<24x128xf32, #tpu.memory_space<vmem>>, vector<1x32xf32>
    %cst_70 = arith.constant dense<0.000000e+00> : vector<8x96xf32>
    %189 = tpu.matmul %176, %177, %cst_70 {dimension_numbers = #tpu.dot_dimension_numbers<[1], [0], [0], [1], [0, 0, 1, 1], [], []>} : vector<8x32xf32>, vector<32x96xf32>, vector<8x96xf32> -> vector<8x96xf32>
    %190 = vector.broadcast %178 : vector<1x96xf32> to vector<8x96xf32>
    %191 = arith.addf %189, %190 : vector<8x96xf32>
    %192 = vector.extract_strided_slice %191 {offsets = [0, 0], sizes = [8, 32], strides = [1, 1]} : vector<8x96xf32> to vector<8x32xf32>
    %193 = vector.extract_strided_slice %191 {offsets = [0, 32], sizes = [8, 32], strides = [1, 1]} : vector<8x96xf32> to vector<8x32xf32>
    %194 = vector.extract_strided_slice %191 {offsets = [0, 64], sizes = [8, 32], strides = [1, 1]} : vector<8x96xf32> to vector<8x32xf32>
    %195 = vector.extract_strided_slice %192 {offsets = [0, 0], sizes = [8, 8], strides = [1, 1]} : vector<8x32xf32> to vector<8x8xf32>
    %196 = vector.extract_strided_slice %193 {offsets = [0, 0], sizes = [8, 8], strides = [1, 1]} : vector<8x32xf32> to vector<8x8xf32>
    %197 = vector.extract_strided_slice %194 {offsets = [0, 0], sizes = [8, 8], strides = [1, 1]} : vector<8x32xf32> to vector<8x8xf32>
    %cst_71 = arith.constant dense<0.000000e+00> : vector<8x8xf32>
    %198 = tpu.matmul %195, %196, %cst_71 {dimension_numbers = #tpu.dot_dimension_numbers<[1], [1], [0], [0], [0, 0, 1, 0], [], []>} : vector<8x8xf32>, vector<8x8xf32>, vector<8x8xf32> -> vector<8x8xf32>
    %cst_72 = arith.constant dense<0xFF800000> : vector<8xf32>
    %199 = vector.multi_reduction <maximumf>, %198, %cst_72 [1] : vector<8x8xf32> to vector<8xf32>
    %200 = vector.shape_cast %199 : vector<8xf32> to vector<8x1xf32>
    %201 = vector.broadcast %200 : vector<8x1xf32> to vector<8x8xf32>
    %202 = arith.subf %198, %201 : vector<8x8xf32>
    %203 = math.exp %202 : vector<8x8xf32>
    %cst_73 = arith.constant dense<0.000000e+00> : vector<8xf32>
    %204 = vector.multi_reduction <add>, %203, %cst_73 [1] : vector<8x8xf32> to vector<8xf32>
    %205 = vector.shape_cast %204 : vector<8xf32> to vector<8x1xf32>
    %206 = vector.broadcast %205 : vector<8x1xf32> to vector<8x8xf32>
    %207 = arith.divf %203, %206 : vector<8x8xf32>
    %cst_74 = arith.constant dense<0.000000e+00> : vector<8x8xf32>
    %208 = tpu.matmul %207, %197, %cst_74 {dimension_numbers = #tpu.dot_dimension_numbers<[1], [0], [0], [1], [0, 0, 1, 1], [], []>} : vector<8x8xf32>, vector<8x8xf32>, vector<8x8xf32> -> vector<8x8xf32>
    %209 = vector.extract_strided_slice %192 {offsets = [0, 8], sizes = [8, 8], strides = [1, 1]} : vector<8x32xf32> to vector<8x8xf32>
    %210 = vector.extract_strided_slice %193 {offsets = [0, 8], sizes = [8, 8], strides = [1, 1]} : vector<8x32xf32> to vector<8x8xf32>
    %211 = vector.extract_strided_slice %194 {offsets = [0, 8], sizes = [8, 8], strides = [1, 1]} : vector<8x32xf32> to vector<8x8xf32>
    %cst_75 = arith.constant dense<0.000000e+00> : vector<8x8xf32>
    %212 = tpu.matmul %209, %210, %cst_75 {dimension_numbers = #tpu.dot_dimension_numbers<[1], [1], [0], [0], [0, 0, 1, 0], [], []>} : vector<8x8xf32>, vector<8x8xf32>, vector<8x8xf32> -> vector<8x8xf32>
    %cst_76 = arith.constant dense<0xFF800000> : vector<8xf32>
    %213 = vector.multi_reduction <maximumf>, %212, %cst_76 [1] : vector<8x8xf32> to vector<8xf32>
    %214 = vector.shape_cast %213 : vector<8xf32> to vector<8x1xf32>
    %215 = vector.broadcast %214 : vector<8x1xf32> to vector<8x8xf32>
    %216 = arith.subf %212, %215 : vector<8x8xf32>
    %217 = math.exp %216 : vector<8x8xf32>
    %cst_77 = arith.constant dense<0.000000e+00> : vector<8xf32>
    %218 = vector.multi_reduction <add>, %217, %cst_77 [1] : vector<8x8xf32> to vector<8xf32>
    %219 = vector.shape_cast %218 : vector<8xf32> to vector<8x1xf32>
    %220 = vector.broadcast %219 : vector<8x1xf32> to vector<8x8xf32>
    %221 = arith.divf %217, %220 : vector<8x8xf32>
    %cst_78 = arith.constant dense<0.000000e+00> : vector<8x8xf32>
    %222 = tpu.matmul %221, %211, %cst_78 {dimension_numbers = #tpu.dot_dimension_numbers<[1], [0], [0], [1], [0, 0, 1, 1], [], []>} : vector<8x8xf32>, vector<8x8xf32>, vector<8x8xf32> -> vector<8x8xf32>
    %223 = vector.extract_strided_slice %192 {offsets = [0, 16], sizes = [8, 8], strides = [1, 1]} : vector<8x32xf32> to vector<8x8xf32>
    %224 = vector.extract_strided_slice %193 {offsets = [0, 16], sizes = [8, 8], strides = [1, 1]} : vector<8x32xf32> to vector<8x8xf32>
    %225 = vector.extract_strided_slice %194 {offsets = [0, 16], sizes = [8, 8], strides = [1, 1]} : vector<8x32xf32> to vector<8x8xf32>
    %cst_79 = arith.constant dense<0.000000e+00> : vector<8x8xf32>
    %226 = tpu.matmul %223, %224, %cst_79 {dimension_numbers = #tpu.dot_dimension_numbers<[1], [1], [0], [0], [0, 0, 1, 0], [], []>} : vector<8x8xf32>, vector<8x8xf32>, vector<8x8xf32> -> vector<8x8xf32>
    %cst_80 = arith.constant dense<0xFF800000> : vector<8xf32>
    %227 = vector.multi_reduction <maximumf>, %226, %cst_80 [1] : vector<8x8xf32> to vector<8xf32>
    %228 = vector.shape_cast %227 : vector<8xf32> to vector<8x1xf32>
    %229 = vector.broadcast %228 : vector<8x1xf32> to vector<8x8xf32>
    %230 = arith.subf %226, %229 : vector<8x8xf32>
    %231 = math.exp %230 : vector<8x8xf32>
    %cst_81 = arith.constant dense<0.000000e+00> : vector<8xf32>
    %232 = vector.multi_reduction <add>, %231, %cst_81 [1] : vector<8x8xf32> to vector<8xf32>
    %233 = vector.shape_cast %232 : vector<8xf32> to vector<8x1xf32>
    %234 = vector.broadcast %233 : vector<8x1xf32> to vector<8x8xf32>
    %235 = arith.divf %231, %234 : vector<8x8xf32>
    %cst_82 = arith.constant dense<0.000000e+00> : vector<8x8xf32>
    %236 = tpu.matmul %235, %225, %cst_82 {dimension_numbers = #tpu.dot_dimension_numbers<[1], [0], [0], [1], [0, 0, 1, 1], [], []>} : vector<8x8xf32>, vector<8x8xf32>, vector<8x8xf32> -> vector<8x8xf32>
    %237 = vector.extract_strided_slice %192 {offsets = [0, 24], sizes = [8, 8], strides = [1, 1]} : vector<8x32xf32> to vector<8x8xf32>
    %238 = vector.extract_strided_slice %193 {offsets = [0, 24], sizes = [8, 8], strides = [1, 1]} : vector<8x32xf32> to vector<8x8xf32>
    %239 = vector.extract_strided_slice %194 {offsets = [0, 24], sizes = [8, 8], strides = [1, 1]} : vector<8x32xf32> to vector<8x8xf32>
    %cst_83 = arith.constant dense<0.000000e+00> : vector<8x8xf32>
    %240 = tpu.matmul %237, %238, %cst_83 {dimension_numbers = #tpu.dot_dimension_numbers<[1], [1], [0], [0], [0, 0, 1, 0], [], []>} : vector<8x8xf32>, vector<8x8xf32>, vector<8x8xf32> -> vector<8x8xf32>
    %cst_84 = arith.constant dense<0xFF800000> : vector<8xf32>
    %241 = vector.multi_reduction <maximumf>, %240, %cst_84 [1] : vector<8x8xf32> to vector<8xf32>
    %242 = vector.shape_cast %241 : vector<8xf32> to vector<8x1xf32>
    %243 = vector.broadcast %242 : vector<8x1xf32> to vector<8x8xf32>
    %244 = arith.subf %240, %243 : vector<8x8xf32>
    %245 = math.exp %244 : vector<8x8xf32>
    %cst_85 = arith.constant dense<0.000000e+00> : vector<8xf32>
    %246 = vector.multi_reduction <add>, %245, %cst_85 [1] : vector<8x8xf32> to vector<8xf32>
    %247 = vector.shape_cast %246 : vector<8xf32> to vector<8x1xf32>
    %248 = vector.broadcast %247 : vector<8x1xf32> to vector<8x8xf32>
    %249 = arith.divf %245, %248 : vector<8x8xf32>
    %cst_86 = arith.constant dense<0.000000e+00> : vector<8x8xf32>
    %250 = tpu.matmul %249, %239, %cst_86 {dimension_numbers = #tpu.dot_dimension_numbers<[1], [0], [0], [1], [0, 0, 1, 1], [], []>} : vector<8x8xf32>, vector<8x8xf32>, vector<8x8xf32> -> vector<8x8xf32>
    %251 = tpu.concatenate %207, %221, %235, %249 in 1 : vector<8x8xf32>, vector<8x8xf32>, vector<8x8xf32>, vector<8x8xf32> -> vector<8x32xf32>
    %252 = tpu.concatenate %208, %222, %236, %250 in 1 : vector<8x8xf32>, vector<8x8xf32>, vector<8x8xf32>, vector<8x8xf32> -> vector<8x32xf32>
    %cst_87 = arith.constant dense<0.000000e+00> : vector<8x32xf32>
    %253 = tpu.matmul %252, %179, %cst_87 {dimension_numbers = #tpu.dot_dimension_numbers<[1], [0], [0], [1], [0, 0, 1, 1], [], []>} : vector<8x32xf32>, vector<32x32xf32>, vector<8x32xf32> -> vector<8x32xf32>
    %254 = vector.broadcast %180 : vector<1x32xf32> to vector<8x32xf32>
    %255 = arith.addf %253, %254 : vector<8x32xf32>
    %256 = arith.addf %176, %255 : vector<8x32xf32>
    %cst_88 = arith.constant dense<0.000000e+00> : vector<8xf32>
    %257 = vector.multi_reduction <add>, %256, %cst_88 [1] : vector<8x32xf32> to vector<8xf32>
    %258 = vector.shape_cast %257 : vector<8xf32> to vector<8x1xf32>
    %cst_89 = arith.constant 3.200000e+01 : f32
    %259 = vector.broadcast %cst_89 : f32 to vector<8x1xf32>
    %260 = arith.divf %258, %259 : vector<8x1xf32>
    %261 = vector.broadcast %260 : vector<8x1xf32> to vector<8x32xf32>
    %262 = arith.subf %256, %261 : vector<8x32xf32>
    %263 = arith.mulf %262, %262 : vector<8x32xf32>
    %cst_90 = arith.constant dense<0.000000e+00> : vector<8xf32>
    %264 = vector.multi_reduction <add>, %263, %cst_90 [1] : vector<8x32xf32> to vector<8xf32>
    %265 = vector.shape_cast %264 : vector<8xf32> to vector<8x1xf32>
    %cst_91 = arith.constant 3.200000e+01 : f32
    %266 = vector.broadcast %cst_91 : f32 to vector<8x1xf32>
    %267 = arith.divf %265, %266 : vector<8x1xf32>
    %268 = vector.broadcast %260 : vector<8x1xf32> to vector<8x32xf32>
    %269 = arith.subf %256, %268 : vector<8x32xf32>
    %cst_92 = arith.constant 9.99999974E-6 : f32
    %270 = vector.broadcast %cst_92 : f32 to vector<8x1xf32>
    %271 = arith.addf %267, %270 : vector<8x1xf32>
    %272 = math.rsqrt %271 : vector<8x1xf32>
    %273 = vector.broadcast %272 : vector<8x1xf32> to vector<8x32xf32>
    %274 = arith.mulf %269, %273 : vector<8x32xf32>
    %275 = vector.broadcast %185 : vector<1x32xf32> to vector<8x32xf32>
    %276 = arith.mulf %274, %275 : vector<8x32xf32>
    %277 = vector.broadcast %186 : vector<1x32xf32> to vector<8x32xf32>
    %278 = arith.addf %276, %277 : vector<8x32xf32>
    %cst_93 = arith.constant dense<0.000000e+00> : vector<8x128xf32>
    %279 = tpu.matmul %278, %181, %cst_93 {dimension_numbers = #tpu.dot_dimension_numbers<[1], [0], [0], [1], [0, 0, 1, 1], [], []>} : vector<8x32xf32>, vector<32x128xf32>, vector<8x128xf32> -> vector<8x128xf32>
    %280 = vector.broadcast %182 : vector<1x128xf32> to vector<8x128xf32>
    %281 = arith.addf %279, %280 : vector<8x128xf32>
    %cst_94 = arith.constant 0.000000e+00 : f32
    %282 = vector.broadcast %cst_94 : f32 to vector<8x128xf32>
    %283 = arith.maximumf %281, %282 : vector<8x128xf32>
    %cst_95 = arith.constant dense<0.000000e+00> : vector<8x32xf32>
    %284 = tpu.matmul %283, %183, %cst_95 {dimension_numbers = #tpu.dot_dimension_numbers<[1], [0], [0], [1], [0, 0, 1, 1], [], []>} : vector<8x128xf32>, vector<128x32xf32>, vector<8x32xf32> -> vector<8x32xf32>
    %285 = vector.broadcast %184 : vector<1x32xf32> to vector<8x32xf32>
    %286 = arith.addf %284, %285 : vector<8x32xf32>
    %287 = arith.addf %278, %286 : vector<8x32xf32>
    %cst_96 = arith.constant dense<0.000000e+00> : vector<8xf32>
    %288 = vector.multi_reduction <add>, %287, %cst_96 [1] : vector<8x32xf32> to vector<8xf32>
    %289 = vector.shape_cast %288 : vector<8xf32> to vector<8x1xf32>
    %cst_97 = arith.constant 3.200000e+01 : f32
    %290 = vector.broadcast %cst_97 : f32 to vector<8x1xf32>
    %291 = arith.divf %289, %290 : vector<8x1xf32>
    %292 = vector.broadcast %291 : vector<8x1xf32> to vector<8x32xf32>
    %293 = arith.subf %287, %292 : vector<8x32xf32>
    %294 = arith.mulf %293, %293 : vector<8x32xf32>
    %cst_98 = arith.constant dense<0.000000e+00> : vector<8xf32>
    %295 = vector.multi_reduction <add>, %294, %cst_98 [1] : vector<8x32xf32> to vector<8xf32>
    %296 = vector.shape_cast %295 : vector<8xf32> to vector<8x1xf32>
    %cst_99 = arith.constant 3.200000e+01 : f32
    %297 = vector.broadcast %cst_99 : f32 to vector<8x1xf32>
    %298 = arith.divf %296, %297 : vector<8x1xf32>
    %299 = vector.broadcast %291 : vector<8x1xf32> to vector<8x32xf32>
    %300 = arith.subf %287, %299 : vector<8x32xf32>
    %cst_100 = arith.constant 9.99999974E-6 : f32
    %301 = vector.broadcast %cst_100 : f32 to vector<8x1xf32>
    %302 = arith.addf %298, %301 : vector<8x1xf32>
    %303 = math.rsqrt %302 : vector<8x1xf32>
    %304 = vector.broadcast %303 : vector<8x1xf32> to vector<8x32xf32>
    %305 = arith.mulf %300, %304 : vector<8x32xf32>
    %306 = vector.broadcast %187 : vector<1x32xf32> to vector<8x32xf32>
    %307 = arith.mulf %305, %306 : vector<8x32xf32>
    %308 = vector.broadcast %188 : vector<1x32xf32> to vector<8x32xf32>
    %309 = arith.addf %307, %308 : vector<8x32xf32>
    %c0_101 = arith.constant 0 : index
    %c0_102 = arith.constant 0 : index
    %c0_103 = arith.constant 0 : index
    %310 = vector.load %arg6[%c0_101, %c0_102, %c0_103] : memref<1x8x32xf32, #tpu.memory_space<vmem>>, vector<1x8x32xf32>
    %311 = vector.shape_cast %310 : vector<1x8x32xf32> to vector<8x32xf32>
    %312 = vector.shape_cast %251 : vector<8x32xf32> to vector<1x8x32xf32>
    tpu.vector_store %arg6[%c0_101, %c0_102, %c0_103], %312 {strides = array<i32>} : memref<1x8x32xf32, #tpu.memory_space<vmem>>, vector<1x8x32xf32>,
    %c19 = arith.constant 19 : index
    %c0_104 = arith.constant 0 : index
    %313 = vector.load %arg3[%c19, %c0_104] : memref<24x128xf32, #tpu.memory_space<vmem>>, vector<1x32xf32>
    %c20 = arith.constant 20 : index
    %c0_105 = arith.constant 0 : index
    %314 = vector.load %arg3[%c20, %c0_105] : memref<24x128xf32, #tpu.memory_space<vmem>>, vector<1x32xf32>
    %cst_106 = arith.constant dense<0.000000e+00> : vector<8xf32>
    %315 = vector.multi_reduction <add>, %309, %cst_106 [1] : vector<8x32xf32> to vector<8xf32>
    %316 = vector.shape_cast %315 : vector<8xf32> to vector<8x1xf32>
    %cst_107 = arith.constant 3.200000e+01 : f32
    %317 = vector.broadcast %cst_107 : f32 to vector<8x1xf32>
    %318 = arith.divf %316, %317 : vector<8x1xf32>
    %319 = vector.broadcast %318 : vector<8x1xf32> to vector<8x32xf32>
    %320 = arith.subf %309, %319 : vector<8x32xf32>
    %321 = arith.mulf %320, %320 : vector<8x32xf32>
    %cst_108 = arith.constant dense<0.000000e+00> : vector<8xf32>
    %322 = vector.multi_reduction <add>, %321, %cst_108 [1] : vector<8x32xf32> to vector<8xf32>
    %323 = vector.shape_cast %322 : vector<8xf32> to vector<8x1xf32>
    %cst_109 = arith.constant 3.200000e+01 : f32
    %324 = vector.broadcast %cst_109 : f32 to vector<8x1xf32>
    %325 = arith.divf %323, %324 : vector<8x1xf32>
    %326 = vector.broadcast %318 : vector<8x1xf32> to vector<8x32xf32>
    %327 = arith.subf %309, %326 : vector<8x32xf32>
    %cst_110 = arith.constant 9.99999974E-6 : f32
    %328 = vector.broadcast %cst_110 : f32 to vector<8x1xf32>
    %329 = arith.addf %325, %328 : vector<8x1xf32>
    %330 = math.rsqrt %329 : vector<8x1xf32>
    %331 = vector.broadcast %330 : vector<8x1xf32> to vector<8x32xf32>
    %332 = arith.mulf %327, %331 : vector<8x32xf32>
    %333 = vector.broadcast %313 : vector<1x32xf32> to vector<8x32xf32>
    %334 = arith.mulf %332, %333 : vector<8x32xf32>
    %335 = vector.broadcast %314 : vector<1x32xf32> to vector<8x32xf32>
    %336 = arith.addf %334, %335 : vector<8x32xf32>
    %c0_111 = arith.constant 0 : index
    %c0_112 = arith.constant 0 : index
    %c0_113 = arith.constant 0 : index
    %337 = vector.load %arg4[%c0_111, %c0_112, %c0_113] : memref<1x8x32xf32, #tpu.memory_space<vmem>>, vector<1x8x32xf32>
    %338 = vector.shape_cast %337 : vector<1x8x32xf32> to vector<8x32xf32>
    %339 = vector.shape_cast %336 : vector<8x32xf32> to vector<1x8x32xf32>
    tpu.vector_store %arg4[%c0_111, %c0_112, %c0_113], %339 {strides = array<i32>} : memref<1x8x32xf32, #tpu.memory_space<vmem>>, vector<1x8x32xf32>,
    return
  }
  func.func @transform_0(%arg0: i32) -> (i32, i32, i32) {
    %c0_i32 = arith.constant 0 : i32
    %c0_i32_0 = arith.constant 0 : i32
    %c0_i32_1 = arith.constant 0 : i32
    return %arg0, %c0_i32, %c0_i32_0 : i32, i32, i32
  }
  func.func @transform_1(%arg0: i32) -> (i32, i32) {
    %c0_i32 = arith.constant 0 : i32
    %c0_i32_0 = arith.constant 0 : i32
    %c0_i32_1 = arith.constant 0 : i32
    return %c0_i32, %c0_i32_0 : i32, i32
  }
  func.func @transform_2(%arg0: i32) -> (i32, i32) {
    %c0_i32 = arith.constant 0 : i32
    %c0_i32_0 = arith.constant 0 : i32
    %c0_i32_1 = arith.constant 0 : i32
    return %c0_i32, %c0_i32_0 : i32, i32
  }
  func.func @transform_3(%arg0: i32) -> (i32, i32, i32) {
    %c0_i32 = arith.constant 0 : i32
    %c0_i32_0 = arith.constant 0 : i32
    %c0_i32_1 = arith.constant 0 : i32
    return %arg0, %c0_i32, %c0_i32_0 : i32, i32, i32
  }
  func.func @transform_4(%arg0: i32) -> (i32, i32, i32) {
    %c0_i32 = arith.constant 0 : i32
    %c0_i32_0 = arith.constant 0 : i32
    %c0_i32_1 = arith.constant 0 : i32
    return %arg0, %c0_i32, %c0_i32_0 : i32, i32, i32
  }
  func.func @transform_5(%arg0: i32) -> (i32, i32, i32) {
    %c0_i32 = arith.constant 0 : i32
    %c0_i32_0 = arith.constant 0 : i32
    %c0_i32_1 = arith.constant 0 : i32
    return %arg0, %c0_i32, %c0_i32_0 : i32, i32, i32
  }
}

</mosaic_0001>

<llo_original>
// kernel: tpu_custom_call.1
$region0: #{tpu_custom_call.1}
  #allocation0 [shape = 'u32[]', space=smem, size = 0x4, offset = 0x4, fixed_abs, tag = 'smem constant byte address 0x4 - core index']
  #allocation1 [shape = 'u32[144,128]{1,0:T(1,128)}', space=vmem, size = 0x12000, scoped, tag = 'internal scratch']
  %s0 = inlined_call_operand.hbm [shape: f32[2,16,32], index: 0, kind: input, shape index: {}]
  %s1 = inlined_call_operand.hbm [shape: f32[544,128], index: 1, kind: input, shape index: {}]
  %s2 = inlined_call_operand.hbm [shape: f32[24,128], index: 2, kind: input, shape index: {}]
  %s3 = inlined_call_operand.hbm [shape: f32[2,8,32], index: 3, kind: output, shape index: {0}]
  %s4 = inlined_call_operand.hbm [shape: f32[2,16,64], index: 4, kind: output, shape index: {1}]
  %s5 = inlined_call_operand.hbm [shape: f32[2,8,32], index: 5, kind: output, shape index: {2}]
  %6 = xla_tuple %s3, %s4, %s5
  %s7 = sld [smem:[#allocation0]]
  $region73: #{tpu_custom_call.1} parent=0
    _
  %s9 = ssub.s32 1, %s7
  %s10 = scalar_select 0, %s9, %s7
  $region1: #{tpu_custom_call.1} parent=0
    #allocation2 [shape = 'u8[16384]{0}', space=vmem, size = 0x4000, scoped, tag = 'input window, operand 0']
    #allocation3 [shape = 's32[2]{0}', space=sflag, size = 0x8, scoped, tag = 'scoped memory for tpu_custom_call.1']
    #allocation4 [shape = 's32[2]{0}', space=sflag, size = 0x8, scoped, tag = 'scoped memory for tpu_custom_call.1']
    #allocation5 [shape = 'u8[278528]{0}', space=vmem, size = 0x44000, scoped, tag = 'input window, operand 1, single buffered']
    #allocation6 [shape = 's32[1]{0}', space=sflag, size = 0x4, scoped, tag = 'scoped memory for tpu_custom_call.1']
    #allocation7 [shape = 'u8[12288]{0}', space=vmem, size = 0x3000, scoped, tag = 'input window, operand 2, single buffered']
    #allocation8 [shape = 'u8[8192]{0}', space=vmem, size = 0x2000, scoped, tag = 'output window, operand 0']
    #allocation9 [shape = 'u8[16384]{0}', space=vmem, size = 0x4000, scoped, tag = 'output window, operand 1']
    #allocation10 [shape = 's32[2]{0}', space=sflag, size = 0x8, scoped, tag = 'scoped memory for tpu_custom_call.1']
    #allocation11 [shape = 'u8[8192]{0}', space=vmem, size = 0x2000, scoped, tag = 'output window, operand 2']
    %11 = vsyncpa [#allocation3], 0
    %s12 = scalar_lea.sflag [#allocation3], 1
    %13 = vsyncpa %s12, 0
    %14 = vsyncpa [#allocation6], 0
    %15 = vsyncpa [#allocation4], 0
    %s16 = scalar_lea.sflag [#allocation4], 1
    %17 = vsyncpa %s16, 0
    %18 = vsyncpa [#allocation10], 0
    %s19 = scalar_lea.sflag [#allocation10], 1
    %20 = vsyncpa %s19, 0
    loop: start=0, step=1, limit=4
    $region2: #{tpu_custom_call.1} parent=1 // loop_pre_header
      _
    $region3: #{tpu_custom_call.1} parent=1 // loop_header
      %s22 = sphi 0, %s26
      %p23 = scmp.ge.s32.totalorder %s22, 4
      %s32 = sphi 0, %s34
      %s35 = sphi 0, %s32
      %s36 = sphi 0, %s35
      %s52 = sphi 0, %s36
      %s56 = sphi 0, %s56
      %s58 = sphi 0, %s56
      %s59 = sphi 0, %s58
      %s73 = sphi 0, %s59
      %s77 = sphi 0, %s77
      %s79 = sphi 0, %s77
      %s80 = sphi 0, %s79
      %s94 = sphi 0, %s80
      %s100 = sphi 0, %s102
      %s103 = sphi 0, %s100
      %s104 = sphi 0, %s103
      %s120 = sphi 0, %s104
      %s126 = sphi 0, %s128
      %s129 = sphi 0, %s126
      %s130 = sphi 0, %s129
      %s146 = sphi 0, %s130
      %s152 = sphi 0, %s154
      %s155 = sphi 0, %s152
      %s156 = sphi 0, %s155
      %s172 = sphi 0, %s156
    $region4: #{tpu_custom_call.1} parent=1 // loop_header_branch
      %25 = sbr.rel (%p23) target = $region8
    $region5: #{tpu_custom_call.1} parent=1 // loop_body
      %s27 = ssub.s32 %s22, 1
      %s28 = ssub.s32 %s22, 2
      %s29 = sadd.s32 %s22, 1
      %s30 = ssub.s32 %s22, %s29
      %p31 = scmp.eq.s32.totalorder %s30, 0
      %s33 = sadd.s32 %s32, 1
      %s34 = scalar_select %p31, %s32, %s33
      %p37 = pneg %p31
      %p38 = scmp.eq.s32.totalorder %s22, 1
      %p39 = por %p37, %p38
      %p40 = scmp.ne.s32.totalorder %s32, %s35
      %p41 = scmp.eq.s32.totalorder %s22, 0
      %p42 = por %p40, %p41
      %p43 = scmp.ne.s32.totalorder %s32, %s35
      %p44 = scmp.eq.s32.totalorder %s27, 1
      %p45 = por %p43, %p44
      %p46 = scmp.ne.s32.totalorder %s35, %s36
      %p47 = scmp.eq.s32.totalorder %s27, 0
      %p48 = por %p46, %p47
      %p49 = scmp.ne.s32.totalorder %s35, %s36
      %p50 = scmp.eq.s32.totalorder %s28, 1
      %p51 = por %p49, %p50
      %p53 = scmp.ne.s32.totalorder %s36, %s52
      %p54 = scmp.eq.s32.totalorder %s28, 0
      %p55 = por %p53, %p54
      %s57 = sadd.s32 %s56, 1
      %p60 = scmp.eq.s32.totalorder %s22, 1
      %p61 = scmp.ne.s32.totalorder %s56, %s58
      %p62 = scmp.eq.s32.totalorder %s22, 0
      %p63 = por %p61, %p62
      %p64 = scmp.ne.s32.totalorder %s56, %s58
      %p65 = scmp.eq.s32.totalorder %s27, 1
      %p66 = por %p64, %p65
      %p67 = scmp.ne.s32.totalorder %s58, %s59
      %p68 = scmp.eq.s32.totalorder %s27, 0
      %p69 = por %p67, %p68
      %p70 = scmp.ne.s32.totalorder %s58, %s59
      %p71 = scmp.eq.s32.totalorder %s28, 1
      %p72 = por %p70, %p71
      %p74 = scmp.ne.s32.totalorder %s59, %s73
      %p75 = scmp.eq.s32.totalorder %s28, 0
      %p76 = por %p74, %p75
      %s78 = sadd.s32 %s77, 1
      %p81 = scmp.eq.s32.totalorder %s22, 1
      %p82 = scmp.ne.s32.totalorder %s77, %s79
      %p83 = scmp.eq.s32.totalorder %s22, 0
      %p84 = por %p82, %p83
      %p85 = scmp.ne.s32.totalorder %s77, %s79
      %p86 = scmp.eq.s32.totalorder %s27, 1
      %p87 = por %p85, %p86
      %p88 = scmp.ne.s32.totalorder %s79, %s80
      %p89 = scmp.eq.s32.totalorder %s27, 0
      %p90 = por %p88, %p89
      %p91 = scmp.ne.s32.totalorder %s79, %s80
      %p92 = scmp.eq.s32.totalorder %s28, 1
      %p93 = por %p91, %p92
      %p95 = scmp.ne.s32.totalorder %s80, %s94
      %p96 = scmp.eq.s32.totalorder %s28, 0
      %p97 = por %p95, %p96
      %s98 = ssub.s32 %s22, %s29
      %p99 = scmp.eq.s32.totalorder %s98, 0
      %s101 = sadd.s32 %s100, 1
      %s102 = scalar_select %p99, %s100, %s101
      %p105 = pneg %p99
      %p106 = scmp.eq.s32.totalorder %s22, 1
      %p107 = por %p105, %p106
      %p108 = scmp.ne.s32.totalorder %s100, %s103
      %p109 = scmp.eq.s32.totalorder %s22, 0
      %p110 = por %p108, %p109
      %p111 = scmp.ne.s32.totalorder %s100, %s103
      %p112 = scmp.eq.s32.totalorder %s27, 1
      %p113 = por %p111, %p112
      %p114 = scmp.ne.s32.totalorder %s103, %s104
      %p115 = scmp.eq.s32.totalorder %s27, 0
      %p116 = por %p114, %p115
      %p117 = scmp.ne.s32.totalorder %s103, %s104
      %p118 = scmp.eq.s32.totalorder %s28, 1
      %p119 = por %p117, %p118
      %p121 = scmp.ne.s32.totalorder %s104, %s120
      %p122 = scmp.eq.s32.totalorder %s28, 0
      %p123 = por %p121, %p122
      %s124 = ssub.s32 %s22, %s29
      %p125 = scmp.eq.s32.totalorder %s124, 0
      %s127 = sadd.s32 %s126, 1
      %s128 = scalar_select %p125, %s126, %s127
      %p131 = pneg %p125
      %p132 = scmp.eq.s32.totalorder %s22, 1
      %p133 = por %p131, %p132
      %p134 = scmp.ne.s32.totalorder %s126, %s129
      %p135 = scmp.eq.s32.totalorder %s22, 0
      %p136 = por %p134, %p135
      %p137 = scmp.ne.s32.totalorder %s126, %s129
      %p138 = scmp.eq.s32.totalorder %s27, 1
      %p139 = por %p137, %p138
      %p140 = scmp.ne.s32.totalorder %s129, %s130
      %p141 = scmp.eq.s32.totalorder %s27, 0
      %p142 = por %p140, %p141
      %p143 = scmp.ne.s32.totalorder %s129, %s130
      %p144 = scmp.eq.s32.totalorder %s28, 1
      %p145 = por %p143, %p144
      %p147 = scmp.ne.s32.totalorder %s130, %s146
      %p148 = scmp.eq.s32.totalorder %s28, 0
      %p149 = por %p147, %p148
      %s150 = ssub.s32 %s22, %s29
      %p151 = scmp.eq.s32.totalorder %s150, 0
      %s153 = sadd.s32 %s152, 1
      %s154 = scalar_select %p151, %s152, %s153
      %p157 = pneg %p151
      %p158 = scmp.eq.s32.totalorder %s22, 1
      %p159 = por %p157, %p158
      %p160 = scmp.ne.s32.totalorder %s152, %s155
      %p161 = scmp.eq.s32.totalorder %s22, 0
      %p162 = por %p160, %p161
      %p163 = scmp.ne.s32.totalorder %s152, %s155
      %p164 = scmp.eq.s32.totalorder %s27, 1
      %p165 = por %p163, %p164
      %p166 = scmp.ne.s32.totalorder %s155, %s156
      %p167 = scmp.eq.s32.totalorder %s27, 0
      %p168 = por %p166, %p167
      %p169 = scmp.ne.s32.totalorder %s155, %s156
      %p170 = scmp.eq.s32.totalorder %s28, 1
      %p171 = por %p169, %p170
      %p173 = scmp.ne.s32.totalorder %s156, %s172
      %p174 = scmp.eq.s32.totalorder %s28, 0
      %p175 = por %p173, %p174
      %p176 = scmp.le.s32.totalorder 1, %s22
      %p177 = scmp.lt.s32.totalorder %s22, 3
      %p178 = pnand %p176, %p177
      %p179 = pneg %p178
      // Predicated region
      $region9: #{tpu_custom_call.1} parent=5 // pred_check
        _
      $region10: #{tpu_custom_call.1} parent=5 // pred_check_branch
        %181 = sbr.rel (%p178) target = $region12
      $region11: #{tpu_custom_call.1} parent=5 // pred_region
        %s182 = ssub.s32 %s22, 1
        // Predicated region
        $region13: #{tpu_custom_call.1} parent=11 // pred_check
          %p183 = pneg %p69
        $region14: #{tpu_custom_call.1} parent=11 // pred_check_branch
          %185 = sbr.rel (%p183) target = $region16
        $region15: #{tpu_custom_call.1} parent=11 // pred_region
          %s187 = ssub.s32 8704, 8704
          %188 = vsyncadd [#allocation6], %s187
          %s189 = sshll.u32 [#allocation5], 4
          %s190 = int_to_ptr.vmem [resolvable:$true] %s189
          %195 = dma.hbm_to_vmem [thread:$0]  %s1, 8704, %s190, [#allocation6], 128, 128, 8
        $region16: #{tpu_custom_call.1} parent=11 // pred_fallthru
          _
        // Predicated region
        $region17: #{tpu_custom_call.1} parent=11 // pred_check
          %p196 = pneg %p90
        $region18: #{tpu_custom_call.1} parent=11 // pred_check_branch
          %198 = sbr.rel (%p196) target = $region20
        $region19: #{tpu_custom_call.1} parent=11 // pred_region
          %s200 = ssub.s32 384, 384
          %201 = vsyncadd [#allocation6], %s200
          %s202 = sshll.u32 [#allocation7], 4
          %s203 = int_to_ptr.vmem [resolvable:$true] %s202
          %208 = dma.hbm_to_vmem [thread:$0]  %s2, 384, %s203, [#allocation6], 128, 128, 8
        $region20: #{tpu_custom_call.1} parent=11 // pred_fallthru
          _
      $region12: #{tpu_custom_call.1} parent=5 // pred_fallthru
        _
      %p209 = scmp.lt.s32.totalorder %s22, 2
      // Predicated region
      $region21: #{tpu_custom_call.1} parent=5 // pred_check
        %p210 = pneg %p209
      $region22: #{tpu_custom_call.1} parent=5 // pred_check_branch
        %212 = sbr.rel (%p210) target = $region24
      $region23: #{tpu_custom_call.1} parent=5 // pred_region
        // Predicated region
        $region25: #{tpu_custom_call.1} parent=23 // pred_check
          %p213 = pneg %p42
        $region26: #{tpu_custom_call.1} parent=23 // pred_check_branch
          %215 = sbr.rel (%p213) target = $region28
        $region27: #{tpu_custom_call.1} parent=23 // pred_region
          %s216 = sand.u32 %s32, 1
          %s217 = scalar_lea.sflag [#allocation3], %s216
          %s218 = sand.u32 %s32, 1
          %s219 = smul.addr %s218, 16
          %s220 = scalar_lea.vmem [#allocation2], %s219
          %s222 = ssub.s32 256, 256
          %223 = vsyncadd %s217, %s222
          %s224 = smul.addr %s22, 2
          %s225 = smul.addr %s224, 128
          %s226 = scalar_lea.hbm %s0, %s225
          %s227 = sshll.u32 %s220, 4
          %s228 = int_to_ptr.vmem [resolvable:$true] %s227
          %233 = dma.hbm_to_vmem [thread:$0]  %s226, 256, %s228, %s217, 128, 128, 8
        $region28: #{tpu_custom_call.1} parent=23 // pred_fallthru
          _
      $region24: #{tpu_custom_call.1} parent=5 // pred_fallthru
        _
      %p234 = scmp.le.s32.totalorder 1, %s22
      %p235 = scmp.lt.s32.totalorder %s22, 3
      %p236 = pnand %p234, %p235
      %p237 = pneg %p236
      // Predicated region
      $region29: #{tpu_custom_call.1} parent=5 // pred_check
        _
      $region30: #{tpu_custom_call.1} parent=5 // pred_check_branch
        %239 = sbr.rel (%p236) target = $region32
      $region31: #{tpu_custom_call.1} parent=5 // pred_region
        %s240 = ssub.s32 %s22, 1
        %s241 = sand.u32 %s35, 1
        %s242 = scalar_lea.sflag [#allocation3], %s241
        %s243 = sand.u32 %s35, 1
        %s244 = smul.addr %s243, 16
        %s245 = scalar_lea.vmem [#allocation2], %s244
        // Predicated region
        $region33: #{tpu_custom_call.1} parent=31 // pred_check
          %p246 = pneg %p48
        $region34: #{tpu_custom_call.1} parent=31 // pred_check_branch
          %248 = sbr.rel (%p246) target = $region36
        $region35: #{tpu_custom_call.1} parent=31 // pred_region
          %249 = dma.done %s242, 256
        $region36: #{tpu_custom_call.1} parent=31 // pred_fallthru
          _
        // Predicated region
        $region37: #{tpu_custom_call.1} parent=31 // pred_check
          %p250 = pneg %p69
        $region38: #{tpu_custom_call.1} parent=31 // pred_check_branch
          %252 = sbr.rel (%p250) target = $region40
        $region39: #{tpu_custom_call.1} parent=31 // pred_region
          %253 = dma.done [#allocation6], 8704
        $region40: #{tpu_custom_call.1} parent=31 // pred_fallthru
          _
        // Predicated region
        $region41: #{tpu_custom_call.1} parent=31 // pred_check
          %p254 = pneg %p90
        $region42: #{tpu_custom_call.1} parent=31 // pred_check_branch
          %256 = sbr.rel (%p254) target = $region44
        $region43: #{tpu_custom_call.1} parent=31 // pred_region
          %257 = dma.done [#allocation6], 384
        $region44: #{tpu_custom_call.1} parent=31 // pred_fallthru
          _
        %s258 = sand.u32 %s35, 1
        %s259 = scalar_lea.sflag [#allocation3], %s258
        %s260 = sand.u32 %s35, 1
        %s261 = smul.addr %s260, 16
        %s262 = scalar_lea.vmem [#allocation2], %s261
        %p263 = pneg %p48
        %p264 = pneg %p45
        %p265 = pneg %p69
        %p266 = pneg %p66
        %p267 = pneg %p90
        %p268 = pneg %p87
        %p269 = pneg %p116
        %p270 = pneg %p113
        %s271 = sand.u32 %s103, 1
        %s272 = scalar_lea.sflag [#allocation4], %s271
        %s273 = sand.u32 %s103, 1
        %s274 = smul.addr %s273, 8
        %s275 = scalar_lea.vmem [#allocation8], %s274
        %p276 = pneg %p142
        %p277 = pneg %p139
        %s278 = sand.u32 %s27, 1
        %s279 = scalar_lea.sflag [#allocation10], %s278
        %s280 = sand.u32 %s129, 1
        %s281 = smul.addr %s280, 16
        %s282 = scalar_lea.vmem [#allocation9], %s281
        %p283 = pneg %p168
        %p284 = pneg %p165
        %s285 = sand.u32 %s27, 1
        %s286 = scalar_lea.sflag [#allocation10], %s285
        %s287 = sand.u32 %s155, 1
        %s288 = smul.addr %s287, 8
        %s289 = scalar_lea.vmem [#allocation11], %s288
        %v290 = vld [vmem:[%s245] sm:$0xff]
        %v291 = vld [vmem:[%s245 + $0x8] sm:$0xff]
        %v292 = vld [vmem:[#allocation5] sm:$0xff]
        %v293 = vld [vmem:[#allocation5 + $0x8] sm:$0xff]
        %v294 = vld [vmem:[#allocation5 + $0x10] sm:$0xff]
        %v295 = vld [vmem:[#allocation5 + $0x18] sm:$0xff]
        %v296 = vld [vmem:[#allocation7] sm:$0x1]
        %v297 = vld [vmem:[#allocation5 + $0x20] sm:$0xff]
        %v298 = vld [vmem:[#allocation5 + $0x28] sm:$0xff]
        %v299 = vld [vmem:[#allocation5 + $0x30] sm:$0xff]
        %v300 = vld [vmem:[#allocation5 + $0x38] sm:$0xff]
        %v301 = vld [vmem:[#allocation7 + $0x1] sm:$0x1]
        %v302 = vld [vmem:[#allocation5 + $0x40] sm:$0xff]
        %v303 = vld [vmem:[#allocation5 + $0x48] sm:$0xff]
        %v304 = vld [vmem:[#allocation5 + $0x50] sm:$0xff]
        %v305 = vld [vmem:[#allocation5 + $0x58] sm:$0xff]
        %v306 = vld [vmem:[#allocation7 + $0x2] sm:$0x1]
        %v307 = vld [vmem:[#allocation5 + $0x60] sm:$0xff]
        %v308 = vld [vmem:[#allocation5 + $0x68] sm:$0xff]
        %v309 = vld [vmem:[#allocation5 + $0x70] sm:$0xff]
        %v310 = vld [vmem:[#allocation5 + $0x78] sm:$0xff]
        %v311 = vld [vmem:[#allocation5 + $0x80] sm:$0xff]
        %v312 = vld [vmem:[#allocation5 + $0x88] sm:$0xff]
        %v313 = vld [vmem:[#allocation5 + $0x90] sm:$0xff]
        %v314 = vld [vmem:[#allocation5 + $0x98] sm:$0xff]
        %v315 = vld [vmem:[#allocation5 + $0xa0] sm:$0xff]
        %v316 = vld [vmem:[#allocation5 + $0xa8] sm:$0xff]
        %v317 = vld [vmem:[#allocation5 + $0xb0] sm:$0xff]
        %v318 = vld [vmem:[#allocation5 + $0xb8] sm:$0xff]
        %v319 = vld [vmem:[#allocation5 + $0xc0] sm:$0xff]
        %v320 = vld [vmem:[#allocation5 + $0xc8] sm:$0xff]
        %v321 = vld [vmem:[#allocation5 + $0xd0] sm:$0xff]
        %v322 = vld [vmem:[#allocation5 + $0xd8] sm:$0xff]
        %v323 = vld [vmem:[#allocation7 + $0x3] sm:$0x1]
        %v324 = vld [vmem:[#allocation7 + $0x4] sm:$0x1]
        %v325 = vld [vmem:[#allocation7 + $0x5] sm:$0x1]
        %v326 = vld [vmem:[#allocation7 + $0x6] sm:$0x1]
        %v327 = vld [vmem:[#allocation7 + $0x7] sm:$0x1]
        %v328 = vlaneseq
        %v329 = vshrl.u32 %v328, 7
        %v330 = vsub.s32 0, %v329
        %v331 = vrot.slane %v296, %v330
        %vm332 = vcmask 261120
        %v334 = vsel %vm332, %v290, 0
        %v337 = vsel %vm332, %v291, 0
        %339 = vmatprep.subr.mxu0 0.0
        %340 = vmatpush1.msra.mxu0 0.0
        %341 = vmatprep.subr.mxu0 0.0
        %342 = vmatpush1.msra.mxu0 0.0
        %343 = vmatprep.subr.mxu0 0.0
        %344 = vmatpush1.msra.mxu0 0.0
        %345 = vmatprep.subr.mxu0 0.0
        %346 = vmatpush1.msra.mxu0 0.0
        %347 = vmatprep.subr.mxu0 0.0
        %348 = vmatpush1.msra.mxu0 0.0
        %349 = vmatprep.subr.mxu0 0.0
        %350 = vmatpush1.msra.mxu0 0.0
        %351 = vmatprep.subr.mxu0 0.0
        %352 = vmatpush1.msra.mxu0 0.0
        %353 = vmatprep.subr.mxu0 0.0
        %354 = vmatpush1.msra.mxu0 0.0
        %355 = vmatprep.subr.mxu0 0.0
        %356 = vmatpush1.msra.mxu0 0.0
        %357 = vmatprep.subr.mxu0 0.0
        %358 = vmatpush1.msra.mxu0 0.0
        %359 = vmatprep.subr.mxu0 0.0
        %360 = vmatpush1.msra.mxu0 0.0
        %361 = vmatprep.subr.mxu0 0.0
        %362 = vmatpush1.msra.mxu0 0.0
        %363 = vmatprep.subr.mxu0 0.0
        %364 = vmatpush1.msra.mxu0 %v295
        %365 = vmatprep.subr.mxu0 0.0
        %366 = vmatpush1.msra.mxu0 %v294
        %367 = vmatprep.subr.mxu0 0.0
        %368 = vmatpush1.msra.mxu0 %v293
        %369 = vmatprep.subr.mxu0 0.0
        %370 = vmatpush1.msra.mxu0 %v292
        %371 = vmatprep.subr.mxu0 0.0
        %372 = vmatpush2.msra.mxu0 0.0
        %373 = vmatprep.subr.mxu0 0.0
        %374 = vmatpush2.msra.mxu0 0.0
        %375 = vmatprep.subr.mxu0 0.0
        %376 = vmatpush2.msra.mxu0 0.0
        %377 = vmatprep.subr.mxu0 0.0
        %378 = vmatpush2.msra.mxu0 0.0
        %379 = vmatprep.subr.mxu0 0.0
        %380 = vmatpush2.msra.mxu0 0.0
        %381 = vmatprep.subr.mxu0 0.0
        %382 = vmatpush2.msra.mxu0 0.0
        %383 = vmatprep.subr.mxu0 0.0
        %384 = vmatpush2.msra.mxu0 0.0
        %385 = vmatprep.subr.mxu0 0.0
        %386 = vmatpush2.msra.mxu0 0.0
        %387 = vmatprep.subr.mxu0 0.0
        %388 = vmatpush2.msra.mxu0 0.0
        %389 = vmatprep.subr.mxu0 0.0
        %390 = vmatpush2.msra.mxu0 0.0
        %391 = vmatprep.subr.mxu0 0.0
        %392 = vmatpush2.msra.mxu0 0.0
        %393 = vmatprep.subr.mxu0 0.0
        %394 = vmatpush2.msra.mxu0 0.0
        %395 = vmatprep.subr.mxu0 0.0
        %396 = vmatpush2.msra.mxu0 0.0
        %397 = vmatprep.subr.mxu0 0.0
        %398 = vmatpush2.msra.mxu0 0.0
        %399 = vmatprep.subr.mxu0 0.0
        %400 = vmatpush2.msra.mxu0 0.0
        %401 = vmatprep.subr.mxu0 0.0
        %402 = vmatpush2.msra.mxu0 0.0
        %403 = vmatprep.mubr.f32.mxu0 0.0
        %404 = vmatmul.mubr.f32.gmra.mxu0 %v334
        %v405 = vpop.f32.mrf.mxu0
        %v406 = vadd.f32 %v331, %v405
        %v407 = vpop.f32.mrf.mxu0
        %408 = vmatprep.mubr.f32.mxu0 0.0
        %409 = vmatmul.mubr.f32.gmra.mxu0 %v337
        %v410 = vpop.f32.mrf.mxu0
        %v411 = vadd.f32 %v331, %v410
        %v412 = vpop.f32.mrf.mxu0
        %413 = vdwg.mxu0
        %416 = vrot.lane.b32.xlu0 %v406, 96
        %v417 = vpop.permute.xlu0 %416
        %418 = vrot.lane.b32.xlu0 %v411, 96
        %v419 = vpop.permute.xlu0 %418
        %vm420 = vcmask 64512
        %v421 = vsel %vm420, %v406, 0
        %v423 = vsel %vm420, %v411, 0
        %v425 = vsel %vm420, %v417, 0
        %v427 = vsel %vm420, %v419, 0
        %429 = vmatprep.subr.mxu0 0.0
        %430 = vmatpush1.xpose.msra.mxu0 0.0
        %431 = vmatprep.subr.mxu0 0.0
        %432 = vmatpush1.xpose.msra.mxu0 0.0
        %433 = vmatprep.subr.mxu0 0.0
        %434 = vmatpush1.xpose.msra.mxu0 0.0
        %435 = vmatprep.subr.mxu0 0.0
        %436 = vmatpush1.xpose.msra.mxu0 0.0
        %437 = vmatprep.subr.mxu0 0.0
        %438 = vmatpush1.xpose.msra.mxu0 0.0
        %439 = vmatprep.subr.mxu0 0.0
        %440 = vmatpush1.xpose.msra.mxu0 0.0
        %441 = vmatprep.subr.mxu0 0.0
        %442 = vmatpush1.xpose.msra.mxu0 0.0
        %443 = vmatprep.subr.mxu0 0.0
        %444 = vmatpush1.xpose.msra.mxu0 0.0
        %445 = vmatprep.subr.mxu0 0.0
        %446 = vmatpush1.xpose.msra.mxu0 0.0
        %447 = vmatprep.subr.mxu0 0.0
        %448 = vmatpush1.xpose.msra.mxu0 0.0
        %449 = vmatprep.subr.mxu0 0.0
        %450 = vmatpush1.xpose.msra.mxu0 0.0
        %451 = vmatprep.subr.mxu0 0.0
        %452 = vmatpush1.xpose.msra.mxu0 0.0
        %453 = vmatprep.subr.mxu0 0.0
        %454 = vmatpush1.xpose.msra.mxu0 0.0
        %455 = vmatprep.subr.mxu0 0.0
        %456 = vmatpush1.xpose.msra.mxu0 0.0
        %457 = vmatprep.subr.mxu0 0.0
        %458 = vmatpush1.xpose.msra.mxu0 %v427
        %459 = vmatprep.subr.mxu0 0.0
        %460 = vmatpush1.xpose.msra.mxu0 %v425
        %461 = vmatprep.subr.mxu0 0.0
        %462 = vmatpush2.xpose.msra.mxu0 0.0
        %463 = vmatprep.subr.mxu0 0.0
        %464 = vmatpush2.xpose.msra.mxu0 0.0
        %465 = vmatprep.subr.mxu0 0.0
        %466 = vmatpush2.xpose.msra.mxu0 0.0
        %467 = vmatprep.subr.mxu0 0.0
        %468 = vmatpush2.xpose.msra.mxu0 0.0
        %469 = vmatprep.subr.mxu0 0.0
        %470 = vmatpush2.xpose.msra.mxu0 0.0
        %471 = vmatprep.subr.mxu0 0.0
        %472 = vmatpush2.xpose.msra.mxu0 0.0
        %473 = vmatprep.subr.mxu0 0.0
        %474 = vmatpush2.xpose.msra.mxu0 0.0
        %475 = vmatprep.subr.mxu0 0.0
        %476 = vmatpush2.xpose.msra.mxu0 0.0
        %477 = vmatprep.subr.mxu0 0.0
        %478 = vmatpush2.xpose.msra.mxu0 0.0
        %479 = vmatprep.subr.mxu0 0.0
        %480 = vmatpush2.xpose.msra.mxu0 0.0
        %481 = vmatprep.subr.mxu0 0.0
        %482 = vmatpush2.xpose.msra.mxu0 0.0
        %483 = vmatprep.subr.mxu0 0.0
        %484 = vmatpush2.xpose.msra.mxu0 0.0
        %485 = vmatprep.subr.mxu0 0.0
        %486 = vmatpush2.xpose.msra.mxu0 0.0
        %487 = vmatprep.subr.mxu0 0.0
        %488 = vmatpush2.xpose.msra.mxu0 0.0
        %489 = vmatprep.subr.mxu0 0.0
        %490 = vmatpush2.xpose.msra.mxu0 0.0
        %491 = vmatprep.subr.mxu0 0.0
        %492 = vmatpush2.xpose.msra.mxu0 0.0
        %493 = vmatprep.mubr.f32.mxu0 0.0
        %494 = vmatmul.mubr.f32.gmra.mxu0 %v421
        %v495 = vpop.f32.mrf.mxu0
        %v496 = vadd.f32 0.0, %v495
        %v497 = vpop.f32.mrf.mxu0
        %498 = vmatprep.mubr.f32.mxu0 0.0
        %499 = vmatmul.mubr.f32.gmra.mxu0 %v423
        %v500 = vpop.f32.mrf.mxu0
        %v501 = vadd.f32 0.0, %v500
        %v502 = vpop.f32.mrf.mxu0
        %503 = vdwg.mxu0
        %vm504 = vcmask 130048
        %v505 = vsel %vm504, %v496, -inf
        %506 = vmax.xlane.f32.xlu0 %v505
        %v507 = vpop.xlane.xlu0 %506
        %v508 = vsel %vm504, %v501, -inf
        %509 = vmax.xlane.f32.xlu0 %v508
        %v510 = vpop.xlane.xlu0 %509
        %v511 = vsub.f32 %v496, %v507
        %v512 = vsub.f32 %v501, %v510
        %v513 = vmul.f32 %v511, 1.442695
        %v514 = vpow.pop %v513
        %v515 = vmul.f32 %v512, 1.442695
        %v516 = vpow.pop %v515
        %v517 = vsel %vm504, %v514, 0.0
        %518 = vadd.xlane.f32.xlu0 %v517
        %v519 = vpop.xlane.xlu0 %518
        %v520 = vsel %vm504, %v516, 0.0
        %521 = vadd.xlane.f32.xlu0 %v520
        %v522 = vpop.xlane.xlu0 %521
        %v523 = vrcp.pop %v519
        %v524 = vmul.f32 %v514, %v523
        %v525 = vrcp.pop %v522
        %v526 = vmul.f32 %v516, %v525
        %527 = vrot.lane.b32.xlu0 %v406, 64
        %v528 = vpop.permute.xlu0 %527
        %529 = vrot.lane.b32.xlu0 %v411, 64
        %v530 = vpop.permute.xlu0 %529
        %v534 = vsel %vm504, %v524, 0
        %v537 = vsel %vm504, %v526, 0
        %539 = vmatprep.subr.mxu0 0.0
        %540 = vmatpush1.msra.mxu0 0.0
        %541 = vmatprep.subr.mxu0 0.0
        %542 = vmatpush1.msra.mxu0 0.0
        %543 = vmatprep.subr.mxu0 0.0
        %544 = vmatpush1.msra.mxu0 0.0
        %545 = vmatprep.subr.mxu0 0.0
        %546 = vmatpush1.msra.mxu0 0.0
        %547 = vmatprep.subr.mxu0 0.0
        %548 = vmatpush1.msra.mxu0 0.0
        %549 = vmatprep.subr.mxu0 0.0
        %550 = vmatpush1.msra.mxu0 0.0
        %551 = vmatprep.subr.mxu0 0.0
        %552 = vmatpush1.msra.mxu0 0.0
        %553 = vmatprep.subr.mxu0 0.0
        %554 = vmatpush1.msra.mxu0 0.0
        %555 = vmatprep.subr.mxu0 0.0
        %556 = vmatpush1.msra.mxu0 0.0
        %557 = vmatprep.subr.mxu0 0.0
        %558 = vmatpush1.msra.mxu0 0.0
        %559 = vmatprep.subr.mxu0 0.0
        %560 = vmatpush1.msra.mxu0 0.0
        %561 = vmatprep.subr.mxu0 0.0
        %562 = vmatpush1.msra.mxu0 0.0
        %563 = vmatprep.subr.mxu0 0.0
        %564 = vmatpush1.msra.mxu0 0.0
        %565 = vmatprep.subr.mxu0 0.0
        %566 = vmatpush1.msra.mxu0 0.0
        %567 = vmatprep.subr.mxu0 0.0
        %568 = vmatpush1.msra.mxu0 %v530
        %569 = vmatprep.subr.mxu0 0.0
        %570 = vmatpush1.msra.mxu0 %v528
        %571 = vmatprep.subr.mxu0 0.0
        %572 = vmatpush2.msra.mxu0 0.0
        %573 = vmatprep.subr.mxu0 0.0
        %574 = vmatpush2.msra.mxu0 0.0
        %575 = vmatprep.subr.mxu0 0.0
        %576 = vmatpush2.msra.mxu0 0.0
        %577 = vmatprep.subr.mxu0 0.0
        %578 = vmatpush2.msra.mxu0 0.0
        %579 = vmatprep.subr.mxu0 0.0
        %580 = vmatpush2.msra.mxu0 0.0
        %581 = vmatprep.subr.mxu0 0.0
        %582 = vmatpush2.msra.mxu0 0.0
        %583 = vmatprep.subr.mxu0 0.0
        %584 = vmatpush2.msra.mxu0 0.0
        %585 = vmatprep.subr.mxu0 0.0
        %586 = vmatpush2.msra.mxu0 0.0
        %587 = vmatprep.subr.mxu0 0.0
        %588 = vmatpush2.msra.mxu0 0.0
        %589 = vmatprep.subr.mxu0 0.0
        %590 = vmatpush2.msra.mxu0 0.0
        %591 = vmatprep.subr.mxu0 0.0
        %592 = vmatpush2.msra.mxu0 0.0
        %593 = vmatprep.subr.mxu0 0.0
        %594 = vmatpush2.msra.mxu0 0.0
        %595 = vmatprep.subr.mxu0 0.0
        %596 = vmatpush2.msra.mxu0 0.0
        %597 = vmatprep.subr.mxu0 0.0
        %598 = vmatpush2.msra.mxu0 0.0
        %599 = vmatprep.subr.mxu0 0.0
        %600 = vmatpush2.msra.mxu0 0.0
        %601 = vmatprep.subr.mxu0 0.0
        %602 = vmatpush2.msra.mxu0 0.0
        %603 = vmatprep.mubr.f32.mxu0 0.0
        %604 = vmatmul.mubr.f32.gmra.mxu0 %v534
        %v605 = vpop.f32.mrf.mxu0
        %v606 = vadd.f32 0.0, %v605
        %v607 = vpop.f32.mrf.mxu0
        %608 = vmatprep.mubr.f32.mxu0 0.0
        %609 = vmatmul.mubr.f32.gmra.mxu0 %v537
        %v610 = vpop.f32.mrf.mxu0
        %v611 = vadd.f32 0.0, %v610
        %v612 = vpop.f32.mrf.mxu0
        %613 = vdwg.mxu0
        %614 = vrot.lane.b32.xlu0 %v406, 120
        %v615 = vpop.permute.xlu0 %614
        %616 = vrot.lane.b32.xlu0 %v411, 120
        %v617 = vpop.permute.xlu0 %616
        %618 = vrot.lane.b32.xlu0 %v406, 88
        %v619 = vpop.permute.xlu0 %618
        %620 = vrot.lane.b32.xlu0 %v411, 88
        %v621 = vpop.permute.xlu0 %620
        %v622 = vsel %vm420, %v615, 0
        %v624 = vsel %vm420, %v617, 0
        %v626 = vsel %vm420, %v619, 0
        %v628 = vsel %vm420, %v621, 0
        %630 = vmatprep.subr.mxu0 0.0
        %631 = vmatpush1.xpose.msra.mxu0 0.0
        %632 = vmatprep.subr.mxu0 0.0
        %633 = vmatpush1.xpose.msra.mxu0 0.0
        %634 = vmatprep.subr.mxu0 0.0
        %635 = vmatpush1.xpose.msra.mxu0 0.0
        %636 = vmatprep.subr.mxu0 0.0
        %637 = vmatpush1.xpose.msra.mxu0 0.0
        %638 = vmatprep.subr.mxu0 0.0
        %639 = vmatpush1.xpose.msra.mxu0 0.0
        %640 = vmatprep.subr.mxu0 0.0
        %641 = vmatpush1.xpose.msra.mxu0 0.0
        %642 = vmatprep.subr.mxu0 0.0
        %643 = vmatpush1.xpose.msra.mxu0 0.0
        %644 = vmatprep.subr.mxu0 0.0
        %645 = vmatpush1.xpose.msra.mxu0 0.0
        %646 = vmatprep.subr.mxu0 0.0
        %647 = vmatpush1.xpose.msra.mxu0 0.0
        %648 = vmatprep.subr.mxu0 0.0
        %649 = vmatpush1.xpose.msra.mxu0 0.0
        %650 = vmatprep.subr.mxu0 0.0
        %651 = vmatpush1.xpose.msra.mxu0 0.0
        %652 = vmatprep.subr.mxu0 0.0
        %653 = vmatpush1.xpose.msra.mxu0 0.0
        %654 = vmatprep.subr.mxu0 0.0
        %655 = vmatpush1.xpose.msra.mxu0 0.0
        %656 = vmatprep.subr.mxu0 0.0
        %657 = vmatpush1.xpose.msra.mxu0 0.0
        %658 = vmatprep.subr.mxu0 0.0
        %659 = vmatpush1.xpose.msra.mxu0 %v628
        %660 = vmatprep.subr.mxu0 0.0
        %661 = vmatpush1.xpose.msra.mxu0 %v626
        %662 = vmatprep.subr.mxu0 0.0
        %663 = vmatpush2.xpose.msra.mxu0 0.0
        %664 = vmatprep.subr.mxu0 0.0
        %665 = vmatpush2.xpose.msra.mxu0 0.0
        %666 = vmatprep.subr.mxu0 0.0
        %667 = vmatpush2.xpose.msra.mxu0 0.0
        %668 = vmatprep.subr.mxu0 0.0
        %669 = vmatpush2.xpose.msra.mxu0 0.0
        %670 = vmatprep.subr.mxu0 0.0
        %671 = vmatpush2.xpose.msra.mxu0 0.0
        %672 = vmatprep.subr.mxu0 0.0
        %673 = vmatpush2.xpose.msra.mxu0 0.0
        %674 = vmatprep.subr.mxu0 0.0
        %675 = vmatpush2.xpose.msra.mxu0 0.0
        %676 = vmatprep.subr.mxu0 0.0
        %677 = vmatpush2.xpose.msra.mxu0 0.0
        %678 = vmatprep.subr.mxu0 0.0
        %679 = vmatpush2.xpose.msra.mxu0 0.0
        %680 = vmatprep.subr.mxu0 0.0
        %681 = vmatpush2.xpose.msra.mxu0 0.0
        %682 = vmatprep.subr.mxu0 0.0
        %683 = vmatpush2.xpose.msra.mxu0 0.0
        %684 = vmatprep.subr.mxu0 0.0
        %685 = vmatpush2.xpose.msra.mxu0 0.0
        %686 = vmatprep.subr.mxu0 0.0
        %687 = vmatpush2.xpose.msra.mxu0 0.0
        %688 = vmatprep.subr.mxu0 0.0
        %689 = vmatpush2.xpose.msra.mxu0 0.0
        %690 = vmatprep.subr.mxu0 0.0
        %691 = vmatpush2.xpose.msra.mxu0 0.0
        %692 = vmatprep.subr.mxu0 0.0
        %693 = vmatpush2.xpose.msra.mxu0 0.0
        %694 = vmatprep.mubr.f32.mxu0 0.0
        %695 = vmatmul.mubr.f32.gmra.mxu0 %v622
        %v696 = vpop.f32.mrf.mxu0
        %v697 = vadd.f32 0.0, %v696
        %v698 = vpop.f32.mrf.mxu0
        %699 = vmatprep.mubr.f32.mxu0 0.0
        %700 = vmatmul.mubr.f32.gmra.mxu0 %v624
        %v701 = vpop.f32.mrf.mxu0
        %v702 = vadd.f32 0.0, %v701
        %v703 = vpop.f32.mrf.mxu0
        %704 = vdwg.mxu0
        %v705 = vsel %vm504, %v697, -inf
        %706 = vmax.xlane.f32.xlu0 %v705
        %v707 = vpop.xlane.xlu0 %706
        %v708 = vsel %vm504, %v702, -inf
        %709 = vmax.xlane.f32.xlu0 %v708
        %v710 = vpop.xlane.xlu0 %709
        %v711 = vsub.f32 %v697, %v707
        %v712 = vsub.f32 %v702, %v710
        %v713 = vmul.f32 %v711, 1.442695
        %v714 = vpow.pop %v713
        %v715 = vmul.f32 %v712, 1.442695
        %v716 = vpow.pop %v715
        %v717 = vsel %vm504, %v714, 0.0
        %718 = vadd.xlane.f32.xlu0 %v717
        %v719 = vpop.xlane.xlu0 %718
        %v720 = vsel %vm504, %v716, 0.0
        %721 = vadd.xlane.f32.xlu0 %v720
        %v722 = vpop.xlane.xlu0 %721
        %v723 = vrcp.pop %v719
        %v724 = vmul.f32 %v714, %v723
        %v725 = vrcp.pop %v722
        %v726 = vmul.f32 %v716, %v725
        %727 = vrot.lane.b32.xlu0 %v406, 56
        %v728 = vpop.permute.xlu0 %727
        %729 = vrot.lane.b32.xlu0 %v411, 56
        %v730 = vpop.permute.xlu0 %729
        %v734 = vsel %vm504, %v724, 0
        %v737 = vsel %vm504, %v726, 0
        %739 = vmatprep.subr.mxu0 0.0
        %740 = vmatpush1.msra.mxu0 0.0
        %741 = vmatprep.subr.mxu0 0.0
        %742 = vmatpush1.msra.mxu0 0.0
        %743 = vmatprep.subr.mxu0 0.0
        %744 = vmatpush1.msra.mxu0 0.0
        %745 = vmatprep.subr.mxu0 0.0
        %746 = vmatpush1.msra.mxu0 0.0
        %747 = vmatprep.subr.mxu0 0.0
        %748 = vmatpush1.msra.mxu0 0.0
        %749 = vmatprep.subr.mxu0 0.0
        %750 = vmatpush1.msra.mxu0 0.0
        %751 = vmatprep.subr.mxu0 0.0
        %752 = vmatpush1.msra.mxu0 0.0
        %753 = vmatprep.subr.mxu0 0.0
        %754 = vmatpush1.msra.mxu0 0.0
        %755 = vmatprep.subr.mxu0 0.0
        %756 = vmatpush1.msra.mxu0 0.0
        %757 = vmatprep.subr.mxu0 0.0
        %758 = vmatpush1.msra.mxu0 0.0
        %759 = vmatprep.subr.mxu0 0.0
        %760 = vmatpush1.msra.mxu0 0.0
        %761 = vmatprep.subr.mxu0 0.0
        %762 = vmatpush1.msra.mxu0 0.0
        %763 = vmatprep.subr.mxu0 0.0
        %764 = vmatpush1.msra.mxu0 0.0
        %765 = vmatprep.subr.mxu0 0.0
        %766 = vmatpush1.msra.mxu0 0.0
        %767 = vmatprep.subr.mxu0 0.0
        %768 = vmatpush1.msra.mxu0 %v730
        %769 = vmatprep.subr.mxu0 0.0
        %770 = vmatpush1.msra.mxu0 %v728
        %771 = vmatprep.subr.mxu0 0.0
        %772 = vmatpush2.msra.mxu0 0.0
        %773 = vmatprep.subr.mxu0 0.0
        %774 = vmatpush2.msra.mxu0 0.0
        %775 = vmatprep.subr.mxu0 0.0
        %776 = vmatpush2.msra.mxu0 0.0
        %777 = vmatprep.subr.mxu0 0.0
        %778 = vmatpush2.msra.mxu0 0.0
        %779 = vmatprep.subr.mxu0 0.0
        %780 = vmatpush2.msra.mxu0 0.0
        %781 = vmatprep.subr.mxu0 0.0
        %782 = vmatpush2.msra.mxu0 0.0
        %783 = vmatprep.subr.mxu0 0.0
        %784 = vmatpush2.msra.mxu0 0.0
        %785 = vmatprep.subr.mxu0 0.0
        %786 = vmatpush2.msra.mxu0 0.0
        %787 = vmatprep.subr.mxu0 0.0
        %788 = vmatpush2.msra.mxu0 0.0
        %789 = vmatprep.subr.mxu0 0.0
        %790 = vmatpush2.msra.mxu0 0.0
        %791 = vmatprep.subr.mxu0 0.0
        %792 = vmatpush2.msra.mxu0 0.0
        %793 = vmatprep.subr.mxu0 0.0
        %794 = vmatpush2.msra.mxu0 0.0
        %795 = vmatprep.subr.mxu0 0.0
        %796 = vmatpush2.msra.mxu0 0.0
        %797 = vmatprep.subr.mxu0 0.0
        %798 = vmatpush2.msra.mxu0 0.0
        %799 = vmatprep.subr.mxu0 0.0
        %800 = vmatpush2.msra.mxu0 0.0
        %801 = vmatprep.subr.mxu0 0.0
        %802 = vmatpush2.msra.mxu0 0.0
        %803 = vmatprep.mubr.f32.mxu0 0.0
        %804 = vmatmul.mubr.f32.gmra.mxu0 %v734
        %v805 = vpop.f32.mrf.mxu0
        %v806 = vadd.f32 0.0, %v805
        %v807 = vpop.f32.mrf.mxu0
        %808 = vmatprep.mubr.f32.mxu0 0.0
        %809 = vmatmul.mubr.f32.gmra.mxu0 %v737
        %v810 = vpop.f32.mrf.mxu0
        %v811 = vadd.f32 0.0, %v810
        %v812 = vpop.f32.mrf.mxu0
        %813 = vdwg.mxu0
        %814 = vrot.lane.b32.xlu0 %v406, 112
        %v815 = vpop.permute.xlu0 %814
        %816 = vrot.lane.b32.xlu0 %v411, 112
        %v817 = vpop.permute.xlu0 %816
        %818 = vrot.lane.b32.xlu0 %v406, 80
        %v819 = vpop.permute.xlu0 %818
        %820 = vrot.lane.b32.xlu0 %v411, 80
        %v821 = vpop.permute.xlu0 %820
        %v822 = vsel %vm420, %v815, 0
        %v824 = vsel %vm420, %v817, 0
        %v826 = vsel %vm420, %v819, 0
        %v828 = vsel %vm420, %v821, 0
        %830 = vmatprep.subr.mxu0 0.0
        %831 = vmatpush1.xpose.msra.mxu0 0.0
        %832 = vmatprep.subr.mxu0 0.0
        %833 = vmatpush1.xpose.msra.mxu0 0.0
        %834 = vmatprep.subr.mxu0 0.0
        %835 = vmatpush1.xpose.msra.mxu0 0.0
        %836 = vmatprep.subr.mxu0 0.0
        %837 = vmatpush1.xpose.msra.mxu0 0.0
        %838 = vmatprep.subr.mxu0 0.0
        %839 = vmatpush1.xpose.msra.mxu0 0.0
        %840 = vmatprep.subr.mxu0 0.0
        %841 = vmatpush1.xpose.msra.mxu0 0.0
        %842 = vmatprep.subr.mxu0 0.0
        %843 = vmatpush1.xpose.msra.mxu0 0.0
        %844 = vmatprep.subr.mxu0 0.0
        %845 = vmatpush1.xpose.msra.mxu0 0.0
        %846 = vmatprep.subr.mxu0 0.0
        %847 = vmatpush1.xpose.msra.mxu0 0.0
        %848 = vmatprep.subr.mxu0 0.0
        %849 = vmatpush1.xpose.msra.mxu0 0.0
        %850 = vmatprep.subr.mxu0 0.0
        %851 = vmatpush1.xpose.msra.mxu0 0.0
        %852 = vmatprep.subr.mxu0 0.0
        %853 = vmatpush1.xpose.msra.mxu0 0.0
        %854 = vmatprep.subr.mxu0 0.0
        %855 = vmatpush1.xpose.msra.mxu0 0.0
        %856 = vmatprep.subr.mxu0 0.0
        %857 = vmatpush1.xpose.msra.mxu0 0.0
        %858 = vmatprep.subr.mxu0 0.0
        %859 = vmatpush1.xpose.msra.mxu0 %v828
        %860 = vmatprep.subr.mxu0 0.0
        %861 = vmatpush1.xpose.msra.mxu0 %v826
        %862 = vmatprep.subr.mxu0 0.0
        %863 = vmatpush2.xpose.msra.mxu0 0.0
        %864 = vmatprep.subr.mxu0 0.0
        %865 = vmatpush2.xpose.msra.mxu0 0.0
        %866 = vmatprep.subr.mxu0 0.0
        %867 = vmatpush2.xpose.msra.mxu0 0.0
        %868 = vmatprep.subr.mxu0 0.0
        %869 = vmatpush2.xpose.msra.mxu0 0.0
        %870 = vmatprep.subr.mxu0 0.0
        %871 = vmatpush2.xpose.msra.mxu0 0.0
        %872 = vmatprep.subr.mxu0 0.0
        %873 = vmatpush2.xpose.msra.mxu0 0.0
        %874 = vmatprep.subr.mxu0 0.0
        %875 = vmatpush2.xpose.msra.mxu0 0.0
        %876 = vmatprep.subr.mxu0 0.0
        %877 = vmatpush2.xpose.msra.mxu0 0.0
        %878 = vmatprep.subr.mxu0 0.0
        %879 = vmatpush2.xpose.msra.mxu0 0.0
        %880 = vmatprep.subr.mxu0 0.0
        %881 = vmatpush2.xpose.msra.mxu0 0.0
        %882 = vmatprep.subr.mxu0 0.0
        %883 = vmatpush2.xpose.msra.mxu0 0.0
        %884 = vmatprep.subr.mxu0 0.0
        %885 = vmatpush2.xpose.msra.mxu0 0.0
        %886 = vmatprep.subr.mxu0 0.0
        %887 = vmatpush2.xpose.msra.mxu0 0.0
        %888 = vmatprep.subr.mxu0 0.0
        %889 = vmatpush2.xpose.msra.mxu0 0.0
        %890 = vmatprep.subr.mxu0 0.0
        %891 = vmatpush2.xpose.msra.mxu0 0.0
        %892 = vmatprep.subr.mxu0 0.0
        %893 = vmatpush2.xpose.msra.mxu0 0.0
        %894 = vmatprep.mubr.f32.mxu0 0.0
        %895 = vmatmul.mubr.f32.gmra.mxu0 %v822
        %v896 = vpop.f32.mrf.mxu0
        %v897 = vadd.f32 0.0, %v896
        %v898 = vpop.f32.mrf.mxu0
        %899 = vmatprep.mubr.f32.mxu0 0.0
        %900 = vmatmul.mubr.f32.gmra.mxu0 %v824
        %v901 = vpop.f32.mrf.mxu0
        %v902 = vadd.f32 0.0, %v901
        %v903 = vpop.f32.mrf.mxu0
        %904 = vdwg.mxu0
        %v905 = vsel %vm504, %v897, -inf
        %906 = vmax.xlane.f32.xlu0 %v905
        %v907 = vpop.xlane.xlu0 %906
        %v908 = vsel %vm504, %v902, -inf
        %909 = vmax.xlane.f32.xlu0 %v908
        %v910 = vpop.xlane.xlu0 %909
        %v911 = vsub.f32 %v897, %v907
        %v912 = vsub.f32 %v902, %v910
        %v913 = vmul.f32 %v911, 1.442695
        %v914 = vpow.pop %v913
        %v915 = vmul.f32 %v912, 1.442695
        %v916 = vpow.pop %v915
        %v917 = vsel %vm504, %v914, 0.0
        %918 = vadd.xlane.f32.xlu0 %v917
        %v919 = vpop.xlane.xlu0 %918
        %v920 = vsel %vm504, %v916, 0.0
        %921 = vadd.xlane.f32.xlu0 %v920
        %v922 = vpop.xlane.xlu0 %921
        %v923 = vrcp.pop %v919
        %v924 = vmul.f32 %v914, %v923
        %v925 = vrcp.pop %v922
        %v926 = vmul.f32 %v916, %v925
        %927 = vrot.lane.b32.xlu0 %v406, 48
        %v928 = vpop.permute.xlu0 %927
        %929 = vrot.lane.b32.xlu0 %v411, 48
        %v930 = vpop.permute.xlu0 %929
        %v934 = vsel %vm504, %v924, 0
        %v937 = vsel %vm504, %v926, 0
        %939 = vmatprep.subr.mxu0 0.0
        %940 = vmatpush1.msra.mxu0 0.0
        %941 = vmatprep.subr.mxu0 0.0
        %942 = vmatpush1.msra.mxu0 0.0
        %943 = vmatprep.subr.mxu0 0.0
        %944 = vmatpush1.msra.mxu0 0.0
        %945 = vmatprep.subr.mxu0 0.0
        %946 = vmatpush1.msra.mxu0 0.0
        %947 = vmatprep.subr.mxu0 0.0
        %948 = vmatpush1.msra.mxu0 0.0
        %949 = vmatprep.subr.mxu0 0.0
        %950 = vmatpush1.msra.mxu0 0.0
        %951 = vmatprep.subr.mxu0 0.0
        %952 = vmatpush1.msra.mxu0 0.0
        %953 = vmatprep.subr.mxu0 0.0
        %954 = vmatpush1.msra.mxu0 0.0
        %955 = vmatprep.subr.mxu0 0.0
        %956 = vmatpush1.msra.mxu0 0.0
        %957 = vmatprep.subr.mxu0 0.0
        %958 = vmatpush1.msra.mxu0 0.0
        %959 = vmatprep.subr.mxu0 0.0
        %960 = vmatpush1.msra.mxu0 0.0
        %961 = vmatprep.subr.mxu0 0.0
        %962 = vmatpush1.msra.mxu0 0.0
        %963 = vmatprep.subr.mxu0 0.0
        %964 = vmatpush1.msra.mxu0 0.0
        %965 = vmatprep.subr.mxu0 0.0
        %966 = vmatpush1.msra.mxu0 0.0
        %967 = vmatprep.subr.mxu0 0.0
        %968 = vmatpush1.msra.mxu0 %v930
        %969 = vmatprep.subr.mxu0 0.0
        %970 = vmatpush1.msra.mxu0 %v928
        %971 = vmatprep.subr.mxu0 0.0
        %972 = vmatpush2.msra.mxu0 0.0
        %973 = vmatprep.subr.mxu0 0.0
        %974 = vmatpush2.msra.mxu0 0.0
        %975 = vmatprep.subr.mxu0 0.0
        %976 = vmatpush2.msra.mxu0 0.0
        %977 = vmatprep.subr.mxu0 0.0
        %978 = vmatpush2.msra.mxu0 0.0
        %979 = vmatprep.subr.mxu0 0.0
        %980 = vmatpush2.msra.mxu0 0.0
        %981 = vmatprep.subr.mxu0 0.0
        %982 = vmatpush2.msra.mxu0 0.0
        %983 = vmatprep.subr.mxu0 0.0
        %984 = vmatpush2.msra.mxu0 0.0
        %985 = vmatprep.subr.mxu0 0.0
        %986 = vmatpush2.msra.mxu0 0.0
        %987 = vmatprep.subr.mxu0 0.0
        %988 = vmatpush2.msra.mxu0 0.0
        %989 = vmatprep.subr.mxu0 0.0
        %990 = vmatpush2.msra.mxu0 0.0
        %991 = vmatprep.subr.mxu0 0.0
        %992 = vmatpush2.msra.mxu0 0.0
        %993 = vmatprep.subr.mxu0 0.0
        %994 = vmatpush2.msra.mxu0 0.0
        %995 = vmatprep.subr.mxu0 0.0
        %996 = vmatpush2.msra.mxu0 0.0
        %997 = vmatprep.subr.mxu0 0.0
        %998 = vmatpush2.msra.mxu0 0.0
        %999 = vmatprep.subr.mxu0 0.0
        %1000 = vmatpush2.msra.mxu0 0.0
        %1001 = vmatprep.subr.mxu0 0.0
        %1002 = vmatpush2.msra.mxu0 0.0
        %1003 = vmatprep.mubr.f32.mxu0 0.0
        %1004 = vmatmul.mubr.f32.gmra.mxu0 %v934
        %v1005 = vpop.f32.mrf.mxu0
        %v1006 = vadd.f32 0.0, %v1005
        %v1007 = vpop.f32.mrf.mxu0
        %1008 = vmatprep.mubr.f32.mxu0 0.0
        %1009 = vmatmul.mubr.f32.gmra.mxu0 %v937
        %v1010 = vpop.f32.mrf.mxu0
        %v1011 = vadd.f32 0.0, %v1010
        %v1012 = vpop.f32.mrf.mxu0
        %1013 = vdwg.mxu0
        %1014 = vrot.lane.b32.xlu0 %v406, 104
        %v1015 = vpop.permute.xlu0 %1014
        %1016 = vrot.lane.b32.xlu0 %v411, 104
        %v1017 = vpop.permute.xlu0 %1016
        %1018 = vrot.lane.b32.xlu0 %v406, 72
        %v1019 = vpop.permute.xlu0 %1018
        %1020 = vrot.lane.b32.xlu0 %v411, 72
        %v1021 = vpop.permute.xlu0 %1020
        %v1022 = vsel %vm420, %v1015, 0
        %v1024 = vsel %vm420, %v1017, 0
        %v1026 = vsel %vm420, %v1019, 0
        %v1028 = vsel %vm420, %v1021, 0
        %1030 = vmatprep.subr.mxu0 0.0
        %1031 = vmatpush1.xpose.msra.mxu0 0.0
        %1032 = vmatprep.subr.mxu0 0.0
        %1033 = vmatpush1.xpose.msra.mxu0 0.0
        %1034 = vmatprep.subr.mxu0 0.0
        %1035 = vmatpush1.xpose.msra.mxu0 0.0
        %1036 = vmatprep.subr.mxu0 0.0
        %1037 = vmatpush1.xpose.msra.mxu0 0.0
        %1038 = vmatprep.subr.mxu0 0.0
        %1039 = vmatpush1.xpose.msra.mxu0 0.0
        %1040 = vmatprep.subr.mxu0 0.0
        %1041 = vmatpush1.xpose.msra.mxu0 0.0
        %1042 = vmatprep.subr.mxu0 0.0
        %1043 = vmatpush1.xpose.msra.mxu0 0.0
        %1044 = vmatprep.subr.mxu0 0.0
        %1045 = vmatpush1.xpose.msra.mxu0 0.0
        %1046 = vmatprep.subr.mxu0 0.0
        %1047 = vmatpush1.xpose.msra.mxu0 0.0
        %1048 = vmatprep.subr.mxu0 0.0
        %1049 = vmatpush1.xpose.msra.mxu0 0.0
        %1050 = vmatprep.subr.mxu0 0.0
        %1051 = vmatpush1.xpose.msra.mxu0 0.0
        %1052 = vmatprep.subr.mxu0 0.0
        %1053 = vmatpush1.xpose.msra.mxu0 0.0
        %1054 = vmatprep.subr.mxu0 0.0
        %1055 = vmatpush1.xpose.msra.mxu0 0.0
        %1056 = vmatprep.subr.mxu0 0.0
        %1057 = vmatpush1.xpose.msra.mxu0 0.0
        %1058 = vmatprep.subr.mxu0 0.0
        %1059 = vmatpush1.xpose.msra.mxu0 %v1028
        %1060 = vmatprep.subr.mxu0 0.0
        %1061 = vmatpush1.xpose.msra.mxu0 %v1026
        %1062 = vmatprep.subr.mxu0 0.0
        %1063 = vmatpush2.xpose.msra.mxu0 0.0
        %1064 = vmatprep.subr.mxu0 0.0
        %1065 = vmatpush2.xpose.msra.mxu0 0.0
        %1066 = vmatprep.subr.mxu0 0.0
        %1067 = vmatpush2.xpose.msra.mxu0 0.0
        %1068 = vmatprep.subr.mxu0 0.0
        %1069 = vmatpush2.xpose.msra.mxu0 0.0
        %1070 = vmatprep.subr.mxu0 0.0
        %1071 = vmatpush2.xpose.msra.mxu0 0.0
        %1072 = vmatprep.subr.mxu0 0.0
        %1073 = vmatpush2.xpose.msra.mxu0 0.0
        %1074 = vmatprep.subr.mxu0 0.0
        %1075 = vmatpush2.xpose.msra.mxu0 0.0
        %1076 = vmatprep.subr.mxu0 0.0
        %1077 = vmatpush2.xpose.msra.mxu0 0.0
        %1078 = vmatprep.subr.mxu0 0.0
        %1079 = vmatpush2.xpose.msra.mxu0 0.0
        %1080 = vmatprep.subr.mxu0 0.0
        %1081 = vmatpush2.xpose.msra.mxu0 0.0
        %1082 = vmatprep.subr.mxu0 0.0
        %1083 = vmatpush2.xpose.msra.mxu0 0.0
        %1084 = vmatprep.subr.mxu0 0.0
        %1085 = vmatpush2.xpose.msra.mxu0 0.0
        %1086 = vmatprep.subr.mxu0 0.0
        %1087 = vmatpush2.xpose.msra.mxu0 0.0
        %1088 = vmatprep.subr.mxu0 0.0
        %1089 = vmatpush2.xpose.msra.mxu0 0.0
        %1090 = vmatprep.subr.mxu0 0.0
        %1091 = vmatpush2.xpose.msra.mxu0 0.0
        %1092 = vmatprep.subr.mxu0 0.0
        %1093 = vmatpush2.xpose.msra.mxu0 0.0
        %1094 = vmatprep.mubr.f32.mxu0 0.0
        %1095 = vmatmul.mubr.f32.gmra.mxu0 %v1022
        %v1096 = vpop.f32.mrf.mxu0
        %v1097 = vadd.f32 0.0, %v1096
        %v1098 = vpop.f32.mrf.mxu0
        %1099 = vmatprep.mubr.f32.mxu0 0.0
        %1100 = vmatmul.mubr.f32.gmra.mxu0 %v1024
        %v1101 = vpop.f32.mrf.mxu0
        %v1102 = vadd.f32 0.0, %v1101
        %v1103 = vpop.f32.mrf.mxu0
        %1104 = vdwg.mxu0
        %v1105 = vsel %vm504, %v1097, -inf
        %1106 = vmax.xlane.f32.xlu0 %v1105
        %v1107 = vpop.xlane.xlu0 %1106
        %v1108 = vsel %vm504, %v1102, -inf
        %1109 = vmax.xlane.f32.xlu0 %v1108
        %v1110 = vpop.xlane.xlu0 %1109
        %v1111 = vsub.f32 %v1097, %v1107
        %v1112 = vsub.f32 %v1102, %v1110
        %v1113 = vmul.f32 %v1111, 1.442695
        %v1114 = vpow.pop %v1113
        %v1115 = vmul.f32 %v1112, 1.442695
        %v1116 = vpow.pop %v1115
        %v1117 = vsel %vm504, %v1114, 0.0
        %1118 = vadd.xlane.f32.xlu0 %v1117
        %v1119 = vpop.xlane.xlu0 %1118
        %v1120 = vsel %vm504, %v1116, 0.0
        %1121 = vadd.xlane.f32.xlu0 %v1120
        %v1122 = vpop.xlane.xlu0 %1121
        %v1123 = vrcp.pop %v1119
        %v1124 = vmul.f32 %v1114, %v1123
        %v1125 = vrcp.pop %v1122
        %v1126 = vmul.f32 %v1116, %v1125
        %1127 = vrot.lane.b32.xlu0 %v406, 40
        %v1128 = vpop.permute.xlu0 %1127
        %1129 = vrot.lane.b32.xlu0 %v411, 40
        %v1130 = vpop.permute.xlu0 %1129
        %v1134 = vsel %vm504, %v1124, 0
        %v1137 = vsel %vm504, %v1126, 0
        %1139 = vmatprep.subr.mxu0 0.0
        %1140 = vmatpush1.msra.mxu0 0.0
        %1141 = vmatprep.subr.mxu0 0.0
        %1142 = vmatpush1.msra.mxu0 0.0
        %1143 = vmatprep.subr.mxu0 0.0
        %1144 = vmatpush1.msra.mxu0 0.0
        %1145 = vmatprep.subr.mxu0 0.0
        %1146 = vmatpush1.msra.mxu0 0.0
        %1147 = vmatprep.subr.mxu0 0.0
        %1148 = vmatpush1.msra.mxu0 0.0
        %1149 = vmatprep.subr.mxu0 0.0
        %1150 = vmatpush1.msra.mxu0 0.0
        %1151 = vmatprep.subr.mxu0 0.0
        %1152 = vmatpush1.msra.mxu0 0.0
        %1153 = vmatprep.subr.mxu0 0.0
        %1154 = vmatpush1.msra.mxu0 0.0
        %1155 = vmatprep.subr.mxu0 0.0
        %1156 = vmatpush1.msra.mxu0 0.0
        %1157 = vmatprep.subr.mxu0 0.0
        %1158 = vmatpush1.msra.mxu0 0.0
        %1159 = vmatprep.subr.mxu0 0.0
        %1160 = vmatpush1.msra.mxu0 0.0
        %1161 = vmatprep.subr.mxu0 0.0
        %1162 = vmatpush1.msra.mxu0 0.0
        %1163 = vmatprep.subr.mxu0 0.0
        %1164 = vmatpush1.msra.mxu0 0.0
        %1165 = vmatprep.subr.mxu0 0.0
        %1166 = vmatpush1.msra.mxu0 0.0
        %1167 = vmatprep.subr.mxu0 0.0
        %1168 = vmatpush1.msra.mxu0 %v1130
        %1169 = vmatprep.subr.mxu0 0.0
        %1170 = vmatpush1.msra.mxu0 %v1128
        %1171 = vmatprep.subr.mxu0 0.0
        %1172 = vmatpush2.msra.mxu0 0.0
        %1173 = vmatprep.subr.mxu0 0.0
        %1174 = vmatpush2.msra.mxu0 0.0
        %1175 = vmatprep.subr.mxu0 0.0
        %1176 = vmatpush2.msra.mxu0 0.0
        %1177 = vmatprep.subr.mxu0 0.0
        %1178 = vmatpush2.msra.mxu0 0.0
        %1179 = vmatprep.subr.mxu0 0.0
        %1180 = vmatpush2.msra.mxu0 0.0
        %1181 = vmatprep.subr.mxu0 0.0
        %1182 = vmatpush2.msra.mxu0 0.0
        %1183 = vmatprep.subr.mxu0 0.0
        %1184 = vmatpush2.msra.mxu0 0.0
        %1185 = vmatprep.subr.mxu0 0.0
        %1186 = vmatpush2.msra.mxu0 0.0
        %1187 = vmatprep.subr.mxu0 0.0
        %1188 = vmatpush2.msra.mxu0 0.0
        %1189 = vmatprep.subr.mxu0 0.0
        %1190 = vmatpush2.msra.mxu0 0.0
        %1191 = vmatprep.subr.mxu0 0.0
        %1192 = vmatpush2.msra.mxu0 0.0
        %1193 = vmatprep.subr.mxu0 0.0
        %1194 = vmatpush2.msra.mxu0 0.0
        %1195 = vmatprep.subr.mxu0 0.0
        %1196 = vmatpush2.msra.mxu0 0.0
        %1197 = vmatprep.subr.mxu0 0.0
        %1198 = vmatpush2.msra.mxu0 0.0
        %1199 = vmatprep.subr.mxu0 0.0
        %1200 = vmatpush2.msra.mxu0 0.0
        %1201 = vmatprep.subr.mxu0 0.0
        %1202 = vmatpush2.msra.mxu0 0.0
        %1203 = vmatprep.mubr.f32.mxu0 0.0
        %1204 = vmatmul.mubr.f32.gmra.mxu0 %v1134
        %v1205 = vpop.f32.mrf.mxu0
        %v1206 = vadd.f32 0.0, %v1205
        %v1207 = vpop.f32.mrf.mxu0
        %1208 = vmatprep.mubr.f32.mxu0 0.0
        %1209 = vmatmul.mubr.f32.gmra.mxu0 %v1137
        %v1210 = vpop.f32.mrf.mxu0
        %v1211 = vadd.f32 0.0, %v1210
        %v1212 = vpop.f32.mrf.mxu0
        %1213 = vdwg.mxu0
        %1214 = vrot.lane.b32.xlu0 %v724, 16
        %v1215 = vpop.permute.xlu0 %1214
        %1216 = vrot.lane.b32.xlu0 %v726, 16
        %v1217 = vpop.permute.xlu0 %1216
        %1220 = vrot.lane.b32.xlu0 %v924, 32
        %v1221 = vpop.permute.xlu0 %1220
        %1222 = vrot.lane.b32.xlu0 %v926, 32
        %v1223 = vpop.permute.xlu0 %1222
        %1226 = vrot.lane.b32.xlu0 %v1124, 48
        %v1227 = vpop.permute.xlu0 %1226
        %1228 = vrot.lane.b32.xlu0 %v1126, 48
        %v1229 = vpop.permute.xlu0 %1228
        %v1232 = vsel %vm504, %v524, %v1215
        %v1233 = vsel %vm504, %v526, %v1217
        %v1234 = vsel %vm332, %v1232, %v1221
        %v1235 = vsel %vm332, %v1233, %v1223
        %vm1236 = vcmask 392192
        %v1237 = vsel %vm1236, %v1234, %v1227
        %v1238 = vsel %vm1236, %v1235, %v1229
        %1241 = vrot.lane.b32.xlu0 %v806, 8
        %v1242 = vpop.permute.xlu0 %1241
        %1243 = vrot.lane.b32.xlu0 %v811, 8
        %v1244 = vpop.permute.xlu0 %1243
        %1249 = vrot.lane.b32.xlu0 %v1006, 16
        %v1250 = vpop.permute.xlu0 %1249
        %1251 = vrot.lane.b32.xlu0 %v1011, 16
        %v1252 = vpop.permute.xlu0 %1251
        %1257 = vrot.lane.b32.xlu0 %v1206, 24
        %v1258 = vpop.permute.xlu0 %1257
        %1259 = vrot.lane.b32.xlu0 %v1211, 24
        %v1260 = vpop.permute.xlu0 %1259
        %v1263 = vsel %vm420, %v606, %v1242
        %v1264 = vsel %vm420, %v611, %v1244
        %v1265 = vsel %vm504, %v1263, %v1250
        %v1266 = vsel %vm504, %v1264, %v1252
        %vm1267 = vcmask 195584
        %v1268 = vsel %vm1267, %v1265, %v1258
        %v1269 = vsel %vm1267, %v1266, %v1260
        %v1270 = vlaneseq
        %v1271 = vshrl.u32 %v1270, 7
        %v1272 = vsub.s32 0, %v1271
        %v1273 = vrot.slane %v301, %v1272
        %v1275 = vsel %vm332, %v1268, 0
        %v1278 = vsel %vm332, %v1269, 0
        %1280 = vmatprep.subr.mxu0 0.0
        %1281 = vmatpush1.msra.mxu0 0.0
        %1282 = vmatprep.subr.mxu0 0.0
        %1283 = vmatpush1.msra.mxu0 0.0
        %1284 = vmatprep.subr.mxu0 0.0
        %1285 = vmatpush1.msra.mxu0 0.0
        %1286 = vmatprep.subr.mxu0 0.0
        %1287 = vmatpush1.msra.mxu0 0.0
        %1288 = vmatprep.subr.mxu0 0.0
        %1289 = vmatpush1.msra.mxu0 0.0
        %1290 = vmatprep.subr.mxu0 0.0
        %1291 = vmatpush1.msra.mxu0 0.0
        %1292 = vmatprep.subr.mxu0 0.0
        %1293 = vmatpush1.msra.mxu0 0.0
        %1294 = vmatprep.subr.mxu0 0.0
        %1295 = vmatpush1.msra.mxu0 0.0
        %1296 = vmatprep.subr.mxu0 0.0
        %1297 = vmatpush1.msra.mxu0 0.0
        %1298 = vmatprep.subr.mxu0 0.0
        %1299 = vmatpush1.msra.mxu0 0.0
        %1300 = vmatprep.subr.mxu0 0.0
        %1301 = vmatpush1.msra.mxu0 0.0
        %1302 = vmatprep.subr.mxu0 0.0
        %1303 = vmatpush1.msra.mxu0 0.0
        %1304 = vmatprep.subr.mxu0 0.0
        %1305 = vmatpush1.msra.mxu0 %v300
        %1306 = vmatprep.subr.mxu0 0.0
        %1307 = vmatpush1.msra.mxu0 %v299
        %1308 = vmatprep.subr.mxu0 0.0
        %1309 = vmatpush1.msra.mxu0 %v298
        %1310 = vmatprep.subr.mxu0 0.0
        %1311 = vmatpush1.msra.mxu0 %v297
        %1312 = vmatprep.subr.mxu0 0.0
        %1313 = vmatpush2.msra.mxu0 0.0
        %1314 = vmatprep.subr.mxu0 0.0
        %1315 = vmatpush2.msra.mxu0 0.0
        %1316 = vmatprep.subr.mxu0 0.0
        %1317 = vmatpush2.msra.mxu0 0.0
        %1318 = vmatprep.subr.mxu0 0.0
        %1319 = vmatpush2.msra.mxu0 0.0
        %1320 = vmatprep.subr.mxu0 0.0
        %1321 = vmatpush2.msra.mxu0 0.0
        %1322 = vmatprep.subr.mxu0 0.0
        %1323 = vmatpush2.msra.mxu0 0.0
        %1324 = vmatprep.subr.mxu0 0.0
        %1325 = vmatpush2.msra.mxu0 0.0
        %1326 = vmatprep.subr.mxu0 0.0
        %1327 = vmatpush2.msra.mxu0 0.0
        %1328 = vmatprep.subr.mxu0 0.0
        %1329 = vmatpush2.msra.mxu0 0.0
        %1330 = vmatprep.subr.mxu0 0.0
        %1331 = vmatpush2.msra.mxu0 0.0
        %1332 = vmatprep.subr.mxu0 0.0
        %1333 = vmatpush2.msra.mxu0 0.0
        %1334 = vmatprep.subr.mxu0 0.0
        %1335 = vmatpush2.msra.mxu0 0.0
        %1336 = vmatprep.subr.mxu0 0.0
        %1337 = vmatpush2.msra.mxu0 0.0
        %1338 = vmatprep.subr.mxu0 0.0
        %1339 = vmatpush2.msra.mxu0 0.0
        %1340 = vmatprep.subr.mxu0 0.0
        %1341 = vmatpush2.msra.mxu0 0.0
        %1342 = vmatprep.subr.mxu0 0.0
        %1343 = vmatpush2.msra.mxu0 0.0
        %1344 = vmatprep.mubr.f32.mxu0 0.0
        %1345 = vmatmul.mubr.f32.gmra.mxu0 %v1275
        %v1346 = vpop.f32.mrf.mxu0
        %v1347 = vadd.f32 %v1273, %v1346
        %v1348 = vpop.f32.mrf.mxu0
        %1349 = vmatprep.mubr.f32.mxu0 0.0
        %1350 = vmatmul.mubr.f32.gmra.mxu0 %v1278
        %v1351 = vpop.f32.mrf.mxu0
        %v1352 = vadd.f32 %v1273, %v1351
        %v1353 = vpop.f32.mrf.mxu0
        %1354 = vdwg.mxu0
        %v1355 = vadd.f32 %v290, %v1347
        %v1356 = vadd.f32 %v291, %v1352
        %v1357 = vsel %vm332, %v1355, 0.0
        %1358 = vadd.xlane.f32.xlu0 %v1357
        %v1359 = vpop.xlane.xlu0 %1358
        %v1360 = vsel %vm332, %v1356, 0.0
        %1361 = vadd.xlane.f32.xlu0 %v1360
        %v1362 = vpop.xlane.xlu0 %1361
        %v1363 = vrcp.pop 32.0
        %v1364 = vmul.f32 %v1359, %v1363
        %v1365 = vmul.f32 %v1362, %v1363
        %v1366 = vsub.f32 %v1355, %v1364
        %v1367 = vsub.f32 %v1356, %v1365
        %v1368 = vmul.f32 %v1366, %v1366
        %v1369 = vmul.f32 %v1367, %v1367
        %v1370 = vsel %vm332, %v1368, 0.0
        %1371 = vadd.xlane.f32.xlu0 %v1370
        %v1372 = vpop.xlane.xlu0 %1371
        %v1373 = vsel %vm332, %v1369, 0.0
        %1374 = vadd.xlane.f32.xlu0 %v1373
        %v1375 = vpop.xlane.xlu0 %1374
        %v1376 = vmul.f32 %v1372, %v1363
        %v1377 = vmul.f32 %v1375, %v1363
        %v1378 = vadd.f32 %v1376, 1e-05
        %v1379 = vadd.f32 %v1377, 1e-05
        %v1380 = vrsqrt.pop %v1378
        %v1381 = vrsqrt.pop %v1379
        %v1382 = vmul.f32 %v1366, %v1380
        %v1383 = vmul.f32 %v1367, %v1381
        %v1384 = vlaneseq
        %v1385 = vshrl.u32 %v1384, 7
        %v1386 = vsub.s32 0, %v1385
        %v1387 = vrot.slane %v324, %v1386
        %v1388 = vmul.f32 %v1382, %v1387
        %v1389 = vmul.f32 %v1383, %v1387
        %v1390 = vlaneseq
        %v1391 = vshrl.u32 %v1390, 7
        %v1392 = vsub.s32 0, %v1391
        %v1393 = vrot.slane %v325, %v1392
        %v1394 = vadd.f32 %v1388, %v1393
        %v1395 = vadd.f32 %v1389, %v1393
        %v1396 = vlaneseq
        %v1397 = vshrl.u32 %v1396, 7
        %v1398 = vsub.s32 0, %v1397
        %v1399 = vrot.slane %v306, %v1398
        %v1401 = vsel %vm332, %v1394, 0
        %v1404 = vsel %vm332, %v1395, 0
        %1406 = vmatprep.subr.mxu0 0.0
        %1407 = vmatpush1.msra.mxu0 0.0
        %1408 = vmatprep.subr.mxu0 0.0
        %1409 = vmatpush1.msra.mxu0 0.0
        %1410 = vmatprep.subr.mxu0 0.0
        %1411 = vmatpush1.msra.mxu0 0.0
        %1412 = vmatprep.subr.mxu0 0.0
        %1413 = vmatpush1.msra.mxu0 0.0
        %1414 = vmatprep.subr.mxu0 0.0
        %1415 = vmatpush1.msra.mxu0 0.0
        %1416 = vmatprep.subr.mxu0 0.0
        %1417 = vmatpush1.msra.mxu0 0.0
        %1418 = vmatprep.subr.mxu0 0.0
        %1419 = vmatpush1.msra.mxu0 0.0
        %1420 = vmatprep.subr.mxu0 0.0
        %1421 = vmatpush1.msra.mxu0 0.0
        %1422 = vmatprep.subr.mxu0 0.0
        %1423 = vmatpush1.msra.mxu0 0.0
        %1424 = vmatprep.subr.mxu0 0.0
        %1425 = vmatpush1.msra.mxu0 0.0
        %1426 = vmatprep.subr.mxu0 0.0
        %1427 = vmatpush1.msra.mxu0 0.0
        %1428 = vmatprep.subr.mxu0 0.0
        %1429 = vmatpush1.msra.mxu0 0.0
        %1430 = vmatprep.subr.mxu0 0.0
        %1431 = vmatpush1.msra.mxu0 %v305
        %1432 = vmatprep.subr.mxu0 0.0
        %1433 = vmatpush1.msra.mxu0 %v304
        %1434 = vmatprep.subr.mxu0 0.0
        %1435 = vmatpush1.msra.mxu0 %v303
        %1436 = vmatprep.subr.mxu0 0.0
        %1437 = vmatpush1.msra.mxu0 %v302
        %1438 = vmatprep.subr.mxu0 0.0
        %1439 = vmatpush2.msra.mxu0 0.0
        %1440 = vmatprep.subr.mxu0 0.0
        %1441 = vmatpush2.msra.mxu0 0.0
        %1442 = vmatprep.subr.mxu0 0.0
        %1443 = vmatpush2.msra.mxu0 0.0
        %1444 = vmatprep.subr.mxu0 0.0
        %1445 = vmatpush2.msra.mxu0 0.0
        %1446 = vmatprep.subr.mxu0 0.0
        %1447 = vmatpush2.msra.mxu0 0.0
        %1448 = vmatprep.subr.mxu0 0.0
        %1449 = vmatpush2.msra.mxu0 0.0
        %1450 = vmatprep.subr.mxu0 0.0
        %1451 = vmatpush2.msra.mxu0 0.0
        %1452 = vmatprep.subr.mxu0 0.0
        %1453 = vmatpush2.msra.mxu0 0.0
        %1454 = vmatprep.subr.mxu0 0.0
        %1455 = vmatpush2.msra.mxu0 0.0
        %1456 = vmatprep.subr.mxu0 0.0
        %1457 = vmatpush2.msra.mxu0 0.0
        %1458 = vmatprep.subr.mxu0 0.0
        %1459 = vmatpush2.msra.mxu0 0.0
        %1460 = vmatprep.subr.mxu0 0.0
        %1461 = vmatpush2.msra.mxu0 0.0
        %1462 = vmatprep.subr.mxu0 0.0
        %1463 = vmatpush2.msra.mxu0 0.0
        %1464 = vmatprep.subr.mxu0 0.0
        %1465 = vmatpush2.msra.mxu0 0.0
        %1466 = vmatprep.subr.mxu0 0.0
        %1467 = vmatpush2.msra.mxu0 0.0
        %1468 = vmatprep.subr.mxu0 0.0
        %1469 = vmatpush2.msra.mxu0 0.0
        %1470 = vmatprep.mubr.f32.mxu0 0.0
        %1471 = vmatmul.mubr.f32.gmra.mxu0 %v1401
        %v1472 = vpop.f32.mrf.mxu0
        %v1473 = vadd.f32 %v1399, %v1472
        %v1474 = vpop.f32.mrf.mxu0
        %1475 = vmatprep.mubr.f32.mxu0 0.0
        %1476 = vmatmul.mubr.f32.gmra.mxu0 %v1404
        %v1477 = vpop.f32.mrf.mxu0
        %v1478 = vadd.f32 %v1399, %v1477
        %v1479 = vpop.f32.mrf.mxu0
        %1480 = vdwg.mxu0
        %v1481 = vmax.f32 %v1473, 0.0
        %v1482 = vmax.f32 %v1478, 0.0
        %v1483 = vlaneseq
        %v1484 = vshrl.u32 %v1483, 7
        %v1485 = vsub.s32 0, %v1484
        %v1486 = vrot.slane %v323, %v1485
        %1487 = vmatprep.subr.mxu0 0.0
        %1488 = vmatpush1.msra.mxu0 %v322
        %1489 = vmatprep.subr.mxu0 0.0
        %1490 = vmatpush1.msra.mxu0 %v321
        %1491 = vmatprep.subr.mxu0 0.0
        %1492 = vmatpush1.msra.mxu0 %v320
        %1493 = vmatprep.subr.mxu0 0.0
        %1494 = vmatpush1.msra.mxu0 %v319
        %1495 = vmatprep.subr.mxu0 0.0
        %1496 = vmatpush1.msra.mxu0 %v318
        %1497 = vmatprep.subr.mxu0 0.0
        %1498 = vmatpush1.msra.mxu0 %v317
        %1499 = vmatprep.subr.mxu0 0.0
        %1500 = vmatpush1.msra.mxu0 %v316
        %1501 = vmatprep.subr.mxu0 0.0
        %1502 = vmatpush1.msra.mxu0 %v315
        %1503 = vmatprep.subr.mxu0 0.0
        %1504 = vmatpush1.msra.mxu0 %v314
        %1505 = vmatprep.subr.mxu0 0.0
        %1506 = vmatpush1.msra.mxu0 %v313
        %1507 = vmatprep.subr.mxu0 0.0
        %1508 = vmatpush1.msra.mxu0 %v312
        %1509 = vmatprep.subr.mxu0 0.0
        %1510 = vmatpush1.msra.mxu0 %v311
        %1511 = vmatprep.subr.mxu0 0.0
        %1512 = vmatpush1.msra.mxu0 %v310
        %1513 = vmatprep.subr.mxu0 0.0
        %1514 = vmatpush1.msra.mxu0 %v309
        %1515 = vmatprep.subr.mxu0 0.0
        %1516 = vmatpush1.msra.mxu0 %v308
        %1517 = vmatprep.subr.mxu0 0.0
        %1518 = vmatpush1.msra.mxu0 %v307
        %1519 = vmatprep.subr.mxu0 0.0
        %1520 = vmatpush2.msra.mxu0 0.0
        %1521 = vmatprep.subr.mxu0 0.0
        %1522 = vmatpush2.msra.mxu0 0.0
        %1523 = vmatprep.subr.mxu0 0.0
        %1524 = vmatpush2.msra.mxu0 0.0
        %1525 = vmatprep.subr.mxu0 0.0
        %1526 = vmatpush2.msra.mxu0 0.0
        %1527 = vmatprep.subr.mxu0 0.0
        %1528 = vmatpush2.msra.mxu0 0.0
        %1529 = vmatprep.subr.mxu0 0.0
        %1530 = vmatpush2.msra.mxu0 0.0
        %1531 = vmatprep.subr.mxu0 0.0
        %1532 = vmatpush2.msra.mxu0 0.0
        %1533 = vmatprep.subr.mxu0 0.0
        %1534 = vmatpush2.msra.mxu0 0.0
        %1535 = vmatprep.subr.mxu0 0.0
        %1536 = vmatpush2.msra.mxu0 0.0
        %1537 = vmatprep.subr.mxu0 0.0
        %1538 = vmatpush2.msra.mxu0 0.0
        %1539 = vmatprep.subr.mxu0 0.0
        %1540 = vmatpush2.msra.mxu0 0.0
        %1541 = vmatprep.subr.mxu0 0.0
        %1542 = vmatpush2.msra.mxu0 0.0
        %1543 = vmatprep.subr.mxu0 0.0
        %1544 = vmatpush2.msra.mxu0 0.0
        %1545 = vmatprep.subr.mxu0 0.0
        %1546 = vmatpush2.msra.mxu0 0.0
        %1547 = vmatprep.subr.mxu0 0.0
        %1548 = vmatpush2.msra.mxu0 0.0
        %1549 = vmatprep.subr.mxu0 0.0
        %1550 = vmatpush2.msra.mxu0 0.0
        %1551 = vmatprep.mubr.f32.mxu0 0.0
        %1552 = vmatmul.mubr.f32.gmra.mxu0 %v1481
        %v1553 = vpop.f32.mrf.mxu0
        %v1554 = vadd.f32 %v1486, %v1553
        %v1555 = vpop.f32.mrf.mxu0
        %1556 = vmatprep.mubr.f32.mxu0 0.0
        %1557 = vmatmul.mubr.f32.gmra.mxu0 %v1482
        %v1558 = vpop.f32.mrf.mxu0
        %v1559 = vadd.f32 %v1486, %v1558
        %v1560 = vpop.f32.mrf.mxu0
        %1561 = vdwg.mxu0
        %v1562 = vadd.f32 %v1394, %v1554
        %v1563 = vadd.f32 %v1395, %v1559
        %v1564 = vsel %vm332, %v1562, 0.0
        %1565 = vadd.xlane.f32.xlu0 %v1564
        %v1566 = vpop.xlane.xlu0 %1565
        %v1567 = vsel %vm332, %v1563, 0.0
        %1568 = vadd.xlane.f32.xlu0 %v1567
        %v1569 = vpop.xlane.xlu0 %1568
        %v1570 = vmul.f32 %v1566, %v1363
        %v1571 = vmul.f32 %v1569, %v1363
        %v1572 = vsub.f32 %v1562, %v1570
        %v1573 = vsub.f32 %v1563, %v1571
        %v1574 = vmul.f32 %v1572, %v1572
        %v1575 = vmul.f32 %v1573, %v1573
        %v1576 = vsel %vm332, %v1574, 0.0
        %1577 = vadd.xlane.f32.xlu0 %v1576
        %v1578 = vpop.xlane.xlu0 %1577
        %v1579 = vsel %vm332, %v1575, 0.0
        %1580 = vadd.xlane.f32.xlu0 %v1579
        %v1581 = vpop.xlane.xlu0 %1580
        %v1582 = vmul.f32 %v1578, %v1363
        %v1583 = vmul.f32 %v1581, %v1363
        %v1584 = vadd.f32 %v1582, 1e-05
        %v1585 = vadd.f32 %v1583, 1e-05
        %v1586 = vrsqrt.pop %v1584
        %v1587 = vrsqrt.pop %v1585
        %v1588 = vmul.f32 %v1572, %v1586
        %v1589 = vmul.f32 %v1573, %v1587
        %v1590 = vlaneseq
        %v1591 = vshrl.u32 %v1590, 7
        %v1592 = vsub.s32 0, %v1591
        %v1593 = vrot.slane %v326, %v1592
        %v1594 = vmul.f32 %v1588, %v1593
        %v1595 = vmul.f32 %v1589, %v1593
        %v1596 = vlaneseq
        %v1597 = vshrl.u32 %v1596, 7
        %v1598 = vsub.s32 0, %v1597
        %v1599 = vrot.slane %v327, %v1598
        %v1600 = vadd.f32 %v1594, %v1599
        %v1601 = vadd.f32 %v1595, %v1599
        %vm1602 = vcmask 523264
        %1603 = vst.msk [vmem:[%s282] sm:$0xff] %vm1602, %v1237
        %1604 = vst.msk [vmem:[%s282 + $0x8] sm:$0xff] %vm1602, %v1238
        %v1605 = vld [vmem:[#allocation5 + $0xe0] sm:$0xff]
        %v1606 = vld [vmem:[#allocation5 + $0xe8] sm:$0xff]
        %v1607 = vld [vmem:[#allocation5 + $0xf0] sm:$0xff]
        %v1608 = vld [vmem:[#allocation5 + $0xf8] sm:$0xff]
        %v1609 = vld [vmem:[#allocation5 + $0x100] sm:$0xff]
        %v1610 = vld [vmem:[#allocation5 + $0x108] sm:$0xff]
        %v1611 = vld [vmem:[#allocation5 + $0x110] sm:$0xff]
        %v1612 = vld [vmem:[#allocation5 + $0x118] sm:$0xff]
        %v1613 = vld [vmem:[#allocation5 + $0x120] sm:$0xff]
        %v1614 = vld [vmem:[#allocation5 + $0x128] sm:$0xff]
        %v1615 = vld [vmem:[#allocation5 + $0x130] sm:$0xff]
        %v1616 = vld [vmem:[#allocation5 + $0x138] sm:$0xff]
        %v1617 = vld [vmem:[#allocation7 + $0x8] sm:$0x1]
        %v1618 = vld [vmem:[#allocation7 + $0x9] sm:$0x1]
        %v1619 = vld [vmem:[#allocation7 + $0xa] sm:$0x1]
        %v1621 = vrot.slane %v1601, 7
        %vm1624 = vcmask 1040384
        %v1625 = vrot.slane %v1600, 7
        %v1626 = vsel %vm1624, %v1625, %v1621
        %v1629 = vsel %vm1624, %v1621, %v1625
        %vm1630 = vcmask 1046528
        %v1631 = vrot.slane %v1600, 1
        %v1632 = vrot.slane %v1601, 1
        %v1633 = vsel %vm1630, %v1631, %v1632
        %v1636 = vsel %vm1630, %v1632, %v1631
        %1637 = vrot.lane.b32.xlu0 %v1600, 32
        %v1638 = vpop.permute.xlu0 %1637
        %1639 = vrot.lane.b32.xlu0 %v1601, 32
        %v1640 = vpop.permute.xlu0 %1639
        %1644 = vrot.lane.b32.xlu0 %v1633, 64
        %v1645 = vpop.permute.xlu0 %1644
        %1646 = vrot.lane.b32.xlu0 %v1636, 64
        %v1647 = vpop.permute.xlu0 %1646
        %v1650 = vsel %vm332, %v1629, %v1638
        %v1651 = vsel %vm332, %v1626, %v1640
        %v1652 = vsel %vm1602, %v1650, %v1645
        %v1653 = vsel %vm1602, %v1651, %v1647
        %v1654 = vlaneseq
        %v1655 = vshrl.u32 %v1654, 7
        %v1656 = vsub.s32 0, %v1655
        %v1657 = vrot.slane %v1617, %v1656
        %vm1658 = vcmask 785408
        %v1660 = vsel %vm1658, %v1652, 0
        %v1663 = vsel %vm1658, %v1653, 0
        %1665 = vmatprep.subr.mxu0 0.0
        %1666 = vmatpush1.msra.mxu0 0.0
        %1667 = vmatprep.subr.mxu0 0.0
        %1668 = vmatpush1.msra.mxu0 0.0
        %1669 = vmatprep.subr.mxu0 0.0
        %1670 = vmatpush1.msra.mxu0 0.0
        %1671 = vmatprep.subr.mxu0 0.0
        %1672 = vmatpush1.msra.mxu0 0.0
        %1673 = vmatprep.subr.mxu0 0.0
        %1674 = vmatpush1.msra.mxu0 %v1616
        %1675 = vmatprep.subr.mxu0 0.0
        %1676 = vmatpush1.msra.mxu0 %v1615
        %1677 = vmatprep.subr.mxu0 0.0
        %1678 = vmatpush1.msra.mxu0 %v1614
        %1679 = vmatprep.subr.mxu0 0.0
        %1680 = vmatpush1.msra.mxu0 %v1613
        %1681 = vmatprep.subr.mxu0 0.0
        %1682 = vmatpush1.msra.mxu0 %v1612
        %1683 = vmatprep.subr.mxu0 0.0
        %1684 = vmatpush1.msra.mxu0 %v1611
        %1685 = vmatprep.subr.mxu0 0.0
        %1686 = vmatpush1.msra.mxu0 %v1610
        %1687 = vmatprep.subr.mxu0 0.0
        %1688 = vmatpush1.msra.mxu0 %v1609
        %1689 = vmatprep.subr.mxu0 0.0
        %1690 = vmatpush1.msra.mxu0 %v1608
        %1691 = vmatprep.subr.mxu0 0.0
        %1692 = vmatpush1.msra.mxu0 %v1607
        %1693 = vmatprep.subr.mxu0 0.0
        %1694 = vmatpush1.msra.mxu0 %v1606
        %1695 = vmatprep.subr.mxu0 0.0
        %1696 = vmatpush1.msra.mxu0 %v1605
        %1697 = vmatprep.subr.mxu0 0.0
        %1698 = vmatpush2.msra.mxu0 0.0
        %1699 = vmatprep.subr.mxu0 0.0
        %1700 = vmatpush2.msra.mxu0 0.0
        %1701 = vmatprep.subr.mxu0 0.0
        %1702 = vmatpush2.msra.mxu0 0.0
        %1703 = vmatprep.subr.mxu0 0.0
        %1704 = vmatpush2.msra.mxu0 0.0
        %1705 = vmatprep.subr.mxu0 0.0
        %1706 = vmatpush2.msra.mxu0 0.0
        %1707 = vmatprep.subr.mxu0 0.0
        %1708 = vmatpush2.msra.mxu0 0.0
        %1709 = vmatprep.subr.mxu0 0.0
        %1710 = vmatpush2.msra.mxu0 0.0
        %1711 = vmatprep.subr.mxu0 0.0
        %1712 = vmatpush2.msra.mxu0 0.0
        %1713 = vmatprep.subr.mxu0 0.0
        %1714 = vmatpush2.msra.mxu0 0.0
        %1715 = vmatprep.subr.mxu0 0.0
        %1716 = vmatpush2.msra.mxu0 0.0
        %1717 = vmatprep.subr.mxu0 0.0
        %1718 = vmatpush2.msra.mxu0 0.0
        %1719 = vmatprep.subr.mxu0 0.0
        %1720 = vmatpush2.msra.mxu0 0.0
        %1721 = vmatprep.subr.mxu0 0.0
        %1722 = vmatpush2.msra.mxu0 0.0
        %1723 = vmatprep.subr.mxu0 0.0
        %1724 = vmatpush2.msra.mxu0 0.0
        %1725 = vmatprep.subr.mxu0 0.0
        %1726 = vmatpush2.msra.mxu0 0.0
        %1727 = vmatprep.subr.mxu0 0.0
        %1728 = vmatpush2.msra.mxu0 0.0
        %1729 = vmatprep.mubr.f32.mxu0 0.0
        %1730 = vmatmul.mubr.f32.gmra.mxu0 %v1660
        %v1731 = vpop.f32.mrf.mxu0
        %v1732 = vadd.f32 %v1657, %v1731
        %v1733 = vpop.f32.mrf.mxu0
        %1734 = vmatprep.mubr.f32.mxu0 0.0
        %1735 = vmatmul.mubr.f32.gmra.mxu0 %v1663
        %v1736 = vpop.f32.mrf.mxu0
        %v1737 = vadd.f32 %v1657, %v1736
        %v1738 = vpop.f32.mrf.mxu0
        %1739 = vdwg.mxu0
        %v1740 = vlaneseq
        %v1741 = vshrl.u32 %v1740, 7
        %v1742 = vsub.s32 0, %v1741
        %v1743 = vrot.slane %v1618, %v1742
        %v1744 = vmul.f32 %v1732, %v1743
        %v1745 = vmul.f32 %v1737, %v1743
        %v1746 = vlaneseq
        %v1747 = vshrl.u32 %v1746, 7
        %v1748 = vsub.s32 0, %v1747
        %v1749 = vrot.slane %v1619, %v1748
        %v1750 = vadd.f32 %v1744, %v1749
        %v1751 = vadd.f32 %v1745, %v1749
        %vm1752 = vcmp.gt.f32.partialorder %v1750, 0.0
        %vm1753 = vcmp.gt.f32.partialorder %v1751, 0.0
        %v1754 = vmul.f32 %v1750, 1.442695
        %v1755 = vpow.pop %v1754
        %v1756 = vmul.f32 %v1751, 1.442695
        %v1757 = vpow.pop %v1756
        %v1758 = vsub.f32 %v1755, 1.0
        %v1759 = vsub.f32 %v1757, 1.0
        %v1760 = vsel %vm1752, %v1750, %v1758
        %v1761 = vsel %vm1753, %v1751, %v1759
        %v1764 = vrot.slane %v1760, 7
        %v1765 = vrot.slane %v1761, 7
        %v1766 = vsel %vm1624, %v1764, %v1765
        %v1770 = vsel %vm1624, -1e+30, %v1764
        %v1771 = vsel %vm1624, %v1765, -1e+30
        %v1774 = vrot.slane %v1770, 1
        %v1775 = vrot.slane %v1766, 1
        %v1776 = vsel %vm1630, %v1774, %v1775
        %v1777 = vrot.slane %v1771, 1
        %v1778 = vsel %vm1630, %v1775, %v1777
        %v1781 = vmax.f32 %v1770, %v1776
        %v1782 = vmax.f32 %v1766, %v1778
        %vm1783 = vcmask 1045504
        %v1784 = vrot.slane %v1770, 2
        %v1785 = vrot.slane %v1766, 2
        %v1786 = vsel %vm1783, %v1784, %v1785
        %v1787 = vrot.slane %v1771, 2
        %v1788 = vsel %vm1783, %v1785, %v1787
        %v1791 = vmax.f32 %v1781, %v1786
        %v1792 = vmax.f32 %v1782, %v1788
        %v1793 = vlaneseq
        %v1794 = vand.u32 %v1793, 127
        %v1795 = vlaneseq
        %v1796 = vshrl.u32 %v1795, 7
        %v1797 = vmul.u32 %v1796, 2
        %vm1798 = vcmp.eq.s32.totalorder %v1794, %v1797
        %v1799 = vsel %vm1798, 1, 0
        %v1800 = vcvt.s32.f32 %v1799
        %v1802 = vsel %vm504, %v1800, 0
        %1804 = vmatprep.subr.mxu0 0.0
        %1805 = vmatpush1.msra.mxu0 0.0
        %1806 = vmatprep.subr.mxu0 0.0
        %1807 = vmatpush1.msra.mxu0 0.0
        %1808 = vmatprep.subr.mxu0 0.0
        %1809 = vmatpush1.msra.mxu0 0.0
        %1810 = vmatprep.subr.mxu0 0.0
        %1811 = vmatpush1.msra.mxu0 0.0
        %1812 = vmatprep.subr.mxu0 0.0
        %1813 = vmatpush1.msra.mxu0 0.0
        %1814 = vmatprep.subr.mxu0 0.0
        %1815 = vmatpush1.msra.mxu0 0.0
        %1816 = vmatprep.subr.mxu0 0.0
        %1817 = vmatpush1.msra.mxu0 0.0
        %1818 = vmatprep.subr.mxu0 0.0
        %1819 = vmatpush1.msra.mxu0 0.0
        %1820 = vmatprep.subr.mxu0 0.0
        %1821 = vmatpush1.msra.mxu0 0.0
        %1822 = vmatprep.subr.mxu0 0.0
        %1823 = vmatpush1.msra.mxu0 0.0
        %1824 = vmatprep.subr.mxu0 0.0
        %1825 = vmatpush1.msra.mxu0 0.0
        %1826 = vmatprep.subr.mxu0 0.0
        %1827 = vmatpush1.msra.mxu0 0.0
        %1828 = vmatprep.subr.mxu0 0.0
        %1829 = vmatpush1.msra.mxu0 0.0
        %1830 = vmatprep.subr.mxu0 0.0
        %1831 = vmatpush1.msra.mxu0 0.0
        %1832 = vmatprep.subr.mxu0 0.0
        %1833 = vmatpush1.msra.mxu0 %v1792
        %1834 = vmatprep.subr.mxu0 0.0
        %1835 = vmatpush1.msra.mxu0 %v1791
        %1836 = vmatprep.subr.mxu0 0.0
        %1837 = vmatpush2.msra.mxu0 0.0
        %1838 = vmatprep.subr.mxu0 0.0
        %1839 = vmatpush2.msra.mxu0 0.0
        %1840 = vmatprep.subr.mxu0 0.0
        %1841 = vmatpush2.msra.mxu0 0.0
        %1842 = vmatprep.subr.mxu0 0.0
        %1843 = vmatpush2.msra.mxu0 0.0
        %1844 = vmatprep.subr.mxu0 0.0
        %1845 = vmatpush2.msra.mxu0 0.0
        %1846 = vmatprep.subr.mxu0 0.0
        %1847 = vmatpush2.msra.mxu0 0.0
        %1848 = vmatprep.subr.mxu0 0.0
        %1849 = vmatpush2.msra.mxu0 0.0
        %1850 = vmatprep.subr.mxu0 0.0
        %1851 = vmatpush2.msra.mxu0 0.0
        %1852 = vmatprep.subr.mxu0 0.0
        %1853 = vmatpush2.msra.mxu0 0.0
        %1854 = vmatprep.subr.mxu0 0.0
        %1855 = vmatpush2.msra.mxu0 0.0
        %1856 = vmatprep.subr.mxu0 0.0
        %1857 = vmatpush2.msra.mxu0 0.0
        %1858 = vmatprep.subr.mxu0 0.0
        %1859 = vmatpush2.msra.mxu0 0.0
        %1860 = vmatprep.subr.mxu0 0.0
        %1861 = vmatpush2.msra.mxu0 0.0
        %1862 = vmatprep.subr.mxu0 0.0
        %1863 = vmatpush2.msra.mxu0 0.0
        %1864 = vmatprep.subr.mxu0 0.0
        %1865 = vmatpush2.msra.mxu0 0.0
        %1866 = vmatprep.subr.mxu0 0.0
        %1867 = vmatpush2.msra.mxu0 0.0
        %1868 = vmatprep.mubr.f32.mxu0 0.0
        %1869 = vmatmul.mubr.f32.gmra.mxu0 %v1802
        %v1870 = vpop.f32.mrf.mxu0
        %v1871 = vadd.f32 0.0, %v1870
        %v1872 = vpop.f32.mrf.mxu0
        %1873 = vdwg.mxu0
        %v1874 = vld [vmem:[#allocation5 + $0x140] sm:$0xff]
        %v1875 = vld [vmem:[#allocation5 + $0x148] sm:$0xff]
        %v1876 = vld [vmem:[#allocation5 + $0x150] sm:$0xff]
        %v1877 = vld [vmem:[#allocation5 + $0x158] sm:$0xff]
        %v1878 = vld [vmem:[#allocation7 + $0xb] sm:$0x1]
        %v1879 = vld [vmem:[#allocation5 + $0x160] sm:$0xff]
        %v1880 = vld [vmem:[#allocation5 + $0x168] sm:$0xff]
        %v1881 = vld [vmem:[#allocation5 + $0x170] sm:$0xff]
        %v1882 = vld [vmem:[#allocation5 + $0x178] sm:$0xff]
        %v1883 = vld [vmem:[#allocation7 + $0xc] sm:$0x1]
        %v1884 = vld [vmem:[#allocation5 + $0x180] sm:$0xff]
        %v1885 = vld [vmem:[#allocation5 + $0x188] sm:$0xff]
        %v1886 = vld [vmem:[#allocation5 + $0x190] sm:$0xff]
        %v1887 = vld [vmem:[#allocation5 + $0x198] sm:$0xff]
        %v1888 = vld [vmem:[#allocation7 + $0xd] sm:$0x1]
        %v1889 = vld [vmem:[#allocation5 + $0x1a0] sm:$0xff]
        %v1890 = vld [vmem:[#allocation5 + $0x1a8] sm:$0xff]
        %v1891 = vld [vmem:[#allocation5 + $0x1b0] sm:$0xff]
        %v1892 = vld [vmem:[#allocation5 + $0x1b8] sm:$0xff]
        %v1893 = vld [vmem:[#allocation5 + $0x1c0] sm:$0xff]
        %v1894 = vld [vmem:[#allocation5 + $0x1c8] sm:$0xff]
        %v1895 = vld [vmem:[#allocation5 + $0x1d0] sm:$0xff]
        %v1896 = vld [vmem:[#allocation5 + $0x1d8] sm:$0xff]
        %v1897 = vld [vmem:[#allocation5 + $0x1e0] sm:$0xff]
        %v1898 = vld [vmem:[#allocation5 + $0x1e8] sm:$0xff]
        %v1899 = vld [vmem:[#allocation5 + $0x1f0] sm:$0xff]
        %v1900 = vld [vmem:[#allocation5 + $0x1f8] sm:$0xff]
        %v1901 = vld [vmem:[#allocation5 + $0x200] sm:$0xff]
        %v1902 = vld [vmem:[#allocation5 + $0x208] sm:$0xff]
        %v1903 = vld [vmem:[#allocation5 + $0x210] sm:$0xff]
        %v1904 = vld [vmem:[#allocation5 + $0x218] sm:$0xff]
        %v1905 = vld [vmem:[#allocation7 + $0xe] sm:$0x1]
        %v1906 = vld [vmem:[#allocation7 + $0xf] sm:$0x1]
        %v1907 = vld [vmem:[#allocation7 + $0x10] sm:$0x1]
        %v1908 = vld [vmem:[#allocation7 + $0x11] sm:$0x1]
        %v1909 = vld [vmem:[#allocation7 + $0x12] sm:$0x1]
        %v1910 = vlaneseq
        %v1911 = vshrl.u32 %v1910, 7
        %v1912 = vsub.s32 0, %v1911
        %v1913 = vrot.slane %v1878, %v1912
        %v1915 = vsel %vm332, %v1871, 0
        %1917 = vmatprep.subr.mxu0 0.0
        %1918 = vmatpush1.msra.mxu0 0.0
        %1919 = vmatprep.subr.mxu0 0.0
        %1920 = vmatpush1.msra.mxu0 0.0
        %1921 = vmatprep.subr.mxu0 0.0
        %1922 = vmatpush1.msra.mxu0 0.0
        %1923 = vmatprep.subr.mxu0 0.0
        %1924 = vmatpush1.msra.mxu0 0.0
        %1925 = vmatprep.subr.mxu0 0.0
        %1926 = vmatpush1.msra.mxu0 0.0
        %1927 = vmatprep.subr.mxu0 0.0
        %1928 = vmatpush1.msra.mxu0 0.0
        %1929 = vmatprep.subr.mxu0 0.0
        %1930 = vmatpush1.msra.mxu0 0.0
        %1931 = vmatprep.subr.mxu0 0.0
        %1932 = vmatpush1.msra.mxu0 0.0
        %1933 = vmatprep.subr.mxu0 0.0
        %1934 = vmatpush1.msra.mxu0 0.0
        %1935 = vmatprep.subr.mxu0 0.0
        %1936 = vmatpush1.msra.mxu0 0.0
        %1937 = vmatprep.subr.mxu0 0.0
        %1938 = vmatpush1.msra.mxu0 0.0
        %1939 = vmatprep.subr.mxu0 0.0
        %1940 = vmatpush1.msra.mxu0 0.0
        %1941 = vmatprep.subr.mxu0 0.0
        %1942 = vmatpush1.msra.mxu0 %v1877
        %1943 = vmatprep.subr.mxu0 0.0
        %1944 = vmatpush1.msra.mxu0 %v1876
        %1945 = vmatprep.subr.mxu0 0.0
        %1946 = vmatpush1.msra.mxu0 %v1875
        %1947 = vmatprep.subr.mxu0 0.0
        %1948 = vmatpush1.msra.mxu0 %v1874
        %1949 = vmatprep.subr.mxu0 0.0
        %1950 = vmatpush2.msra.mxu0 0.0
        %1951 = vmatprep.subr.mxu0 0.0
        %1952 = vmatpush2.msra.mxu0 0.0
        %1953 = vmatprep.subr.mxu0 0.0
        %1954 = vmatpush2.msra.mxu0 0.0
        %1955 = vmatprep.subr.mxu0 0.0
        %1956 = vmatpush2.msra.mxu0 0.0
        %1957 = vmatprep.subr.mxu0 0.0
        %1958 = vmatpush2.msra.mxu0 0.0
        %1959 = vmatprep.subr.mxu0 0.0
        %1960 = vmatpush2.msra.mxu0 0.0
        %1961 = vmatprep.subr.mxu0 0.0
        %1962 = vmatpush2.msra.mxu0 0.0
        %1963 = vmatprep.subr.mxu0 0.0
        %1964 = vmatpush2.msra.mxu0 0.0
        %1965 = vmatprep.subr.mxu0 0.0
        %1966 = vmatpush2.msra.mxu0 0.0
        %1967 = vmatprep.subr.mxu0 0.0
        %1968 = vmatpush2.msra.mxu0 0.0
        %1969 = vmatprep.subr.mxu0 0.0
        %1970 = vmatpush2.msra.mxu0 0.0
        %1971 = vmatprep.subr.mxu0 0.0
        %1972 = vmatpush2.msra.mxu0 0.0
        %1973 = vmatprep.subr.mxu0 0.0
        %1974 = vmatpush2.msra.mxu0 0.0
        %1975 = vmatprep.subr.mxu0 0.0
        %1976 = vmatpush2.msra.mxu0 0.0
        %1977 = vmatprep.subr.mxu0 0.0
        %1978 = vmatpush2.msra.mxu0 0.0
        %1979 = vmatprep.subr.mxu0 0.0
        %1980 = vmatpush2.msra.mxu0 0.0
        %1981 = vmatprep.mubr.f32.mxu0 0.0
        %1982 = vmatmul.mubr.f32.gmra.mxu0 %v1915
        %v1983 = vpop.f32.mrf.mxu0
        %v1984 = vadd.f32 %v1913, %v1983
        %v1985 = vpop.f32.mrf.mxu0
        %1986 = vdwg.mxu0
        %1988 = vrot.lane.b32.xlu0 %v1984, 96
        %v1989 = vpop.permute.xlu0 %1988
        %v1990 = vsel %vm420, %v1984, 0
        %v1992 = vsel %vm420, %v1989, 0
        %1994 = vmatprep.subr.mxu0 0.0
        %1995 = vmatpush1.xpose.msra.mxu0 0.0
        %1996 = vmatprep.subr.mxu0 0.0
        %1997 = vmatpush1.xpose.msra.mxu0 0.0
        %1998 = vmatprep.subr.mxu0 0.0
        %1999 = vmatpush1.xpose.msra.mxu0 0.0
        %2000 = vmatprep.subr.mxu0 0.0
        %2001 = vmatpush1.xpose.msra.mxu0 0.0
        %2002 = vmatprep.subr.mxu0 0.0
        %2003 = vmatpush1.xpose.msra.mxu0 0.0
        %2004 = vmatprep.subr.mxu0 0.0
        %2005 = vmatpush1.xpose.msra.mxu0 0.0
        %2006 = vmatprep.subr.mxu0 0.0
        %2007 = vmatpush1.xpose.msra.mxu0 0.0
        %2008 = vmatprep.subr.mxu0 0.0
        %2009 = vmatpush1.xpose.msra.mxu0 0.0
        %2010 = vmatprep.subr.mxu0 0.0
        %2011 = vmatpush1.xpose.msra.mxu0 0.0
        %2012 = vmatprep.subr.mxu0 0.0
        %2013 = vmatpush1.xpose.msra.mxu0 0.0
        %2014 = vmatprep.subr.mxu0 0.0
        %2015 = vmatpush1.xpose.msra.mxu0 0.0
        %2016 = vmatprep.subr.mxu0 0.0
        %2017 = vmatpush1.xpose.msra.mxu0 0.0
        %2018 = vmatprep.subr.mxu0 0.0
        %2019 = vmatpush1.xpose.msra.mxu0 0.0
        %2020 = vmatprep.subr.mxu0 0.0
        %2021 = vmatpush1.xpose.msra.mxu0 0.0
        %2022 = vmatprep.subr.mxu0 0.0
        %2023 = vmatpush1.xpose.msra.mxu0 0.0
        %2024 = vmatprep.subr.mxu0 0.0
        %2025 = vmatpush1.xpose.msra.mxu0 %v1992
        %2026 = vmatprep.subr.mxu0 0.0
        %2027 = vmatpush2.xpose.msra.mxu0 0.0
        %2028 = vmatprep.subr.mxu0 0.0
        %2029 = vmatpush2.xpose.msra.mxu0 0.0
        %2030 = vmatprep.subr.mxu0 0.0
        %2031 = vmatpush2.xpose.msra.mxu0 0.0
        %2032 = vmatprep.subr.mxu0 0.0
        %2033 = vmatpush2.xpose.msra.mxu0 0.0
        %2034 = vmatprep.subr.mxu0 0.0
        %2035 = vmatpush2.xpose.msra.mxu0 0.0
        %2036 = vmatprep.subr.mxu0 0.0
        %2037 = vmatpush2.xpose.msra.mxu0 0.0
        %2038 = vmatprep.subr.mxu0 0.0
        %2039 = vmatpush2.xpose.msra.mxu0 0.0
        %2040 = vmatprep.subr.mxu0 0.0
        %2041 = vmatpush2.xpose.msra.mxu0 0.0
        %2042 = vmatprep.subr.mxu0 0.0
        %2043 = vmatpush2.xpose.msra.mxu0 0.0
        %2044 = vmatprep.subr.mxu0 0.0
        %2045 = vmatpush2.xpose.msra.mxu0 0.0
        %2046 = vmatprep.subr.mxu0 0.0
        %2047 = vmatpush2.xpose.msra.mxu0 0.0
        %2048 = vmatprep.subr.mxu0 0.0
        %2049 = vmatpush2.xpose.msra.mxu0 0.0
        %2050 = vmatprep.subr.mxu0 0.0
        %2051 = vmatpush2.xpose.msra.mxu0 0.0
        %2052 = vmatprep.subr.mxu0 0.0
        %2053 = vmatpush2.xpose.msra.mxu0 0.0
        %2054 = vmatprep.subr.mxu0 0.0
        %2055 = vmatpush2.xpose.msra.mxu0 0.0
        %2056 = vmatprep.subr.mxu0 0.0
        %2057 = vmatpush2.xpose.msra.mxu0 0.0
        %2058 = vmatprep.mubr.f32.mxu0 0.0
        %2059 = vmatmul.mubr.f32.gmra.mxu0 %v1990
        %v2060 = vpop.f32.mrf.mxu0
        %v2061 = vadd.f32 0.0, %v2060
        %v2062 = vpop.f32.mrf.mxu0
        %2063 = vdwg.mxu0
        %v2064 = vsel %vm420, %v2061, -inf
        %2065 = vmax.xlane.f32.xlu0 %v2064
        %v2066 = vpop.xlane.xlu0 %2065
        %v2067 = vsub.f32 %v2061, %v2066
        %v2068 = vmul.f32 %v2067, 1.442695
        %v2069 = vpow.pop %v2068
        %v2070 = vsel %vm420, %v2069, 0.0
        %2071 = vadd.xlane.f32.xlu0 %v2070
        %v2072 = vpop.xlane.xlu0 %2071
        %v2073 = vrcp.pop %v2072
        %v2074 = vmul.f32 %v2069, %v2073
        %2075 = vrot.lane.b32.xlu0 %v1984, 64
        %v2076 = vpop.permute.xlu0 %2075
        %v2079 = vsel %vm420, %v2074, 0
        %2081 = vmatprep.subr.mxu0 0.0
        %2082 = vmatpush1.msra.mxu0 0.0
        %2083 = vmatprep.subr.mxu0 0.0
        %2084 = vmatpush1.msra.mxu0 0.0
        %2085 = vmatprep.subr.mxu0 0.0
        %2086 = vmatpush1.msra.mxu0 0.0
        %2087 = vmatprep.subr.mxu0 0.0
        %2088 = vmatpush1.msra.mxu0 0.0
        %2089 = vmatprep.subr.mxu0 0.0
        %2090 = vmatpush1.msra.mxu0 0.0
        %2091 = vmatprep.subr.mxu0 0.0
        %2092 = vmatpush1.msra.mxu0 0.0
        %2093 = vmatprep.subr.mxu0 0.0
        %2094 = vmatpush1.msra.mxu0 0.0
        %2095 = vmatprep.subr.mxu0 0.0
        %2096 = vmatpush1.msra.mxu0 0.0
        %2097 = vmatprep.subr.mxu0 0.0
        %2098 = vmatpush1.msra.mxu0 0.0
        %2099 = vmatprep.subr.mxu0 0.0
        %2100 = vmatpush1.msra.mxu0 0.0
        %2101 = vmatprep.subr.mxu0 0.0
        %2102 = vmatpush1.msra.mxu0 0.0
        %2103 = vmatprep.subr.mxu0 0.0
        %2104 = vmatpush1.msra.mxu0 0.0
        %2105 = vmatprep.subr.mxu0 0.0
        %2106 = vmatpush1.msra.mxu0 0.0
        %2107 = vmatprep.subr.mxu0 0.0
        %2108 = vmatpush1.msra.mxu0 0.0
        %2109 = vmatprep.subr.mxu0 0.0
        %2110 = vmatpush1.msra.mxu0 0.0
        %2111 = vmatprep.subr.mxu0 0.0
        %2112 = vmatpush1.msra.mxu0 %v2076
        %2113 = vmatprep.subr.mxu0 0.0
        %2114 = vmatpush2.msra.mxu0 0.0
        %2115 = vmatprep.subr.mxu0 0.0
        %2116 = vmatpush2.msra.mxu0 0.0
        %2117 = vmatprep.subr.mxu0 0.0
        %2118 = vmatpush2.msra.mxu0 0.0
        %2119 = vmatprep.subr.mxu0 0.0
        %2120 = vmatpush2.msra.mxu0 0.0
        %2121 = vmatprep.subr.mxu0 0.0
        %2122 = vmatpush2.msra.mxu0 0.0
        %2123 = vmatprep.subr.mxu0 0.0
        %2124 = vmatpush2.msra.mxu0 0.0
        %2125 = vmatprep.subr.mxu0 0.0
        %2126 = vmatpush2.msra.mxu0 0.0
        %2127 = vmatprep.subr.mxu0 0.0
        %2128 = vmatpush2.msra.mxu0 0.0
        %2129 = vmatprep.subr.mxu0 0.0
        %2130 = vmatpush2.msra.mxu0 0.0
        %2131 = vmatprep.subr.mxu0 0.0
        %2132 = vmatpush2.msra.mxu0 0.0
        %2133 = vmatprep.subr.mxu0 0.0
        %2134 = vmatpush2.msra.mxu0 0.0
        %2135 = vmatprep.subr.mxu0 0.0
        %2136 = vmatpush2.msra.mxu0 0.0
        %2137 = vmatprep.subr.mxu0 0.0
        %2138 = vmatpush2.msra.mxu0 0.0
        %2139 = vmatprep.subr.mxu0 0.0
        %2140 = vmatpush2.msra.mxu0 0.0
        %2141 = vmatprep.subr.mxu0 0.0
        %2142 = vmatpush2.msra.mxu0 0.0
        %2143 = vmatprep.subr.mxu0 0.0
        %2144 = vmatpush2.msra.mxu0 0.0
        %2145 = vmatprep.mubr.f32.mxu0 0.0
        %2146 = vmatmul.mubr.f32.gmra.mxu0 %v2079
        %v2147 = vpop.f32.mrf.mxu0
        %v2148 = vadd.f32 0.0, %v2147
        %v2149 = vpop.f32.mrf.mxu0
        %2150 = vdwg.mxu0
        %2151 = vrot.lane.b32.xlu0 %v1984, 120
        %v2152 = vpop.permute.xlu0 %2151
        %2153 = vrot.lane.b32.xlu0 %v1984, 88
        %v2154 = vpop.permute.xlu0 %2153
        %v2155 = vsel %vm420, %v2152, 0
        %v2157 = vsel %vm420, %v2154, 0
        %2159 = vmatprep.subr.mxu0 0.0
        %2160 = vmatpush1.xpose.msra.mxu0 0.0
        %2161 = vmatprep.subr.mxu0 0.0
        %2162 = vmatpush1.xpose.msra.mxu0 0.0
        %2163 = vmatprep.subr.mxu0 0.0
        %2164 = vmatpush1.xpose.msra.mxu0 0.0
        %2165 = vmatprep.subr.mxu0 0.0
        %2166 = vmatpush1.xpose.msra.mxu0 0.0
        %2167 = vmatprep.subr.mxu0 0.0
        %2168 = vmatpush1.xpose.msra.mxu0 0.0
        %2169 = vmatprep.subr.mxu0 0.0
        %2170 = vmatpush1.xpose.msra.mxu0 0.0
        %2171 = vmatprep.subr.mxu0 0.0
        %2172 = vmatpush1.xpose.msra.mxu0 0.0
        %2173 = vmatprep.subr.mxu0 0.0
        %2174 = vmatpush1.xpose.msra.mxu0 0.0
        %2175 = vmatprep.subr.mxu0 0.0
        %2176 = vmatpush1.xpose.msra.mxu0 0.0
        %2177 = vmatprep.subr.mxu0 0.0
        %2178 = vmatpush1.xpose.msra.mxu0 0.0
        %2179 = vmatprep.subr.mxu0 0.0
        %2180 = vmatpush1.xpose.msra.mxu0 0.0
        %2181 = vmatprep.subr.mxu0 0.0
        %2182 = vmatpush1.xpose.msra.mxu0 0.0
        %2183 = vmatprep.subr.mxu0 0.0
        %2184 = vmatpush1.xpose.msra.mxu0 0.0
        %2185 = vmatprep.subr.mxu0 0.0
        %2186 = vmatpush1.xpose.msra.mxu0 0.0
        %2187 = vmatprep.subr.mxu0 0.0
        %2188 = vmatpush1.xpose.msra.mxu0 0.0
        %2189 = vmatprep.subr.mxu0 0.0
        %2190 = vmatpush1.xpose.msra.mxu0 %v2157
        %2191 = vmatprep.subr.mxu0 0.0
        %2192 = vmatpush2.xpose.msra.mxu0 0.0
        %2193 = vmatprep.subr.mxu0 0.0
        %2194 = vmatpush2.xpose.msra.mxu0 0.0
        %2195 = vmatprep.subr.mxu0 0.0
        %2196 = vmatpush2.xpose.msra.mxu0 0.0
        %2197 = vmatprep.subr.mxu0 0.0
        %2198 = vmatpush2.xpose.msra.mxu0 0.0
        %2199 = vmatprep.subr.mxu0 0.0
        %2200 = vmatpush2.xpose.msra.mxu0 0.0
        %2201 = vmatprep.subr.mxu0 0.0
        %2202 = vmatpush2.xpose.msra.mxu0 0.0
        %2203 = vmatprep.subr.mxu0 0.0
        %2204 = vmatpush2.xpose.msra.mxu0 0.0
        %2205 = vmatprep.subr.mxu0 0.0
        %2206 = vmatpush2.xpose.msra.mxu0 0.0
        %2207 = vmatprep.subr.mxu0 0.0
        %2208 = vmatpush2.xpose.msra.mxu0 0.0
        %2209 = vmatprep.subr.mxu0 0.0
        %2210 = vmatpush2.xpose.msra.mxu0 0.0
        %2211 = vmatprep.subr.mxu0 0.0
        %2212 = vmatpush2.xpose.msra.mxu0 0.0
        %2213 = vmatprep.subr.mxu0 0.0
        %2214 = vmatpush2.xpose.msra.mxu0 0.0
        %2215 = vmatprep.subr.mxu0 0.0
        %2216 = vmatpush2.xpose.msra.mxu0 0.0
        %2217 = vmatprep.subr.mxu0 0.0
        %2218 = vmatpush2.xpose.msra.mxu0 0.0
        %2219 = vmatprep.subr.mxu0 0.0
        %2220 = vmatpush2.xpose.msra.mxu0 0.0
        %2221 = vmatprep.subr.mxu0 0.0
        %2222 = vmatpush2.xpose.msra.mxu0 0.0
        %2223 = vmatprep.mubr.f32.mxu0 0.0
        %2224 = vmatmul.mubr.f32.gmra.mxu0 %v2155
        %v2225 = vpop.f32.mrf.mxu0
        %v2226 = vadd.f32 0.0, %v2225
        %v2227 = vpop.f32.mrf.mxu0
        %2228 = vdwg.mxu0
        %v2229 = vsel %vm420, %v2226, -inf
        %2230 = vmax.xlane.f32.xlu0 %v2229
        %v2231 = vpop.xlane.xlu0 %2230
        %v2232 = vsub.f32 %v2226, %v2231
        %v2233 = vmul.f32 %v2232, 1.442695
        %v2234 = vpow.pop %v2233
        %v2235 = vsel %vm420, %v2234, 0.0
        %2236 = vadd.xlane.f32.xlu0 %v2235
        %v2237 = vpop.xlane.xlu0 %2236
        %v2238 = vrcp.pop %v2237
        %v2239 = vmul.f32 %v2234, %v2238
        %2240 = vrot.lane.b32.xlu0 %v1984, 56
        %v2241 = vpop.permute.xlu0 %2240
        %v2244 = vsel %vm420, %v2239, 0
        %2246 = vmatprep.subr.mxu0 0.0
        %2247 = vmatpush1.msra.mxu0 0.0
        %2248 = vmatprep.subr.mxu0 0.0
        %2249 = vmatpush1.msra.mxu0 0.0
        %2250 = vmatprep.subr.mxu0 0.0
        %2251 = vmatpush1.msra.mxu0 0.0
        %2252 = vmatprep.subr.mxu0 0.0
        %2253 = vmatpush1.msra.mxu0 0.0
        %2254 = vmatprep.subr.mxu0 0.0
        %2255 = vmatpush1.msra.mxu0 0.0
        %2256 = vmatprep.subr.mxu0 0.0
        %2257 = vmatpush1.msra.mxu0 0.0
        %2258 = vmatprep.subr.mxu0 0.0
        %2259 = vmatpush1.msra.mxu0 0.0
        %2260 = vmatprep.subr.mxu0 0.0
        %2261 = vmatpush1.msra.mxu0 0.0
        %2262 = vmatprep.subr.mxu0 0.0
        %2263 = vmatpush1.msra.mxu0 0.0
        %2264 = vmatprep.subr.mxu0 0.0
        %2265 = vmatpush1.msra.mxu0 0.0
        %2266 = vmatprep.subr.mxu0 0.0
        %2267 = vmatpush1.msra.mxu0 0.0
        %2268 = vmatprep.subr.mxu0 0.0
        %2269 = vmatpush1.msra.mxu0 0.0
        %2270 = vmatprep.subr.mxu0 0.0
        %2271 = vmatpush1.msra.mxu0 0.0
        %2272 = vmatprep.subr.mxu0 0.0
        %2273 = vmatpush1.msra.mxu0 0.0
        %2274 = vmatprep.subr.mxu0 0.0
        %2275 = vmatpush1.msra.mxu0 0.0
        %2276 = vmatprep.subr.mxu0 0.0
        %2277 = vmatpush1.msra.mxu0 %v2241
        %2278 = vmatprep.subr.mxu0 0.0
        %2279 = vmatpush2.msra.mxu0 0.0
        %2280 = vmatprep.subr.mxu0 0.0
        %2281 = vmatpush2.msra.mxu0 0.0
        %2282 = vmatprep.subr.mxu0 0.0
        %2283 = vmatpush2.msra.mxu0 0.0
        %2284 = vmatprep.subr.mxu0 0.0
        %2285 = vmatpush2.msra.mxu0 0.0
        %2286 = vmatprep.subr.mxu0 0.0
        %2287 = vmatpush2.msra.mxu0 0.0
        %2288 = vmatprep.subr.mxu0 0.0
        %2289 = vmatpush2.msra.mxu0 0.0
        %2290 = vmatprep.subr.mxu0 0.0
        %2291 = vmatpush2.msra.mxu0 0.0
        %2292 = vmatprep.subr.mxu0 0.0
        %2293 = vmatpush2.msra.mxu0 0.0
        %2294 = vmatprep.subr.mxu0 0.0
        %2295 = vmatpush2.msra.mxu0 0.0
        %2296 = vmatprep.subr.mxu0 0.0
        %2297 = vmatpush2.msra.mxu0 0.0
        %2298 = vmatprep.subr.mxu0 0.0
        %2299 = vmatpush2.msra.mxu0 0.0
        %2300 = vmatprep.subr.mxu0 0.0
        %2301 = vmatpush2.msra.mxu0 0.0
        %2302 = vmatprep.subr.mxu0 0.0
        %2303 = vmatpush2.msra.mxu0 0.0
        %2304 = vmatprep.subr.mxu0 0.0
        %2305 = vmatpush2.msra.mxu0 0.0
        %2306 = vmatprep.subr.mxu0 0.0
        %2307 = vmatpush2.msra.mxu0 0.0
        %2308 = vmatprep.subr.mxu0 0.0
        %2309 = vmatpush2.msra.mxu0 0.0
        %2310 = vmatprep.mubr.f32.mxu0 0.0
        %2311 = vmatmul.mubr.f32.gmra.mxu0 %v2244
        %v2312 = vpop.f32.mrf.mxu0
        %v2313 = vadd.f32 0.0, %v2312
        %v2314 = vpop.f32.mrf.mxu0
        %2315 = vdwg.mxu0
        %2316 = vrot.lane.b32.xlu0 %v1984, 112
        %v2317 = vpop.permute.xlu0 %2316
        %2318 = vrot.lane.b32.xlu0 %v1984, 80
        %v2319 = vpop.permute.xlu0 %2318
        %v2320 = vsel %vm420, %v2317, 0
        %v2322 = vsel %vm420, %v2319, 0
        %2324 = vmatprep.subr.mxu0 0.0
        %2325 = vmatpush1.xpose.msra.mxu0 0.0
        %2326 = vmatprep.subr.mxu0 0.0
        %2327 = vmatpush1.xpose.msra.mxu0 0.0
        %2328 = vmatprep.subr.mxu0 0.0
        %2329 = vmatpush1.xpose.msra.mxu0 0.0
        %2330 = vmatprep.subr.mxu0 0.0
        %2331 = vmatpush1.xpose.msra.mxu0 0.0
        %2332 = vmatprep.subr.mxu0 0.0
        %2333 = vmatpush1.xpose.msra.mxu0 0.0
        %2334 = vmatprep.subr.mxu0 0.0
        %2335 = vmatpush1.xpose.msra.mxu0 0.0
        %2336 = vmatprep.subr.mxu0 0.0
        %2337 = vmatpush1.xpose.msra.mxu0 0.0
        %2338 = vmatprep.subr.mxu0 0.0
        %2339 = vmatpush1.xpose.msra.mxu0 0.0
        %2340 = vmatprep.subr.mxu0 0.0
        %2341 = vmatpush1.xpose.msra.mxu0 0.0
        %2342 = vmatprep.subr.mxu0 0.0
        %2343 = vmatpush1.xpose.msra.mxu0 0.0
        %2344 = vmatprep.subr.mxu0 0.0
        %2345 = vmatpush1.xpose.msra.mxu0 0.0
        %2346 = vmatprep.subr.mxu0 0.0
        %2347 = vmatpush1.xpose.msra.mxu0 0.0
        %2348 = vmatprep.subr.mxu0 0.0
        %2349 = vmatpush1.xpose.msra.mxu0 0.0
        %2350 = vmatprep.subr.mxu0 0.0
        %2351 = vmatpush1.xpose.msra.mxu0 0.0
        %2352 = vmatprep.subr.mxu0 0.0
        %2353 = vmatpush1.xpose.msra.mxu0 0.0
        %2354 = vmatprep.subr.mxu0 0.0
        %2355 = vmatpush1.xpose.msra.mxu0 %v2322
        %2356 = vmatprep.subr.mxu0 0.0
        %2357 = vmatpush2.xpose.msra.mxu0 0.0
        %2358 = vmatprep.subr.mxu0 0.0
        %2359 = vmatpush2.xpose.msra.mxu0 0.0
        %2360 = vmatprep.subr.mxu0 0.0
        %2361 = vmatpush2.xpose.msra.mxu0 0.0
        %2362 = vmatprep.subr.mxu0 0.0
        %2363 = vmatpush2.xpose.msra.mxu0 0.0
        %2364 = vmatprep.subr.mxu0 0.0
        %2365 = vmatpush2.xpose.msra.mxu0 0.0
        %2366 = vmatprep.subr.mxu0 0.0
        %2367 = vmatpush2.xpose.msra.mxu0 0.0
        %2368 = vmatprep.subr.mxu0 0.0
        %2369 = vmatpush2.xpose.msra.mxu0 0.0
        %2370 = vmatprep.subr.mxu0 0.0
        %2371 = vmatpush2.xpose.msra.mxu0 0.0
        %2372 = vmatprep.subr.mxu0 0.0
        %2373 = vmatpush2.xpose.msra.mxu0 0.0
        %2374 = vmatprep.subr.mxu0 0.0
        %2375 = vmatpush2.xpose.msra.mxu0 0.0
        %2376 = vmatprep.subr.mxu0 0.0
        %2377 = vmatpush2.xpose.msra.mxu0 0.0
        %2378 = vmatprep.subr.mxu0 0.0
        %2379 = vmatpush2.xpose.msra.mxu0 0.0
        %2380 = vmatprep.subr.mxu0 0.0
        %2381 = vmatpush2.xpose.msra.mxu0 0.0
        %2382 = vmatprep.subr.mxu0 0.0
        %2383 = vmatpush2.xpose.msra.mxu0 0.0
        %2384 = vmatprep.subr.mxu0 0.0
        %2385 = vmatpush2.xpose.msra.mxu0 0.0
        %2386 = vmatprep.subr.mxu0 0.0
        %2387 = vmatpush2.xpose.msra.mxu0 0.0
        %2388 = vmatprep.mubr.f32.mxu0 0.0
        %2389 = vmatmul.mubr.f32.gmra.mxu0 %v2320
        %v2390 = vpop.f32.mrf.mxu0
        %v2391 = vadd.f32 0.0, %v2390
        %v2392 = vpop.f32.mrf.mxu0
        %2393 = vdwg.mxu0
        %v2394 = vsel %vm420, %v2391, -inf
        %2395 = vmax.xlane.f32.xlu0 %v2394
        %v2396 = vpop.xlane.xlu0 %2395
        %v2397 = vsub.f32 %v2391, %v2396
        %v2398 = vmul.f32 %v2397, 1.442695
        %v2399 = vpow.pop %v2398
        %v2400 = vsel %vm420, %v2399, 0.0
        %2401 = vadd.xlane.f32.xlu0 %v2400
        %v2402 = vpop.xlane.xlu0 %2401
        %v2403 = vrcp.pop %v2402
        %v2404 = vmul.f32 %v2399, %v2403
        %2405 = vrot.lane.b32.xlu0 %v1984, 48
        %v2406 = vpop.permute.xlu0 %2405
        %v2409 = vsel %vm420, %v2404, 0
        %2411 = vmatprep.subr.mxu0 0.0
        %2412 = vmatpush1.msra.mxu0 0.0
        %2413 = vmatprep.subr.mxu0 0.0
        %2414 = vmatpush1.msra.mxu0 0.0
        %2415 = vmatprep.subr.mxu0 0.0
        %2416 = vmatpush1.msra.mxu0 0.0
        %2417 = vmatprep.subr.mxu0 0.0
        %2418 = vmatpush1.msra.mxu0 0.0
        %2419 = vmatprep.subr.mxu0 0.0
        %2420 = vmatpush1.msra.mxu0 0.0
        %2421 = vmatprep.subr.mxu0 0.0
        %2422 = vmatpush1.msra.mxu0 0.0
        %2423 = vmatprep.subr.mxu0 0.0
        %2424 = vmatpush1.msra.mxu0 0.0
        %2425 = vmatprep.subr.mxu0 0.0
        %2426 = vmatpush1.msra.mxu0 0.0
        %2427 = vmatprep.subr.mxu0 0.0
        %2428 = vmatpush1.msra.mxu0 0.0
        %2429 = vmatprep.subr.mxu0 0.0
        %2430 = vmatpush1.msra.mxu0 0.0
        %2431 = vmatprep.subr.mxu0 0.0
        %2432 = vmatpush1.msra.mxu0 0.0
        %2433 = vmatprep.subr.mxu0 0.0
        %2434 = vmatpush1.msra.mxu0 0.0
        %2435 = vmatprep.subr.mxu0 0.0
        %2436 = vmatpush1.msra.mxu0 0.0
        %2437 = vmatprep.subr.mxu0 0.0
        %2438 = vmatpush1.msra.mxu0 0.0
        %2439 = vmatprep.subr.mxu0 0.0
        %2440 = vmatpush1.msra.mxu0 0.0
        %2441 = vmatprep.subr.mxu0 0.0
        %2442 = vmatpush1.msra.mxu0 %v2406
        %2443 = vmatprep.subr.mxu0 0.0
        %2444 = vmatpush2.msra.mxu0 0.0
        %2445 = vmatprep.subr.mxu0 0.0
        %2446 = vmatpush2.msra.mxu0 0.0
        %2447 = vmatprep.subr.mxu0 0.0
        %2448 = vmatpush2.msra.mxu0 0.0
        %2449 = vmatprep.subr.mxu0 0.0
        %2450 = vmatpush2.msra.mxu0 0.0
        %2451 = vmatprep.subr.mxu0 0.0
        %2452 = vmatpush2.msra.mxu0 0.0
        %2453 = vmatprep.subr.mxu0 0.0
        %2454 = vmatpush2.msra.mxu0 0.0
        %2455 = vmatprep.subr.mxu0 0.0
        %2456 = vmatpush2.msra.mxu0 0.0
        %2457 = vmatprep.subr.mxu0 0.0
        %2458 = vmatpush2.msra.mxu0 0.0
        %2459 = vmatprep.subr.mxu0 0.0
        %2460 = vmatpush2.msra.mxu0 0.0
        %2461 = vmatprep.subr.mxu0 0.0
        %2462 = vmatpush2.msra.mxu0 0.0
        %2463 = vmatprep.subr.mxu0 0.0
        %2464 = vmatpush2.msra.mxu0 0.0
        %2465 = vmatprep.subr.mxu0 0.0
        %2466 = vmatpush2.msra.mxu0 0.0
        %2467 = vmatprep.subr.mxu0 0.0
        %2468 = vmatpush2.msra.mxu0 0.0
        %2469 = vmatprep.subr.mxu0 0.0
        %2470 = vmatpush2.msra.mxu0 0.0
        %2471 = vmatprep.subr.mxu0 0.0
        %2472 = vmatpush2.msra.mxu0 0.0
        %2473 = vmatprep.subr.mxu0 0.0
        %2474 = vmatpush2.msra.mxu0 0.0
        %2475 = vmatprep.mubr.f32.mxu0 0.0
        %2476 = vmatmul.mubr.f32.gmra.mxu0 %v2409
        %v2477 = vpop.f32.mrf.mxu0
        %v2478 = vadd.f32 0.0, %v2477
        %v2479 = vpop.f32.mrf.mxu0
        %2480 = vdwg.mxu0
        %2481 = vrot.lane.b32.xlu0 %v1984, 104
        %v2482 = vpop.permute.xlu0 %2481
        %2483 = vrot.lane.b32.xlu0 %v1984, 72
        %v2484 = vpop.permute.xlu0 %2483
        %v2485 = vsel %vm420, %v2482, 0
        %v2487 = vsel %vm420, %v2484, 0
        %2489 = vmatprep.subr.mxu0 0.0
        %2490 = vmatpush1.xpose.msra.mxu0 0.0
        %2491 = vmatprep.subr.mxu0 0.0
        %2492 = vmatpush1.xpose.msra.mxu0 0.0
        %2493 = vmatprep.subr.mxu0 0.0
        %2494 = vmatpush1.xpose.msra.mxu0 0.0
        %2495 = vmatprep.subr.mxu0 0.0
        %2496 = vmatpush1.xpose.msra.mxu0 0.0
        %2497 = vmatprep.subr.mxu0 0.0
        %2498 = vmatpush1.xpose.msra.mxu0 0.0
        %2499 = vmatprep.subr.mxu0 0.0
        %2500 = vmatpush1.xpose.msra.mxu0 0.0
        %2501 = vmatprep.subr.mxu0 0.0
        %2502 = vmatpush1.xpose.msra.mxu0 0.0
        %2503 = vmatprep.subr.mxu0 0.0
        %2504 = vmatpush1.xpose.msra.mxu0 0.0
        %2505 = vmatprep.subr.mxu0 0.0
        %2506 = vmatpush1.xpose.msra.mxu0 0.0
        %2507 = vmatprep.subr.mxu0 0.0
        %2508 = vmatpush1.xpose.msra.mxu0 0.0
        %2509 = vmatprep.subr.mxu0 0.0
        %2510 = vmatpush1.xpose.msra.mxu0 0.0
        %2511 = vmatprep.subr.mxu0 0.0
        %2512 = vmatpush1.xpose.msra.mxu0 0.0
        %2513 = vmatprep.subr.mxu0 0.0
        %2514 = vmatpush1.xpose.msra.mxu0 0.0
        %2515 = vmatprep.subr.mxu0 0.0
        %2516 = vmatpush1.xpose.msra.mxu0 0.0
        %2517 = vmatprep.subr.mxu0 0.0
        %2518 = vmatpush1.xpose.msra.mxu0 0.0
        %2519 = vmatprep.subr.mxu0 0.0
        %2520 = vmatpush1.xpose.msra.mxu0 %v2487
        %2521 = vmatprep.subr.mxu0 0.0
        %2522 = vmatpush2.xpose.msra.mxu0 0.0
        %2523 = vmatprep.subr.mxu0 0.0
        %2524 = vmatpush2.xpose.msra.mxu0 0.0
        %2525 = vmatprep.subr.mxu0 0.0
        %2526 = vmatpush2.xpose.msra.mxu0 0.0
        %2527 = vmatprep.subr.mxu0 0.0
        %2528 = vmatpush2.xpose.msra.mxu0 0.0
        %2529 = vmatprep.subr.mxu0 0.0
        %2530 = vmatpush2.xpose.msra.mxu0 0.0
        %2531 = vmatprep.subr.mxu0 0.0
        %2532 = vmatpush2.xpose.msra.mxu0 0.0
        %2533 = vmatprep.subr.mxu0 0.0
        %2534 = vmatpush2.xpose.msra.mxu0 0.0
        %2535 = vmatprep.subr.mxu0 0.0
        %2536 = vmatpush2.xpose.msra.mxu0 0.0
        %2537 = vmatprep.subr.mxu0 0.0
        %2538 = vmatpush2.xpose.msra.mxu0 0.0
        %2539 = vmatprep.subr.mxu0 0.0
        %2540 = vmatpush2.xpose.msra.mxu0 0.0
        %2541 = vmatprep.subr.mxu0 0.0
        %2542 = vmatpush2.xpose.msra.mxu0 0.0
        %2543 = vmatprep.subr.mxu0 0.0
        %2544 = vmatpush2.xpose.msra.mxu0 0.0
        %2545 = vmatprep.subr.mxu0 0.0
        %2546 = vmatpush2.xpose.msra.mxu0 0.0
        %2547 = vmatprep.subr.mxu0 0.0
        %2548 = vmatpush2.xpose.msra.mxu0 0.0
        %2549 = vmatprep.subr.mxu0 0.0
        %2550 = vmatpush2.xpose.msra.mxu0 0.0
        %2551 = vmatprep.subr.mxu0 0.0
        %2552 = vmatpush2.xpose.msra.mxu0 0.0
        %2553 = vmatprep.mubr.f32.mxu0 0.0
        %2554 = vmatmul.mubr.f32.gmra.mxu0 %v2485
        %v2555 = vpop.f32.mrf.mxu0
        %v2556 = vadd.f32 0.0, %v2555
        %v2557 = vpop.f32.mrf.mxu0
        %2558 = vdwg.mxu0
        %v2559 = vsel %vm420, %v2556, -inf
        %2560 = vmax.xlane.f32.xlu0 %v2559
        %v2561 = vpop.xlane.xlu0 %2560
        %v2562 = vsub.f32 %v2556, %v2561
        %v2563 = vmul.f32 %v2562, 1.442695
        %v2564 = vpow.pop %v2563
        %v2565 = vsel %vm420, %v2564, 0.0
        %2566 = vadd.xlane.f32.xlu0 %v2565
        %v2567 = vpop.xlane.xlu0 %2566
        %v2568 = vrcp.pop %v2567
        %v2569 = vmul.f32 %v2564, %v2568
        %2570 = vrot.lane.b32.xlu0 %v1984, 40
        %v2571 = vpop.permute.xlu0 %2570
        %v2574 = vsel %vm420, %v2569, 0
        %2576 = vmatprep.subr.mxu0 0.0
        %2577 = vmatpush1.msra.mxu0 0.0
        %2578 = vmatprep.subr.mxu0 0.0
        %2579 = vmatpush1.msra.mxu0 0.0
        %2580 = vmatprep.subr.mxu0 0.0
        %2581 = vmatpush1.msra.mxu0 0.0
        %2582 = vmatprep.subr.mxu0 0.0
        %2583 = vmatpush1.msra.mxu0 0.0
        %2584 = vmatprep.subr.mxu0 0.0
        %2585 = vmatpush1.msra.mxu0 0.0
        %2586 = vmatprep.subr.mxu0 0.0
        %2587 = vmatpush1.msra.mxu0 0.0
        %2588 = vmatprep.subr.mxu0 0.0
        %2589 = vmatpush1.msra.mxu0 0.0
        %2590 = vmatprep.subr.mxu0 0.0
        %2591 = vmatpush1.msra.mxu0 0.0
        %2592 = vmatprep.subr.mxu0 0.0
        %2593 = vmatpush1.msra.mxu0 0.0
        %2594 = vmatprep.subr.mxu0 0.0
        %2595 = vmatpush1.msra.mxu0 0.0
        %2596 = vmatprep.subr.mxu0 0.0
        %2597 = vmatpush1.msra.mxu0 0.0
        %2598 = vmatprep.subr.mxu0 0.0
        %2599 = vmatpush1.msra.mxu0 0.0
        %2600 = vmatprep.subr.mxu0 0.0
        %2601 = vmatpush1.msra.mxu0 0.0
        %2602 = vmatprep.subr.mxu0 0.0
        %2603 = vmatpush1.msra.mxu0 0.0
        %2604 = vmatprep.subr.mxu0 0.0
        %2605 = vmatpush1.msra.mxu0 0.0
        %2606 = vmatprep.subr.mxu0 0.0
        %2607 = vmatpush1.msra.mxu0 %v2571
        %2608 = vmatprep.subr.mxu0 0.0
        %2609 = vmatpush2.msra.mxu0 0.0
        %2610 = vmatprep.subr.mxu0 0.0
        %2611 = vmatpush2.msra.mxu0 0.0
        %2612 = vmatprep.subr.mxu0 0.0
        %2613 = vmatpush2.msra.mxu0 0.0
        %2614 = vmatprep.subr.mxu0 0.0
        %2615 = vmatpush2.msra.mxu0 0.0
        %2616 = vmatprep.subr.mxu0 0.0
        %2617 = vmatpush2.msra.mxu0 0.0
        %2618 = vmatprep.subr.mxu0 0.0
        %2619 = vmatpush2.msra.mxu0 0.0
        %2620 = vmatprep.subr.mxu0 0.0
        %2621 = vmatpush2.msra.mxu0 0.0
        %2622 = vmatprep.subr.mxu0 0.0
        %2623 = vmatpush2.msra.mxu0 0.0
        %2624 = vmatprep.subr.mxu0 0.0
        %2625 = vmatpush2.msra.mxu0 0.0
        %2626 = vmatprep.subr.mxu0 0.0
        %2627 = vmatpush2.msra.mxu0 0.0
        %2628 = vmatprep.subr.mxu0 0.0
        %2629 = vmatpush2.msra.mxu0 0.0
        %2630 = vmatprep.subr.mxu0 0.0
        %2631 = vmatpush2.msra.mxu0 0.0
        %2632 = vmatprep.subr.mxu0 0.0
        %2633 = vmatpush2.msra.mxu0 0.0
        %2634 = vmatprep.subr.mxu0 0.0
        %2635 = vmatpush2.msra.mxu0 0.0
        %2636 = vmatprep.subr.mxu0 0.0
        %2637 = vmatpush2.msra.mxu0 0.0
        %2638 = vmatprep.subr.mxu0 0.0
        %2639 = vmatpush2.msra.mxu0 0.0
        %2640 = vmatprep.mubr.f32.mxu0 0.0
        %2641 = vmatmul.mubr.f32.gmra.mxu0 %v2574
        %v2642 = vpop.f32.mrf.mxu0
        %v2643 = vadd.f32 0.0, %v2642
        %v2644 = vpop.f32.mrf.mxu0
        %2645 = vdwg.mxu0
        %2646 = vrot.lane.b32.xlu0 %v2239, 8
        %v2647 = vpop.permute.xlu0 %2646
        %2649 = vrot.lane.b32.xlu0 %v2404, 16
        %v2650 = vpop.permute.xlu0 %2649
        %2652 = vrot.lane.b32.xlu0 %v2569, 24
        %v2653 = vpop.permute.xlu0 %2652
        %v2655 = vsel %vm420, %v2074, %v2647
        %v2656 = vsel %vm504, %v2655, %v2650
        %v2657 = vsel %vm1267, %v2656, %v2653
        %2659 = vrot.lane.b32.xlu0 %v2313, 8
        %v2660 = vpop.permute.xlu0 %2659
        %2663 = vrot.lane.b32.xlu0 %v2478, 16
        %v2664 = vpop.permute.xlu0 %2663
        %2667 = vrot.lane.b32.xlu0 %v2643, 24
        %v2668 = vpop.permute.xlu0 %2667
        %v2670 = vsel %vm420, %v2148, %v2660
        %v2671 = vsel %vm504, %v2670, %v2664
        %v2672 = vsel %vm1267, %v2671, %v2668
        %v2673 = vlaneseq
        %v2674 = vshrl.u32 %v2673, 7
        %v2675 = vsub.s32 0, %v2674
        %v2676 = vrot.slane %v1883, %v2675
        %v2678 = vsel %vm332, %v2672, 0
        %2680 = vmatprep.subr.mxu0 0.0
        %2681 = vmatpush1.msra.mxu0 0.0
        %2682 = vmatprep.subr.mxu0 0.0
        %2683 = vmatpush1.msra.mxu0 0.0
        %2684 = vmatprep.subr.mxu0 0.0
        %2685 = vmatpush1.msra.mxu0 0.0
        %2686 = vmatprep.subr.mxu0 0.0
        %2687 = vmatpush1.msra.mxu0 0.0
        %2688 = vmatprep.subr.mxu0 0.0
        %2689 = vmatpush1.msra.mxu0 0.0
        %2690 = vmatprep.subr.mxu0 0.0
        %2691 = vmatpush1.msra.mxu0 0.0
        %2692 = vmatprep.subr.mxu0 0.0
        %2693 = vmatpush1.msra.mxu0 0.0
        %2694 = vmatprep.subr.mxu0 0.0
        %2695 = vmatpush1.msra.mxu0 0.0
        %2696 = vmatprep.subr.mxu0 0.0
        %2697 = vmatpush1.msra.mxu0 0.0
        %2698 = vmatprep.subr.mxu0 0.0
        %2699 = vmatpush1.msra.mxu0 0.0
        %2700 = vmatprep.subr.mxu0 0.0
        %2701 = vmatpush1.msra.mxu0 0.0
        %2702 = vmatprep.subr.mxu0 0.0
        %2703 = vmatpush1.msra.mxu0 0.0
        %2704 = vmatprep.subr.mxu0 0.0
        %2705 = vmatpush1.msra.mxu0 %v1882
        %2706 = vmatprep.subr.mxu0 0.0
        %2707 = vmatpush1.msra.mxu0 %v1881
        %2708 = vmatprep.subr.mxu0 0.0
        %2709 = vmatpush1.msra.mxu0 %v1880
        %2710 = vmatprep.subr.mxu0 0.0
        %2711 = vmatpush1.msra.mxu0 %v1879
        %2712 = vmatprep.subr.mxu0 0.0
        %2713 = vmatpush2.msra.mxu0 0.0
        %2714 = vmatprep.subr.mxu0 0.0
        %2715 = vmatpush2.msra.mxu0 0.0
        %2716 = vmatprep.subr.mxu0 0.0
        %2717 = vmatpush2.msra.mxu0 0.0
        %2718 = vmatprep.subr.mxu0 0.0
        %2719 = vmatpush2.msra.mxu0 0.0
        %2720 = vmatprep.subr.mxu0 0.0
        %2721 = vmatpush2.msra.mxu0 0.0
        %2722 = vmatprep.subr.mxu0 0.0
        %2723 = vmatpush2.msra.mxu0 0.0
        %2724 = vmatprep.subr.mxu0 0.0
        %2725 = vmatpush2.msra.mxu0 0.0
        %2726 = vmatprep.subr.mxu0 0.0
        %2727 = vmatpush2.msra.mxu0 0.0
        %2728 = vmatprep.subr.mxu0 0.0
        %2729 = vmatpush2.msra.mxu0 0.0
        %2730 = vmatprep.subr.mxu0 0.0
        %2731 = vmatpush2.msra.mxu0 0.0
        %2732 = vmatprep.subr.mxu0 0.0
        %2733 = vmatpush2.msra.mxu0 0.0
        %2734 = vmatprep.subr.mxu0 0.0
        %2735 = vmatpush2.msra.mxu0 0.0
        %2736 = vmatprep.subr.mxu0 0.0
        %2737 = vmatpush2.msra.mxu0 0.0
        %2738 = vmatprep.subr.mxu0 0.0
        %2739 = vmatpush2.msra.mxu0 0.0
        %2740 = vmatprep.subr.mxu0 0.0
        %2741 = vmatpush2.msra.mxu0 0.0
        %2742 = vmatprep.subr.mxu0 0.0
        %2743 = vmatpush2.msra.mxu0 0.0
        %2744 = vmatprep.mubr.f32.mxu0 0.0
        %2745 = vmatmul.mubr.f32.gmra.mxu0 %v2678
        %v2746 = vpop.f32.mrf.mxu0
        %v2747 = vadd.f32 %v2676, %v2746
        %v2748 = vpop.f32.mrf.mxu0
        %2749 = vdwg.mxu0
        %v2750 = vadd.f32 %v1871, %v2747
        %v2751 = vsel %vm332, %v2750, 0.0
        %2752 = vadd.xlane.f32.xlu0 %v2751
        %v2753 = vpop.xlane.xlu0 %2752
        %v2754 = vmul.f32 %v2753, %v1363
        %v2755 = vsub.f32 %v2750, %v2754
        %v2756 = vmul.f32 %v2755, %v2755
        %v2757 = vsel %vm332, %v2756, 0.0
        %2758 = vadd.xlane.f32.xlu0 %v2757
        %v2759 = vpop.xlane.xlu0 %2758
        %v2760 = vmul.f32 %v2759, %v1363
        %v2761 = vadd.f32 %v2760, 1e-05
        %v2762 = vrsqrt.pop %v2761
        %v2763 = vmul.f32 %v2755, %v2762
        %v2764 = vlaneseq
        %v2765 = vshrl.u32 %v2764, 7
        %v2766 = vsub.s32 0, %v2765
        %v2767 = vrot.slane %v1906, %v2766
        %v2768 = vmul.f32 %v2763, %v2767
        %v2769 = vlaneseq
        %v2770 = vshrl.u32 %v2769, 7
        %v2771 = vsub.s32 0, %v2770
        %v2772 = vrot.slane %v1907, %v2771
        %v2773 = vadd.f32 %v2768, %v2772
        %v2774 = vlaneseq
        %v2775 = vshrl.u32 %v2774, 7
        %v2776 = vsub.s32 0, %v2775
        %v2777 = vrot.slane %v1888, %v2776
        %v2779 = vsel %vm332, %v2773, 0
        %2781 = vmatprep.subr.mxu0 0.0
        %2782 = vmatpush1.msra.mxu0 0.0
        %2783 = vmatprep.subr.mxu0 0.0
        %2784 = vmatpush1.msra.mxu0 0.0
        %2785 = vmatprep.subr.mxu0 0.0
        %2786 = vmatpush1.msra.mxu0 0.0
        %2787 = vmatprep.subr.mxu0 0.0
        %2788 = vmatpush1.msra.mxu0 0.0
        %2789 = vmatprep.subr.mxu0 0.0
        %2790 = vmatpush1.msra.mxu0 0.0
        %2791 = vmatprep.subr.mxu0 0.0
        %2792 = vmatpush1.msra.mxu0 0.0
        %2793 = vmatprep.subr.mxu0 0.0
        %2794 = vmatpush1.msra.mxu0 0.0
        %2795 = vmatprep.subr.mxu0 0.0
        %2796 = vmatpush1.msra.mxu0 0.0
        %2797 = vmatprep.subr.mxu0 0.0
        %2798 = vmatpush1.msra.mxu0 0.0
        %2799 = vmatprep.subr.mxu0 0.0
        %2800 = vmatpush1.msra.mxu0 0.0
        %2801 = vmatprep.subr.mxu0 0.0
        %2802 = vmatpush1.msra.mxu0 0.0
        %2803 = vmatprep.subr.mxu0 0.0
        %2804 = vmatpush1.msra.mxu0 0.0
        %2805 = vmatprep.subr.mxu0 0.0
        %2806 = vmatpush1.msra.mxu0 %v1887
        %2807 = vmatprep.subr.mxu0 0.0
        %2808 = vmatpush1.msra.mxu0 %v1886
        %2809 = vmatprep.subr.mxu0 0.0
        %2810 = vmatpush1.msra.mxu0 %v1885
        %2811 = vmatprep.subr.mxu0 0.0
        %2812 = vmatpush1.msra.mxu0 %v1884
        %2813 = vmatprep.subr.mxu0 0.0
        %2814 = vmatpush2.msra.mxu0 0.0
        %2815 = vmatprep.subr.mxu0 0.0
        %2816 = vmatpush2.msra.mxu0 0.0
        %2817 = vmatprep.subr.mxu0 0.0
        %2818 = vmatpush2.msra.mxu0 0.0
        %2819 = vmatprep.subr.mxu0 0.0
        %2820 = vmatpush2.msra.mxu0 0.0
        %2821 = vmatprep.subr.mxu0 0.0
        %2822 = vmatpush2.msra.mxu0 0.0
        %2823 = vmatprep.subr.mxu0 0.0
        %2824 = vmatpush2.msra.mxu0 0.0
        %2825 = vmatprep.subr.mxu0 0.0
        %2826 = vmatpush2.msra.mxu0 0.0
        %2827 = vmatprep.subr.mxu0 0.0
        %2828 = vmatpush2.msra.mxu0 0.0
        %2829 = vmatprep.subr.mxu0 0.0
        %2830 = vmatpush2.msra.mxu0 0.0
        %2831 = vmatprep.subr.mxu0 0.0
        %2832 = vmatpush2.msra.mxu0 0.0
        %2833 = vmatprep.subr.mxu0 0.0
        %2834 = vmatpush2.msra.mxu0 0.0
        %2835 = vmatprep.subr.mxu0 0.0
        %2836 = vmatpush2.msra.mxu0 0.0
        %2837 = vmatprep.subr.mxu0 0.0
        %2838 = vmatpush2.msra.mxu0 0.0
        %2839 = vmatprep.subr.mxu0 0.0
        %2840 = vmatpush2.msra.mxu0 0.0
        %2841 = vmatprep.subr.mxu0 0.0
        %2842 = vmatpush2.msra.mxu0 0.0
        %2843 = vmatprep.subr.mxu0 0.0
        %2844 = vmatpush2.msra.mxu0 0.0
        %2845 = vmatprep.mubr.f32.mxu0 0.0
        %2846 = vmatmul.mubr.f32.gmra.mxu0 %v2779
        %v2847 = vpop.f32.mrf.mxu0
        %v2848 = vadd.f32 %v2777, %v2847
        %v2849 = vpop.f32.mrf.mxu0
        %2850 = vdwg.mxu0
        %v2851 = vmax.f32 %v2848, 0.0
        %v2852 = vlaneseq
        %v2853 = vshrl.u32 %v2852, 7
        %v2854 = vsub.s32 0, %v2853
        %v2855 = vrot.slane %v1905, %v2854
        %2856 = vmatprep.subr.mxu0 0.0
        %2857 = vmatpush1.msra.mxu0 %v1904
        %2858 = vmatprep.subr.mxu0 0.0
        %2859 = vmatpush1.msra.mxu0 %v1903
        %2860 = vmatprep.subr.mxu0 0.0
        %2861 = vmatpush1.msra.mxu0 %v1902
        %2862 = vmatprep.subr.mxu0 0.0
        %2863 = vmatpush1.msra.mxu0 %v1901
        %2864 = vmatprep.subr.mxu0 0.0
        %2865 = vmatpush1.msra.mxu0 %v1900
        %2866 = vmatprep.subr.mxu0 0.0
        %2867 = vmatpush1.msra.mxu0 %v1899
        %2868 = vmatprep.subr.mxu0 0.0
        %2869 = vmatpush1.msra.mxu0 %v1898
        %2870 = vmatprep.subr.mxu0 0.0
        %2871 = vmatpush1.msra.mxu0 %v1897
        %2872 = vmatprep.subr.mxu0 0.0
        %2873 = vmatpush1.msra.mxu0 %v1896
        %2874 = vmatprep.subr.mxu0 0.0
        %2875 = vmatpush1.msra.mxu0 %v1895
        %2876 = vmatprep.subr.mxu0 0.0
        %2877 = vmatpush1.msra.mxu0 %v1894
        %2878 = vmatprep.subr.mxu0 0.0
        %2879 = vmatpush1.msra.mxu0 %v1893
        %2880 = vmatprep.subr.mxu0 0.0
        %2881 = vmatpush1.msra.mxu0 %v1892
        %2882 = vmatprep.subr.mxu0 0.0
        %2883 = vmatpush1.msra.mxu0 %v1891
        %2884 = vmatprep.subr.mxu0 0.0
        %2885 = vmatpush1.msra.mxu0 %v1890
        %2886 = vmatprep.subr.mxu0 0.0
        %2887 = vmatpush1.msra.mxu0 %v1889
        %2888 = vmatprep.subr.mxu0 0.0
        %2889 = vmatpush2.msra.mxu0 0.0
        %2890 = vmatprep.subr.mxu0 0.0
        %2891 = vmatpush2.msra.mxu0 0.0
        %2892 = vmatprep.subr.mxu0 0.0
        %2893 = vmatpush2.msra.mxu0 0.0
        %2894 = vmatprep.subr.mxu0 0.0
        %2895 = vmatpush2.msra.mxu0 0.0
        %2896 = vmatprep.subr.mxu0 0.0
        %2897 = vmatpush2.msra.mxu0 0.0
        %2898 = vmatprep.subr.mxu0 0.0
        %2899 = vmatpush2.msra.mxu0 0.0
        %2900 = vmatprep.subr.mxu0 0.0
        %2901 = vmatpush2.msra.mxu0 0.0
        %2902 = vmatprep.subr.mxu0 0.0
        %2903 = vmatpush2.msra.mxu0 0.0
        %2904 = vmatprep.subr.mxu0 0.0
        %2905 = vmatpush2.msra.mxu0 0.0
        %2906 = vmatprep.subr.mxu0 0.0
        %2907 = vmatpush2.msra.mxu0 0.0
        %2908 = vmatprep.subr.mxu0 0.0
        %2909 = vmatpush2.msra.mxu0 0.0
        %2910 = vmatprep.subr.mxu0 0.0
        %2911 = vmatpush2.msra.mxu0 0.0
        %2912 = vmatprep.subr.mxu0 0.0
        %2913 = vmatpush2.msra.mxu0 0.0
        %2914 = vmatprep.subr.mxu0 0.0
        %2915 = vmatpush2.msra.mxu0 0.0
        %2916 = vmatprep.subr.mxu0 0.0
        %2917 = vmatpush2.msra.mxu0 0.0
        %2918 = vmatprep.subr.mxu0 0.0
        %2919 = vmatpush2.msra.mxu0 0.0
        %2920 = vmatprep.mubr.f32.mxu0 0.0
        %2921 = vmatmul.mubr.f32.gmra.mxu0 %v2851
        %v2922 = vpop.f32.mrf.mxu0
        %v2923 = vadd.f32 %v2855, %v2922
        %v2924 = vpop.f32.mrf.mxu0
        %2925 = vdwg.mxu0
        %v2926 = vadd.f32 %v2773, %v2923
        %v2927 = vsel %vm332, %v2926, 0.0
        %2928 = vadd.xlane.f32.xlu0 %v2927
        %v2929 = vpop.xlane.xlu0 %2928
        %v2930 = vmul.f32 %v2929, %v1363
        %v2931 = vsub.f32 %v2926, %v2930
        %v2932 = vmul.f32 %v2931, %v2931
        %v2933 = vsel %vm332, %v2932, 0.0
        %2934 = vadd.xlane.f32.xlu0 %v2933
        %v2935 = vpop.xlane.xlu0 %2934
        %v2936 = vmul.f32 %v2935, %v1363
        %v2937 = vadd.f32 %v2936, 1e-05
        %v2938 = vrsqrt.pop %v2937
        %v2939 = vmul.f32 %v2931, %v2938
        %v2940 = vlaneseq
        %v2941 = vshrl.u32 %v2940, 7
        %v2942 = vsub.s32 0, %v2941
        %v2943 = vrot.slane %v1908, %v2942
        %v2944 = vmul.f32 %v2939, %v2943
        %v2945 = vlaneseq
        %v2946 = vshrl.u32 %v2945, 7
        %v2947 = vsub.s32 0, %v2946
        %v2948 = vrot.slane %v1909, %v2947
        %v2949 = vadd.f32 %v2944, %v2948
        %2950 = vst.msk [vmem:[%s289] sm:$0xff] %vm332, %v2657
        %v2951 = vld [vmem:[#allocation7 + $0x13] sm:$0x1]
        %v2952 = vld [vmem:[#allocation7 + $0x14] sm:$0x1]
        %v2953 = vsel %vm332, %v2949, 0.0
        %2954 = vadd.xlane.f32.xlu0 %v2953
        %v2955 = vpop.xlane.xlu0 %2954
        %v2956 = vmul.f32 %v2955, %v1363
        %v2957 = vsub.f32 %v2949, %v2956
        %v2958 = vmul.f32 %v2957, %v2957
        %v2959 = vsel %vm332, %v2958, 0.0
        %2960 = vadd.xlane.f32.xlu0 %v2959
        %v2961 = vpop.xlane.xlu0 %2960
        %v2962 = vmul.f32 %v2961, %v1363
        %v2963 = vadd.f32 %v2962, 1e-05
        %v2964 = vrsqrt.pop %v2963
        %v2965 = vmul.f32 %v2957, %v2964
        %v2966 = vlaneseq
        %v2967 = vshrl.u32 %v2966, 7
        %v2968 = vsub.s32 0, %v2967
        %v2969 = vrot.slane %v2951, %v2968
        %v2970 = vmul.f32 %v2965, %v2969
        %v2971 = vlaneseq
        %v2972 = vshrl.u32 %v2971, 7
        %v2973 = vsub.s32 0, %v2972
        %v2974 = vrot.slane %v2952, %v2973
        %v2975 = vadd.f32 %v2970, %v2974
        %2976 = vst.msk [vmem:[%s275] sm:$0xff] %vm332, %v2975
        %s2977 = sand.u32 %s103, 1
        %s2978 = scalar_lea.sflag [#allocation4], %s2977
        %s2979 = sand.u32 %s103, 1
        %s2980 = smul.addr %s2979, 8
        %s2981 = scalar_lea.vmem [#allocation8], %s2980
        %s2982 = sand.u32 %s27, 1
        %s2983 = scalar_lea.sflag [#allocation10], %s2982
        %s2984 = sand.u32 %s129, 1
        %s2985 = smul.addr %s2984, 16
        %s2986 = scalar_lea.vmem [#allocation9], %s2985
        %s2987 = sand.u32 %s27, 1
        %s2988 = scalar_lea.sflag [#allocation10], %s2987
        %s2989 = sand.u32 %s155, 1
        %s2990 = smul.addr %s2989, 8
        %s2991 = scalar_lea.vmem [#allocation11], %s2990
        // Predicated region
        $region45: #{tpu_custom_call.1} parent=31 // pred_check
          %p2992 = pneg %p113
        $region46: #{tpu_custom_call.1} parent=31 // pred_check_branch
          %2994 = sbr.rel (%p2992) target = $region48
        $region47: #{tpu_custom_call.1} parent=31 // pred_region
          %s2996 = ssub.s32 128, 128
          %2997 = vsyncadd %s2978, %s2996
          %s2998 = smul.addr %s27, 128
          %s2999 = scalar_lea.hbm %s3, %s2998
          %s3001 = sshll.u32 %s2981, 4
          %s3002 = int_to_ptr.vmem [resolvable:$true] %s3001
          %3004 = dma.vmem_to_hbm [thread:$0]  %s3002, 128, %s2999, %s2978
        $region48: #{tpu_custom_call.1} parent=31 // pred_fallthru
          _
        // Predicated region
        $region49: #{tpu_custom_call.1} parent=31 // pred_check
          %p3005 = pneg %p139
        $region50: #{tpu_custom_call.1} parent=31 // pred_check_branch
          %3007 = sbr.rel (%p3005) target = $region52
        $region51: #{tpu_custom_call.1} parent=31 // pred_region
          %s3009 = ssub.s32 256, 256
          %3010 = vsyncadd %s2983, %s3009
          %s3011 = smul.addr %s27, 2
          %s3012 = smul.addr %s3011, 128
          %s3013 = scalar_lea.hbm %s4, %s3012
          %s3014 = sshll.u32 %s2986, 4
          %s3015 = int_to_ptr.vmem [resolvable:$true] %s3014
          %3020 = dma.vmem_to_hbm [thread:$0]  %s3015, 256, %s3013, %s2983, 128, 128, 8
        $region52: #{tpu_custom_call.1} parent=31 // pred_fallthru
          _
        // Predicated region
        $region53: #{tpu_custom_call.1} parent=31 // pred_check
          %p3021 = pneg %p165
        $region54: #{tpu_custom_call.1} parent=31 // pred_check_branch
          %3023 = sbr.rel (%p3021) target = $region56
        $region55: #{tpu_custom_call.1} parent=31 // pred_region
          %s3025 = ssub.s32 128, 128
          %3026 = vsyncadd %s2988, %s3025
          %s3027 = smul.addr %s27, 128
          %s3028 = scalar_lea.hbm %s5, %s3027
          %s3030 = sshll.u32 %s2991, 4
          %s3031 = int_to_ptr.vmem [resolvable:$true] %s3030
          %3033 = dma.vmem_to_hbm [thread:$0]  %s3031, 128, %s3028, %s2988
        $region56: #{tpu_custom_call.1} parent=31 // pred_fallthru
          _
      $region32: #{tpu_custom_call.1} parent=5 // pred_fallthru
        _
      %p3034 = scmp.le.s32.totalorder 2, %s22
      // Predicated region
      $region57: #{tpu_custom_call.1} parent=5 // pred_check
        %p3035 = pneg %p3034
      $region58: #{tpu_custom_call.1} parent=5 // pred_check_branch
        %3037 = sbr.rel (%p3035) target = $region60
      $region59: #{tpu_custom_call.1} parent=5 // pred_region
        %s3038 = ssub.s32 %s22, 2
        // Predicated region
        $region61: #{tpu_custom_call.1} parent=59 // pred_check
          %p3039 = pneg %p119
        $region62: #{tpu_custom_call.1} parent=59 // pred_check_branch
          %3041 = sbr.rel (%p3039) target = $region64
        $region63: #{tpu_custom_call.1} parent=59 // pred_region
          %s3042 = sand.u32 %s104, 1
          %s3043 = scalar_lea.sflag [#allocation4], %s3042
          %s3044 = sand.u32 %s104, 1
          %s3045 = smul.addr %s3044, 8
          %s3046 = scalar_lea.vmem [#allocation8], %s3045
          %3047 = dma.done %s3043, 128
        $region64: #{tpu_custom_call.1} parent=59 // pred_fallthru
          _
        // Predicated region
        $region65: #{tpu_custom_call.1} parent=59 // pred_check
          %p3048 = pneg %p145
        $region66: #{tpu_custom_call.1} parent=59 // pred_check_branch
          %3050 = sbr.rel (%p3048) target = $region68
        $region67: #{tpu_custom_call.1} parent=59 // pred_region
          %s3051 = sand.u32 %s28, 1
          %s3052 = scalar_lea.sflag [#allocation10], %s3051
          %s3053 = sand.u32 %s130, 1
          %s3054 = smul.addr %s3053, 16
          %s3055 = scalar_lea.vmem [#allocation9], %s3054
          %3056 = dma.done %s3052, 256
        $region68: #{tpu_custom_call.1} parent=59 // pred_fallthru
          _
        // Predicated region
        $region69: #{tpu_custom_call.1} parent=59 // pred_check
          %p3057 = pneg %p171
        $region70: #{tpu_custom_call.1} parent=59 // pred_check_branch
          %3059 = sbr.rel (%p3057) target = $region72
        $region71: #{tpu_custom_call.1} parent=59 // pred_region
          %s3060 = sand.u32 %s28, 1
          %s3061 = scalar_lea.sflag [#allocation10], %s3060
          %s3062 = sand.u32 %s156, 1
          %s3063 = smul.addr %s3062, 8
          %s3064 = scalar_lea.vmem [#allocation11], %s3063
          %3065 = dma.done %s3061, 128
        $region72: #{tpu_custom_call.1} parent=59 // pred_fallthru
          _
      $region60: #{tpu_custom_call.1} parent=5 // pred_fallthru
        _
    $region6: #{tpu_custom_call.1} parent=1 // loop_footer
      %s26 = sadd.s32 1, %s22
    $region7: #{tpu_custom_call.1} parent=1 // loop_footer_branch
      %21 = sbr.rel target = $region3
    $region8: #{tpu_custom_call.1} parent=1 // loop_exit
      _
    %3066 = vsyncpa [#allocation3], 1
    %s3067 = scalar_lea.sflag [#allocation3], 1
    %3068 = vsyncpa %s3067, 1
    %3069 = vsyncpa [#allocation6], 1
    %3070 = vsyncpa [#allocation4], 1
    %s3071 = scalar_lea.sflag [#allocation4], 1
    %3072 = vsyncpa %s3071, 1
    %3073 = vsyncpa [#allocation10], 1
    %s3074 = scalar_lea.sflag [#allocation10], 1
    %3075 = vsyncpa %s3074, 1

</llo_original>
